<compile_context>
chip_gen: v7x
topology: tpu7x:2x2x1
jax: 0.10.0
libtpu: 0.0.40
codegen_flags: <defaults>
</compile_context>

<pallas_src>
import math

import jax
import jax.numpy as jnp
from jax.experimental import pallas as pl
from jax.experimental.pallas import tpu as pltpu


# ----------------------------------------------------------------------------
# Pallas kernel: in-VMEM shifted-view build + single folded MXU dot
# ----------------------------------------------------------------------------
def _convt_kernel(cur_ref, nxt_ref, w_ref, b_ref, o_ref):
    """One grid step: td depth slices -> (td*H*W, F_pad) output rows.

    cur_ref : (td, H+1, W+1, Cin)  current depth block (H/W already zero-padded)
    nxt_ref : (1,  H+1, W+1, Cin)  +1 depth halo slice
    w_ref   : (8*Cin, F_pad)       folded sub-pixel weight (resident)
    b_ref   : (1, F_pad)           folded bias, f32 (resident)
    o_ref   : (td*H*W, F_pad)      bf16 (or compute dtype) output rows
    """
    td, hp, wp, cin = cur_ref.shape
    h, w = hp - 1, wp - 1

    # (td+1, H+1, W+1, Cin) halo tile, entirely in VMEM.
    x_full = jnp.concatenate([cur_ref[...], nxt_ref[...]], axis=0)

    # 8 unit-shifted views -> folded patches (td, H, W, 8*Cin); the d/h shifts
    # are major-dim slices (cheap), only the w shift touches sublanes.
    views = []
    for sd in (0, 1):
        for sh in (0, 1):
            for sw in (0, 1):
                views.append(x_full[sd:sd + td, sh:sh + h, sw:sw + w, :])
    pat = jnp.concatenate(views, axis=-1)
    pat = pat.reshape(td * h * w, 8 * cin)

    # Single folded contraction on the MXU, f32 accumulation, fused bias.
    acc = jnp.dot(pat, w_ref[...], preferred_element_type=jnp.float32)
    o_ref[...] = (acc + b_ref[...]).astype(o_ref.dtype)


# ----------------------------------------------------------------------------
# Tiling / VMEM sizing helpers (per-generation)
# ----------------------------------------------------------------------------
def _vmem_limit_bytes():
    """~cap - 24 MiB: ~40 MiB on v7x (64 MiB/TC), ~104 MiB on v5e/v6e."""
    cap = 64 * 1024 * 1024
    try:
        info = pltpu.get_tpu_info()
        cap = int(getattr(info, "vmem_capacity_bytes", cap))
    except Exception:
        pass
    budget = max(cap - 24 * 1024 * 1024, 32 * 1024 * 1024)
    return int(min(budget, 110 * 1024 * 1024))


def _choose_depth_tile(n, d, h, w, cin, f_pad, vmem_limit):
    """Largest depth tile whose working set fits ~half the VMEM budget."""
    hw = h * w
    g = 1
    while (g * hw) % 8 != 0:          # output row block must be 8-aligned
        g *= 2                        # g <= 8 always suffices
    hp, wp, k = h + 1, w + 1, 8 * cin

    def step_bytes(td):
        rows = td * hw
        in_b = 2 * 2 * (td + 1) * hp * wp * cin * 2      # double-buffered halo
        out_b = 2 * rows * f_pad * 2                      # double-buffered bf16
        tmp_b = rows * f_pad * 4 + 3 * rows * k * 2       # f32 acc + patch temps
        wgt_b = 2 * (k * f_pad * 2 + f_pad * 4)
        return in_b + out_b + tmp_b + wgt_b

    d_cap = -(-d // g) * g
    budget = vmem_limit // 2
    td = g
    t = g
    while t <= d_cap:
        if step_bytes(t) <= budget and t * hw <= 8192:
            td = t
        t += g
    # keep >= 2 grid tiles so both v7x TensorCores get work
    if n * (-(-d // td)) < 2 and d > g:
        td = max(g, (-(-(-(-d // 2)) // g)) * g)
    return td


# ----------------------------------------------------------------------------
# One-time parameter preparation (hoisted out of the traced forward)
# ----------------------------------------------------------------------------
def _tap(shift, parity):
    """Kernel-tap index contributing x[m+shift] to output o = 2*m + parity."""
    kk = parity + 1 - 2 * shift
    return kk if 0 <= kk <= 2 else None


def _fold_weight(w):
    """PyTorch weight (Cin, Cout, 3, 3, 3) -> sub-pixel (8*Cin, 8*Cout)."""
    cin, cout = w.shape[0], w.shape[1]
    blocks = jnp.zeros((2, 2, 2, cin, 2, 2, 2, cout), w.dtype)
    for sd in range(2):
        for sh in range(2):
            for sw in range(2):
                for pd in range(2):
                    kd = _tap(sd, pd)
                    if kd is None:
                        continue
                    for ph in range(2):
                        kh = _tap(sh, ph)
                        if kh is None:
                            continue
                        for pw in range(2):
                            kw = _tap(sw, pw)
                            if kw is None:
                                continue
                            blocks = blocks.at[sd, sh, sw, :, pd, ph, pw, :].set(
                                w[:, :, kd, kh, kw])
    return blocks.reshape(8 * cin, 8 * cout)


def prepare_new_conv_up(w, b, compute_dtype=jnp.bfloat16):
    """Fold weight/bias once; zero-pad columns to 128 lanes if 8*Cout < 128."""
    cout = w.shape[1]
    f = 8 * cout
    f_pad = f if f >= 128 else 128
    w_fold = _fold_weight(w.astype(jnp.float32))         # (8*Cin, 8*Cout)
    b_fold = jnp.tile(b.astype(jnp.float32), 8)          # (8*Cout,)
    if f_pad != f:
        w_fold = jnp.pad(w_fold, ((0, 0), (0, f_pad - f)))
        b_fold = jnp.pad(b_fold, (0, f_pad - f))
    return w_fold.astype(compute_dtype), b_fold.reshape(1, f_pad)


# ----------------------------------------------------------------------------
# Forward: NCDHW in -> NCDHW out (same semantics as the nn.Module)
# ----------------------------------------------------------------------------
def new_conv_up_forward(x, w_fold, b_fold, *, cout,
                        compute_dtype=jnp.bfloat16):
    n, cin, d, h, w = x.shape
    k, f_pad = w_fold.shape
    assert k == 8 * cin, (k, cin)
    f = 8 * cout

    vmem_limit = _vmem_limit_bytes()
    td = _choose_depth_tile(n, d, h, w, cin, f_pad, vmem_limit)
    num_db = -(-d // td)
    d_pad = num_db * td
    hp, wp = h + 1, w + 1
    rows = td * h * w

    # One-time layout plumbing on the (small) input: channels-last + zero halo.
    xt = jnp.transpose(x, (0, 2, 3, 4, 1)).astype(compute_dtype)
    xp = jnp.pad(xt, ((0, 0), (0, d_pad - d + 1), (0, 1), (0, 1), (0, 0)))

    out = pl.pallas_call(
        _convt_kernel,
        out_shape=jax.ShapeDtypeStruct((n * d_pad * h * w, f_pad),
                                       compute_dtype),
        grid=(n, num_db),
        in_specs=[
            # streamed td-deep block of the padded input
            pl.BlockSpec((None, td, hp, wp, cin),
                         lambda b, i: (b, i, 0, 0, 0)),
            # +1 depth halo slice: a second view of the SAME array
            pl.BlockSpec((None, 1, hp, wp, cin),
                         lambda b, i: (b, (i + 1) * td, 0, 0, 0)),
            # resident folded weight / bias (constant index_map)
            pl.BlockSpec((k, f_pad), lambda b, i: (0, 0)),
            pl.BlockSpec((1, f_pad), lambda b, i: (0, 0)),
        ],
        out_specs=pl.BlockSpec((rows, f_pad),
                               lambda b, i, _n=num_db: (b * _n + i, 0)),
        compiler_params=pltpu.CompilerParams(
            dimension_semantics=("parallel", "parallel"),
            vmem_limit_bytes=vmem_limit),
    )(xp, xp, w_fold.astype(compute_dtype), b_fold.astype(jnp.float32))

    # depth-to-space + back to NCDHW: one fused bf16 pass, cast at the very end.
    z = out[:, :f].reshape(n, d_pad, h, w, 2, 2, 2, cout)[:, :d]
    y = jnp.transpose(z, (0, 7, 1, 4, 2, 5, 3, 6))       # (n,co,d,pd,h,ph,w,pw)
    return y.reshape(n, cout, 2 * d, 2 * h, 2 * w).astype(x.dtype)


# ----------------------------------------------------------------------------
# Pure-JAX reference (PyTorch ConvTranspose3d semantics) for correctness check
# ----------------------------------------------------------------------------
def ref_conv_transpose3d(x, w, b):
    """x: (N,Cin,D,H,W); w: (Cin,Cout,3,3,3); b: (Cout,). stride=2,p=1,op=1."""
    w_flip = w[:, :, ::-1, ::-1, ::-1]
    w_oidhw = jnp.transpose(w_flip, (1, 0, 2, 3, 4))
    y = jax.lax.conv_general_dilated(
        x, w_oidhw, window_strides=(1, 1, 1),
        padding=((1, 2), (1, 2), (1, 2)),
        lhs_dilation=(2, 2, 2),
        dimension_numbers=("NCDHW", "OIDHW", "NCDHW"))
    return y + b.reshape(1, -1, 1, 1, 1)


# ----------------------------------------------------------------------------
if __name__ == "__main__":
    N, Cin, Cout, D, H, W = 2, 4, 8, 8, 8, 8

    key = jax.random.PRNGKey(0)
    kx, kw, kb = jax.random.split(key, 3)
    x = jax.random.normal(kx, (N, Cin, D, H, W), dtype=jnp.float32)
    wgt = (jax.random.normal(kw, (Cin, Cout, 3, 3, 3)) /
           math.sqrt(27 * Cin)).astype(jnp.float32)
    bias = (0.1 * jax.random.normal(kb, (Cout,))).astype(jnp.float32)

    # Fold the weight once, at parameter-load time (not inside the hot graph).
    w_fold, b_fold = prepare_new_conv_up(wgt, bias)

    fwd = jax.jit(lambda xx: new_conv_up_forward(xx, w_fold, b_fold, cout=Cout))
    out = jax.block_until_ready(fwd(x))

    ref = jax.block_until_ready(ref_conv_transpose3d(x, wgt, bias))

    assert out.shape == (N, Cout, 2 * D, 2 * H, 2 * W), out.shape
    max_err = float(jnp.max(jnp.abs(out - ref)))
    # bf16 operands + bf16 kernel output (f32 MXU accumulation) vs f32 ref.
    assert jnp.allclose(out, ref, rtol=5e-2, atol=5e-2), max_err

    print("KERNEL_OK")
</pallas_src>

<mosaic_0001>
module attributes {stable_mosaic.version = 11 : i64} {
  func.func @_convt_kernel(%arg0: i32, %arg1: i32, %arg2: memref<1x8x9x9x4xbf16, #tpu.memory_space<vmem>>, %arg3: memref<1x1x9x9x4xbf16, #tpu.memory_space<vmem>>, %arg4: memref<32x128xbf16, #tpu.memory_space<vmem>>, %arg5: memref<1x128xf32, #tpu.memory_space<vmem>>, %arg6: memref<512x128xbf16, #tpu.memory_space<vmem>>) attributes {dimension_semantics = [#tpu.dimension_semantics<parallel>, #tpu.dimension_semantics<parallel>], iteration_bounds = array<i64: 2, 1>, scalar_prefetch = 0 : i64, scratch_operands = 0 : i64, tpu.core_type = #tpu.core_type<tc>, window_params = [{transform_indices = @transform_0, window_bounds = array<i64: 1, 8, 9, 9, 4>}, {transform_indices = @transform_1, window_bounds = array<i64: 1, 1, 9, 9, 4>}, {pipeline_mode = #tpu.pipeline_mode<synchronous>, transform_indices = @transform_2, window_bounds = array<i64: 32, 128>}, {pipeline_mode = #tpu.pipeline_mode<synchronous>, transform_indices = @transform_3, window_bounds = array<i64: 1, 128>}, {transform_indices = @transform_4, window_bounds = array<i64: 512, 128>}]} {
    %c0 = arith.constant 0 : index
    %c0_0 = arith.constant 0 : index
    %c0_1 = arith.constant 0 : index
    %c0_2 = arith.constant 0 : index
    %c0_3 = arith.constant 0 : index
    %0 = vector.load %arg2[%c0, %c0_0, %c0_1, %c0_2, %c0_3] : memref<1x8x9x9x4xbf16, #tpu.memory_space<vmem>>, vector<1x8x9x9x4xbf16>
    %1 = vector.shape_cast %0 : vector<1x8x9x9x4xbf16> to vector<8x9x9x4xbf16>
    %c0_4 = arith.constant 0 : index
    %c0_5 = arith.constant 0 : index
    %c0_6 = arith.constant 0 : index
    %c0_7 = arith.constant 0 : index
    %c0_8 = arith.constant 0 : index
    %2 = vector.load %arg3[%c0_4, %c0_5, %c0_6, %c0_7, %c0_8] : memref<1x1x9x9x4xbf16, #tpu.memory_space<vmem>>, vector<1x1x9x9x4xbf16>
    %3 = vector.shape_cast %2 : vector<1x1x9x9x4xbf16> to vector<1x9x9x4xbf16>
    %4 = tpu.concatenate %1, %3 in 0 : vector<8x9x9x4xbf16>, vector<1x9x9x4xbf16> -> vector<9x9x9x4xbf16>
    %5 = vector.extract_strided_slice %4 {offsets = [0, 0, 0, 0], sizes = [8, 8, 8, 4], strides = [1, 1, 1, 1]} : vector<9x9x9x4xbf16> to vector<8x8x8x4xbf16>
    %6 = vector.extract_strided_slice %4 {offsets = [0, 0, 1, 0], sizes = [8, 8, 8, 4], strides = [1, 1, 1, 1]} : vector<9x9x9x4xbf16> to vector<8x8x8x4xbf16>
    %7 = vector.extract_strided_slice %4 {offsets = [0, 1, 0, 0], sizes = [8, 8, 8, 4], strides = [1, 1, 1, 1]} : vector<9x9x9x4xbf16> to vector<8x8x8x4xbf16>
    %8 = vector.extract_strided_slice %4 {offsets = [0, 1, 1, 0], sizes = [8, 8, 8, 4], strides = [1, 1, 1, 1]} : vector<9x9x9x4xbf16> to vector<8x8x8x4xbf16>
    %9 = vector.extract_strided_slice %4 {offsets = [1, 0, 0, 0], sizes = [8, 8, 8, 4], strides = [1, 1, 1, 1]} : vector<9x9x9x4xbf16> to vector<8x8x8x4xbf16>
    %10 = vector.extract_strided_slice %4 {offsets = [1, 0, 1, 0], sizes = [8, 8, 8, 4], strides = [1, 1, 1, 1]} : vector<9x9x9x4xbf16> to vector<8x8x8x4xbf16>
    %11 = vector.extract_strided_slice %4 {offsets = [1, 1, 0, 0], sizes = [8, 8, 8, 4], strides = [1, 1, 1, 1]} : vector<9x9x9x4xbf16> to vector<8x8x8x4xbf16>
    %12 = vector.extract_strided_slice %4 {offsets = [1, 1, 1, 0], sizes = [8, 8, 8, 4], strides = [1, 1, 1, 1]} : vector<9x9x9x4xbf16> to vector<8x8x8x4xbf16>
    %13 = tpu.concatenate %5, %6, %7, %8, %9, %10, %11, %12 in 3 : vector<8x8x8x4xbf16>, vector<8x8x8x4xbf16>, vector<8x8x8x4xbf16>, vector<8x8x8x4xbf16>, vector<8x8x8x4xbf16>, vector<8x8x8x4xbf16>, vector<8x8x8x4xbf16>, vector<8x8x8x4xbf16> -> vector<8x8x8x32xbf16>
    %14 = vector.shape_cast %13 : vector<8x8x8x32xbf16> to vector<512x32xbf16>
    %c0_9 = arith.constant 0 : index
    %c0_10 = arith.constant 0 : index
    %15 = vector.load %arg4[%c0_9, %c0_10] : memref<32x128xbf16, #tpu.memory_space<vmem>>, vector<32x128xbf16>
    %cst = arith.constant dense<0.000000e+00> : vector<512x128xf32>
    %16 = tpu.matmul %14, %15, %cst {dimension_numbers = #tpu.dot_dimension_numbers<[1], [0], [0], [1], [0, 0, 1, 1], [], []>} : vector<512x32xbf16>, vector<32x128xbf16>, vector<512x128xf32> -> vector<512x128xf32>
    %c0_11 = arith.constant 0 : index
    %c0_12 = arith.constant 0 : index
    %17 = vector.load %arg5[%c0_11, %c0_12] : memref<1x128xf32, #tpu.memory_space<vmem>>, vector<1x128xf32>
    %18 = vector.broadcast %17 : vector<1x128xf32> to vector<512x128xf32>
    %19 = arith.addf %16, %18 : vector<512x128xf32>
    %20 = arith.truncf %19 : vector<512x128xf32> to vector<512x128xbf16>
    %c0_13 = arith.constant 0 : index
    %c0_14 = arith.constant 0 : index
    %21 = vector.load %arg6[%c0_13, %c0_14] : memref<512x128xbf16, #tpu.memory_space<vmem>>, vector<512x128xbf16>
    tpu.vector_store %arg6[%c0_13, %c0_14], %20 {strides = array<i32>} : memref<512x128xbf16, #tpu.memory_space<vmem>>, vector<512x128xbf16>,
    return
  }
  func.func @transform_0(%arg0: i32, %arg1: i32) -> (i32, i32, i32, i32, i32) {
    %c0_i32 = arith.constant 0 : i32
    %c0_i32_0 = arith.constant 0 : i32
    %c0_i32_1 = arith.constant 0 : i32
    %c0_i32_2 = arith.constant 0 : i32
    return %arg0, %arg1, %c0_i32, %c0_i32_0, %c0_i32_1 : i32, i32, i32, i32, i32
  }
  func.func @transform_1(%arg0: i32, %arg1: i32) -> (i32, i32, i32, i32, i32) {
    %c1_i32 = arith.constant 1 : i32
    %0 = arith.addi %arg1, %c1_i32 : i32
    %c8_i32 = arith.constant 8 : i32
    %1 = arith.muli %0, %c8_i32 : i32
    %c0_i32 = arith.constant 0 : i32
    %c0_i32_0 = arith.constant 0 : i32
    %c0_i32_1 = arith.constant 0 : i32
    %c0_i32_2 = arith.constant 0 : i32
    return %arg0, %1, %c0_i32, %c0_i32_0, %c0_i32_1 : i32, i32, i32, i32, i32
  }
  func.func @transform_2(%arg0: i32, %arg1: i32) -> (i32, i32) {
    %c0_i32 = arith.constant 0 : i32
    %c0_i32_0 = arith.constant 0 : i32
    %c0_i32_1 = arith.constant 0 : i32
    return %c0_i32, %c0_i32_0 : i32, i32
  }
  func.func @transform_3(%arg0: i32, %arg1: i32) -> (i32, i32) {
    %c0_i32 = arith.constant 0 : i32
    %c0_i32_0 = arith.constant 0 : i32
    %c0_i32_1 = arith.constant 0 : i32
    return %c0_i32, %c0_i32_0 : i32, i32
  }
  func.func @transform_4(%arg0: i32, %arg1: i32) -> (i32, i32) {
    %c1_i32 = arith.constant 1 : i32
    %0 = arith.muli %arg0, %c1_i32 : i32
    %1 = arith.addi %0, %arg1 : i32
    %c0_i32 = arith.constant 0 : i32
    %c0_i32_0 = arith.constant 0 : i32
    return %1, %c0_i32 : i32, i32
  }
}

</mosaic_0001>

<llo_original>
// kernel: _lambda_.1
$region0: #{_lambda_.1}
  #allocation0 [shape = 'u32[]', space=smem, size = 0x4, offset = 0x4, fixed_abs, tag = 'smem constant byte address 0x4 - core index']
  #allocation1 [shape = 'u32[144,128]{1,0:T(1,128)}', space=vmem, size = 0x12000, scoped, tag = 'internal scratch']
  %s0 = inlined_call_operand.vmem [shape: bf16[2,9,9,9,4], index: 0, kind: input, shape index: {}, may-alias: {0,1}]
  %s1 = inlined_call_operand.vmem [shape: bf16[2,9,9,9,4], index: 1, kind: input, shape index: {}, may-alias: {0,1}]
  %s2 = inlined_call_operand.hbm [shape: bf16[32,128], index: 2, kind: input, shape index: {}]
  %s3 = inlined_call_operand.hbm [shape: f32[1,128], index: 3, kind: input, shape index: {}]
  %s4 = inlined_call_operand.vmem [shape: bf16[1024,128], index: 4, kind: output, shape index: {}]
  %s5 = sld [smem:[#allocation0]]
  $region57: #{_lambda_.1} parent=0
    _
  %s7 = ssub.s32 1, %s5
  %s8 = scalar_select 0, %s7, %s5
  $region1: #{_lambda_.1} parent=0
    #allocation2 [shape = 'u8[8192]{0}', space=vmem, size = 0x2000, scoped, tag = 'input window, operand 2, single buffered']
    #allocation3 [shape = 's32[2]{0}', space=sflag, size = 0x8, scoped, tag = 'scoped memory for _lambda_.1']
    #allocation4 [shape = 'u8[512]{0}', space=vmem, size = 0x400, scoped, tag = 'input window, operand 3, single buffered']
    #allocation5 [shape = 's32[1]{0}', space=sflag, size = 0x4, scoped, tag = 'scoped memory for _lambda_.1']
    %9 = vsyncpa [#allocation3], 0
    %10 = vsyncpa [#allocation5], 0
    loop: start=0, step=1, limit=4
    $region2: #{_lambda_.1} parent=1 // loop_pre_header
      _
    $region3: #{_lambda_.1} parent=1 // loop_header
      %s12 = sphi 0, %s16
      %p13 = scmp.ge.s32.totalorder %s12, 4
      %s19 = sphi 0, %s31
      %s20 = sphi 0, %s27
      %s21 = sphi 0, %s19
      %s22 = sphi 0, %s20
      %s23 = sphi 0, %s21
      %s24 = sphi 0, %s22
      %s36 = sphi 0, %s38
      %s39 = sphi 0, %s36
      %s40 = sphi 0, %s39
      %s56 = sphi 0, %s40
      %s68 = sphi 0, %s70
      %s71 = sphi 0, %s68
      %s72 = sphi 0, %s71
      %s88 = sphi 0, %s72
      %s92 = sphi 0, %s92
      %s94 = sphi 0, %s92
      %s95 = sphi 0, %s94
      %s109 = sphi 0, %s95
      %s113 = sphi 0, %s113
      %s115 = sphi 0, %s113
      %s116 = sphi 0, %s115
      %s130 = sphi 0, %s116
      %s138 = sphi 0, %s140
      %s141 = sphi 0, %s138
      %s142 = sphi 0, %s141
      %s158 = sphi 0, %s142
    $region4: #{_lambda_.1} parent=1 // loop_header_branch
      %15 = sbr.rel (%p13) target = $region8
    $region5: #{_lambda_.1} parent=1 // loop_body
      %s17 = ssub.s32 %s12, 1
      %s18 = ssub.s32 %s12, 2
      %s25 = sadd.s32 1, %s20
      %p26 = scmp.ge.s32.totalorder %s25, 1
      %s27 = scalar_select %p26, 0, %s25
      %s28 = sadd.s32 1, %s19
      %s29 = scalar_select %p26, %s28, %s19
      %p30 = scmp.ge.s32.totalorder %s29, 2
      %s31 = scalar_select %p30, 0, %s29
      %s32 = ssub.s32 %s19, %s31
      %s33 = ssub.s32 %s20, %s27
      %s34 = sor.u32 %s32, %s33
      %p35 = scmp.eq.s32.totalorder %s34, 0
      %s37 = sadd.s32 %s36, 1
      %s38 = scalar_select %p35, %s36, %s37
      %p41 = pneg %p35
      %p42 = scmp.eq.s32.totalorder %s12, 1
      %p43 = por %p41, %p42
      %p44 = scmp.ne.s32.totalorder %s36, %s39
      %p45 = scmp.eq.s32.totalorder %s12, 0
      %p46 = por %p44, %p45
      %p47 = scmp.ne.s32.totalorder %s36, %s39
      %p48 = scmp.eq.s32.totalorder %s17, 1
      %p49 = por %p47, %p48
      %p50 = scmp.ne.s32.totalorder %s39, %s40
      %p51 = scmp.eq.s32.totalorder %s17, 0
      %p52 = por %p50, %p51
      %p53 = scmp.ne.s32.totalorder %s39, %s40
      %p54 = scmp.eq.s32.totalorder %s18, 1
      %p55 = por %p53, %p54
      %p57 = scmp.ne.s32.totalorder %s40, %s56
      %p58 = scmp.eq.s32.totalorder %s18, 0
      %p59 = por %p57, %p58
      %s60 = sadd.s32 %s20, 1
      %s61 = smul.u32 %s60, 8
      %s62 = sadd.s32 %s27, 1
      %s63 = smul.u32 %s62, 8
      %s64 = ssub.s32 %s19, %s31
      %s65 = ssub.s32 %s61, %s63
      %s66 = sor.u32 %s64, %s65
      %p67 = scmp.eq.s32.totalorder %s66, 0
      %s69 = sadd.s32 %s68, 1
      %s70 = scalar_select %p67, %s68, %s69
      %p73 = pneg %p67
      %p74 = scmp.eq.s32.totalorder %s12, 1
      %p75 = por %p73, %p74
      %p76 = scmp.ne.s32.totalorder %s68, %s71
      %p77 = scmp.eq.s32.totalorder %s12, 0
      %p78 = por %p76, %p77
      %p79 = scmp.ne.s32.totalorder %s68, %s71
      %p80 = scmp.eq.s32.totalorder %s17, 1
      %p81 = por %p79, %p80
      %p82 = scmp.ne.s32.totalorder %s71, %s72
      %p83 = scmp.eq.s32.totalorder %s17, 0
      %p84 = por %p82, %p83
      %p85 = scmp.ne.s32.totalorder %s71, %s72
      %p86 = scmp.eq.s32.totalorder %s18, 1
      %p87 = por %p85, %p86
      %p89 = scmp.ne.s32.totalorder %s72, %s88
      %p90 = scmp.eq.s32.totalorder %s18, 0
      %p91 = por %p89, %p90
      %s93 = sadd.s32 %s92, 1
      %p96 = scmp.eq.s32.totalorder %s12, 1
      %p97 = scmp.ne.s32.totalorder %s92, %s94
      %p98 = scmp.eq.s32.totalorder %s12, 0
      %p99 = por %p97, %p98
      %p100 = scmp.ne.s32.totalorder %s92, %s94
      %p101 = scmp.eq.s32.totalorder %s17, 1
      %p102 = por %p100, %p101
      %p103 = scmp.ne.s32.totalorder %s94, %s95
      %p104 = scmp.eq.s32.totalorder %s17, 0
      %p105 = por %p103, %p104
      %p106 = scmp.ne.s32.totalorder %s94, %s95
      %p107 = scmp.eq.s32.totalorder %s18, 1
      %p108 = por %p106, %p107
      %p110 = scmp.ne.s32.totalorder %s95, %s109
      %p111 = scmp.eq.s32.totalorder %s18, 0
      %p112 = por %p110, %p111
      %s114 = sadd.s32 %s113, 1
      %p117 = scmp.eq.s32.totalorder %s12, 1
      %p118 = scmp.ne.s32.totalorder %s113, %s115
      %p119 = scmp.eq.s32.totalorder %s12, 0
      %p120 = por %p118, %p119
      %p121 = scmp.ne.s32.totalorder %s113, %s115
      %p122 = scmp.eq.s32.totalorder %s17, 1
      %p123 = por %p121, %p122
      %p124 = scmp.ne.s32.totalorder %s115, %s116
      %p125 = scmp.eq.s32.totalorder %s17, 0
      %p126 = por %p124, %p125
      %p127 = scmp.ne.s32.totalorder %s115, %s116
      %p128 = scmp.eq.s32.totalorder %s18, 1
      %p129 = por %p127, %p128
      %p131 = scmp.ne.s32.totalorder %s116, %s130
      %p132 = scmp.eq.s32.totalorder %s18, 0
      %p133 = por %p131, %p132
      %s134 = sadd.s32 %s19, %s20
      %s135 = sadd.s32 %s31, %s27
      %s136 = ssub.s32 %s134, %s135
      %p137 = scmp.eq.s32.totalorder %s136, 0
      %s139 = sadd.s32 %s138, 1
      %s140 = scalar_select %p137, %s138, %s139
      %p143 = pneg %p137
      %p144 = scmp.eq.s32.totalorder %s12, 1
      %p145 = por %p143, %p144
      %p146 = scmp.ne.s32.totalorder %s138, %s141
      %p147 = scmp.eq.s32.totalorder %s12, 0
      %p148 = por %p146, %p147
      %p149 = scmp.ne.s32.totalorder %s138, %s141
      %p150 = scmp.eq.s32.totalorder %s17, 1
      %p151 = por %p149, %p150
      %p152 = scmp.ne.s32.totalorder %s141, %s142
      %p153 = scmp.eq.s32.totalorder %s17, 0
      %p154 = por %p152, %p153
      %p155 = scmp.ne.s32.totalorder %s141, %s142
      %p156 = scmp.eq.s32.totalorder %s18, 1
      %p157 = por %p155, %p156
      %p159 = scmp.ne.s32.totalorder %s142, %s158
      %p160 = scmp.eq.s32.totalorder %s18, 0
      %p161 = por %p159, %p160
      %p162 = scmp.le.s32.totalorder 1, %s12
      %p163 = scmp.lt.s32.totalorder %s12, 3
      %p164 = pnand %p162, %p163
      %p165 = pneg %p164
      // Predicated region
      $region9: #{_lambda_.1} parent=5 // pred_check
        _
      $region10: #{_lambda_.1} parent=5 // pred_check_branch
        %167 = sbr.rel (%p164) target = $region12
      $region11: #{_lambda_.1} parent=5 // pred_region
        %s168 = ssub.s32 %s12, 1
        // Predicated region
        $region13: #{_lambda_.1} parent=11 // pred_check
          %p169 = pneg %p105
        $region14: #{_lambda_.1} parent=11 // pred_check_branch
          %171 = sbr.rel (%p169) target = $region16
        $region15: #{_lambda_.1} parent=11 // pred_region
          %s173 = ssub.s32 256, 256
          %174 = vsyncadd [#allocation3], %s173
          %s175 = sshll.u32 [#allocation2], 4
          %s176 = int_to_ptr.vmem [resolvable:$true] %s175
          %181 = dma.hbm_to_vmem [thread:$0]  %s2, 256, %s176, [#allocation3], 64, 64, 4
        $region16: #{_lambda_.1} parent=11 // pred_fallthru
          _
        // Predicated region
        $region17: #{_lambda_.1} parent=11 // pred_check
          %p182 = pneg %p126
        $region18: #{_lambda_.1} parent=11 // pred_check_branch
          %184 = sbr.rel (%p182) target = $region20
        $region19: #{_lambda_.1} parent=11 // pred_region
          %s186 = ssub.s32 16, 16
          %187 = vsyncadd [#allocation5], %s186
          %s189 = sshll.u32 [#allocation4], 4
          %s190 = int_to_ptr.vmem [resolvable:$true] %s189
          %192 = dma.hbm_to_vmem [thread:$0]  %s3, 16, %s190, [#allocation5]
        $region20: #{_lambda_.1} parent=11 // pred_fallthru
          _
      $region12: #{_lambda_.1} parent=5 // pred_fallthru
        _
      %p193 = scmp.lt.s32.totalorder %s12, 2
      // Predicated region
      $region21: #{_lambda_.1} parent=5 // pred_check
        %p194 = pneg %p193
      $region22: #{_lambda_.1} parent=5 // pred_check_branch
        %196 = sbr.rel (%p194) target = $region24
      $region23: #{_lambda_.1} parent=5 // pred_region
        // Predicated region
        $region25: #{_lambda_.1} parent=23 // pred_check
          %p197 = pneg %p46
        $region26: #{_lambda_.1} parent=23 // pred_check_branch
          %199 = sbr.rel (%p197) target = $region28
        $region27: #{_lambda_.1} parent=23 // pred_region
          %s200 = smul.u32 8, %s20
          %s201 = ssub.s32 9, %s200
          %p202 = scmp.lt.s32.totalorder %s201, 8
          %s203 = scalar_select %p202, %s201, 8
          %s204 = smul.u32 64, %s203
          %s205 = smul.u32 %s204, 9
          %s206 = smul.u32 %s205, 2
          %p207 = scmp.lt.s32.totalorder %s19, 1
          %s208 = scalar_select %p207, %s19, 1
          %p209 = scmp.lt.s32.totalorder %s200, 8
          %s210 = scalar_select %p209, %s200, 8
          %s211 = smul.addr %s210, 18
          %s212 = smul.addr %s208, 162
          %s213 = sadd.s32 %s211, %s212
          %s214 = smul.addr %s213, 4
          %s215 = scalar_lea.vmem %s0, %s214
          %s216 = smul.u32 8, %s20
          %s217 = ssub.s32 9, %s216
          %p218 = scmp.lt.s32.totalorder %s217, 8
          %s219 = scalar_select %p218, %s217, 8
          %s220 = smul.u32 64, %s219
          %s221 = smul.u32 %s220, 9
          %s222 = smul.u32 %s221, 2
        $region28: #{_lambda_.1} parent=23 // pred_fallthru
          _
        // Predicated region
        $region29: #{_lambda_.1} parent=23 // pred_check
          %p223 = pneg %p78
        $region30: #{_lambda_.1} parent=23 // pred_check_branch
          %225 = sbr.rel (%p223) target = $region32
        $region31: #{_lambda_.1} parent=23 // pred_region
          %s226 = sadd.s32 %s20, 1
          %s227 = smul.u32 %s226, 8
          %p228 = scmp.lt.s32.totalorder %s19, 1
          %s229 = scalar_select %p228, %s19, 1
          %p230 = scmp.lt.s32.totalorder %s227, 8
          %s231 = scalar_select %p230, %s227, 8
          %s232 = smul.addr %s231, 18
          %s233 = smul.addr %s229, 162
          %s234 = sadd.s32 %s232, %s233
          %s235 = smul.addr %s234, 4
          %s236 = scalar_lea.vmem %s1, %s235
          %s237 = sadd.s32 %s20, 1
          %s238 = smul.u32 %s237, 8
        $region32: #{_lambda_.1} parent=23 // pred_fallthru
          _
      $region24: #{_lambda_.1} parent=5 // pred_fallthru
        _
      %p239 = scmp.le.s32.totalorder 1, %s12
      %p240 = scmp.lt.s32.totalorder %s12, 3
      %p241 = pnand %p239, %p240
      %p242 = pneg %p241
      // Predicated region
      $region33: #{_lambda_.1} parent=5 // pred_check
        _
      $region34: #{_lambda_.1} parent=5 // pred_check_branch
        %244 = sbr.rel (%p241) target = $region36
      $region35: #{_lambda_.1} parent=5 // pred_region
        %s245 = ssub.s32 %s12, 1
        // Predicated region
        $region37: #{_lambda_.1} parent=35 // pred_check
          %p246 = pneg %p105
        $region38: #{_lambda_.1} parent=35 // pred_check_branch
          %248 = sbr.rel (%p246) target = $region40
        $region39: #{_lambda_.1} parent=35 // pred_region
          %249 = dma.done [#allocation3], 256
        $region40: #{_lambda_.1} parent=35 // pred_fallthru
          _
        // Predicated region
        $region41: #{_lambda_.1} parent=35 // pred_check
          %p250 = pneg %p126
        $region42: #{_lambda_.1} parent=35 // pred_check_branch
          %252 = sbr.rel (%p250) target = $region44
        $region43: #{_lambda_.1} parent=35 // pred_region
          %253 = dma.done [#allocation5], 16
        $region44: #{_lambda_.1} parent=35 // pred_fallthru
          _
        %s254 = smul.u32 8, %s22
        %s255 = ssub.s32 9, %s254
        %p256 = scmp.lt.s32.totalorder %s255, 8
        %s257 = scalar_select %p256, %s255, 8
        %s258 = smul.u32 64, %s257
        %s259 = smul.u32 %s258, 9
        %s260 = smul.u32 %s259, 2
        %p261 = scmp.lt.s32.totalorder %s21, 1
        %s262 = scalar_select %p261, %s21, 1
        %p263 = scmp.lt.s32.totalorder %s254, 8
        %s264 = scalar_select %p263, %s254, 8
        %s265 = smul.addr %s264, 18
        %s266 = smul.addr %s262, 162
        %s267 = sadd.s32 %s265, %s266
        %s268 = smul.addr %s267, 4
        %s269 = scalar_lea.vmem %s0, %s268
        %p270 = pneg %p52
        %p271 = pneg %p49
        %s272 = sadd.s32 %s22, 1
        %s273 = smul.u32 %s272, 8
        %p274 = scmp.lt.s32.totalorder %s21, 1
        %s275 = scalar_select %p274, %s21, 1
        %p276 = scmp.lt.s32.totalorder %s273, 8
        %s277 = scalar_select %p276, %s273, 8
        %s278 = smul.addr %s277, 18
        %s279 = smul.addr %s275, 162
        %s280 = sadd.s32 %s278, %s279
        %s281 = smul.addr %s280, 4
        %s282 = scalar_lea.vmem %s1, %s281
        %p283 = pneg %p84
        %p284 = pneg %p81
        %p285 = pneg %p105
        %p286 = pneg %p102
        %p287 = pneg %p126
        %p288 = pneg %p123
        %p289 = pneg %p154
        %p290 = pneg %p151
        %s291 = sadd.s32 %s21, %s22
        %s292 = smul.u32 64, %s291
        %p293 = scmp.lt.s32.totalorder %s292, 127
        %s294 = scalar_select %p293, %s292, 127
        %s295 = smul.addr %s294, 4
        %s296 = scalar_lea.vmem %s4, %s295
        %s297 = smul.u32 8, %s22
        %s298 = ssub.s32 9, %s297
        %p299 = scmp.lt.s32.totalorder %s298, 8
        %s300 = scalar_select %p299, %s298, 8
        %s301 = smul.u32 64, %s300
        %s302 = smul.u32 %s301, 9
        %s303 = smul.u32 %s302, 2
        %p304 = scmp.lt.s32.totalorder %s21, 1
        %s305 = scalar_select %p304, %s21, 1
        %p306 = scmp.lt.s32.totalorder %s297, 8
        %s307 = scalar_select %p306, %s297, 8
        %s308 = smul.addr %s307, 18
        %s309 = smul.addr %s305, 162
        %s310 = sadd.s32 %s308, %s309
        %s311 = smul.addr %s310, 4
        %s312 = scalar_lea.vmem %s0, %s311
        %s313 = smul.u32 8, %s22
        %s314 = ssub.s32 9, %s313
        %p315 = scmp.lt.s32.totalorder %s314, 8
        %s316 = scalar_select %p315, %s314, 8
        %s317 = smul.u32 64, %s316
        %s318 = smul.u32 %s317, 9
        %s319 = smul.u32 %s318, 2
        %s320 = sadd.s32 %s22, 1
        %s321 = smul.u32 %s320, 8
        %p322 = scmp.lt.s32.totalorder %s21, 1
        %s323 = scalar_select %p322, %s21, 1
        %p324 = scmp.lt.s32.totalorder %s321, 8
        %s325 = scalar_select %p324, %s321, 8
        %s326 = smul.addr %s325, 18
        %s327 = smul.addr %s323, 162
        %s328 = sadd.s32 %s326, %s327
        %s329 = smul.addr %s328, 4
        %s330 = scalar_lea.vmem %s1, %s329
        %s331 = sadd.s32 %s22, 1
        %s332 = smul.u32 %s331, 8
        %s333 = sadd.s32 %s21, %s22
        %s334 = smul.u32 64, %s333
        %p335 = scmp.lt.s32.totalorder %s334, 127
        %s336 = scalar_select %p335, %s334, 127
        %s337 = smul.addr %s336, 4
        %s338 = scalar_lea.vmem %s4, %s337
        %s339 = sadd.s32 %s21, %s22
        %s340 = smul.u32 64, %s339
        %v342 = vld [vmem:[%s312] sm:$0xf]
        %v343 = vld [vmem:[%s312 + $0x4] sm:$0x1]
        %v344 = vld [vmem:[%s312 + $0x8] sm:$0xf]
        %v345 = vld [vmem:[%s312 + $0xc] sm:$0x1]
        %v346 = vld [vmem:[%s312 + $0x10] sm:$0xf]
        %v347 = vld [vmem:[%s312 + $0x14] sm:$0x1]
        %v348 = vld [vmem:[%s312 + $0x18] sm:$0xf]
        %v349 = vld [vmem:[%s312 + $0x1c] sm:$0x1]
        %v350 = vld [vmem:[%s312 + $0x20] sm:$0xf]
        %v351 = vld [vmem:[%s312 + $0x24] sm:$0x1]
        %v352 = vld [vmem:[%s312 + $0x28] sm:$0xf]
        %v353 = vld [vmem:[%s312 + $0x2c] sm:$0x1]
        %v354 = vld [vmem:[%s312 + $0x30] sm:$0xf]
        %v355 = vld [vmem:[%s312 + $0x34] sm:$0x1]
        %v356 = vld [vmem:[%s312 + $0x38] sm:$0xf]
        %v357 = vld [vmem:[%s312 + $0x3c] sm:$0x1]
        %v358 = vld [vmem:[%s312 + $0x40] sm:$0xf]
        %v359 = vld [vmem:[%s312 + $0x44] sm:$0x1]
        %v360 = vld [vmem:[%s312 + $0x48] sm:$0xf]
        %v361 = vld [vmem:[%s312 + $0x4c] sm:$0x1]
        %v362 = vld [vmem:[%s312 + $0x50] sm:$0xf]
        %v363 = vld [vmem:[%s312 + $0x54] sm:$0x1]
        %v364 = vld [vmem:[%s312 + $0x58] sm:$0xf]
        %v365 = vld [vmem:[%s312 + $0x5c] sm:$0x1]
        %v366 = vld [vmem:[%s312 + $0x60] sm:$0xf]
        %v367 = vld [vmem:[%s312 + $0x64] sm:$0x1]
        %v368 = vld [vmem:[%s312 + $0x68] sm:$0xf]
        %v369 = vld [vmem:[%s312 + $0x6c] sm:$0x1]
        %v370 = vld [vmem:[%s312 + $0x70] sm:$0xf]
        %v371 = vld [vmem:[%s312 + $0x74] sm:$0x1]
        %v372 = vld [vmem:[%s312 + $0x78] sm:$0xf]
        %v373 = vld [vmem:[%s312 + $0x7c] sm:$0x1]
        %v374 = vld [vmem:[%s312 + $0x80] sm:$0xf]
        %v375 = vld [vmem:[%s312 + $0x84] sm:$0x1]
        %v376 = vld [vmem:[%s312 + $0x88] sm:$0xf]
        %v377 = vld [vmem:[%s312 + $0x8c] sm:$0x1]
        %v378 = vld [vmem:[%s312 + $0x90] sm:$0xf]
        %v379 = vld [vmem:[%s312 + $0x94] sm:$0x1]
        %v380 = vld [vmem:[%s312 + $0x98] sm:$0xf]
        %v381 = vld [vmem:[%s312 + $0x9c] sm:$0x1]
        %v382 = vld [vmem:[%s312 + $0xa0] sm:$0xf]
        %v383 = vld [vmem:[%s312 + $0xa4] sm:$0x1]
        %v384 = vld [vmem:[%s312 + $0xa8] sm:$0xf]
        %v385 = vld [vmem:[%s312 + $0xac] sm:$0x1]
        %v386 = vld [vmem:[%s312 + $0xb0] sm:$0xf]
        %v387 = vld [vmem:[%s312 + $0xb4] sm:$0x1]
        %v388 = vld [vmem:[%s312 + $0xb8] sm:$0xf]
        %v389 = vld [vmem:[%s312 + $0xbc] sm:$0x1]
        %v390 = vld [vmem:[%s312 + $0xc0] sm:$0xf]
        %v391 = vld [vmem:[%s312 + $0xc4] sm:$0x1]
        %v392 = vld [vmem:[%s312 + $0xc8] sm:$0xf]
        %v393 = vld [vmem:[%s312 + $0xcc] sm:$0x1]
        %v394 = vld [vmem:[%s312 + $0xd0] sm:$0xf]
        %v395 = vld [vmem:[%s312 + $0xd4] sm:$0x1]
        %v396 = vld [vmem:[%s312 + $0xd8] sm:$0xf]
        %v397 = vld [vmem:[%s312 + $0xdc] sm:$0x1]
        %v398 = vld [vmem:[%s312 + $0xe0] sm:$0xf]
        %v399 = vld [vmem:[%s312 + $0xe4] sm:$0x1]
        %v400 = vld [vmem:[%s312 + $0xe8] sm:$0xf]
        %v401 = vld [vmem:[%s312 + $0xec] sm:$0x1]
        %v402 = vld [vmem:[%s312 + $0xf0] sm:$0xf]
        %v403 = vld [vmem:[%s312 + $0xf4] sm:$0x1]
        %v404 = vld [vmem:[%s312 + $0xf8] sm:$0xf]
        %v405 = vld [vmem:[%s312 + $0xfc] sm:$0x1]
        %v406 = vld [vmem:[%s312 + $0x100] sm:$0xf]
        %v407 = vld [vmem:[%s312 + $0x104] sm:$0x1]
        %v408 = vld [vmem:[%s312 + $0x108] sm:$0xf]
        %v409 = vld [vmem:[%s312 + $0x10c] sm:$0x1]
        %v410 = vld [vmem:[%s312 + $0x110] sm:$0xf]
        %v411 = vld [vmem:[%s312 + $0x114] sm:$0x1]
        %v412 = vld [vmem:[%s312 + $0x118] sm:$0xf]
        %v413 = vld [vmem:[%s312 + $0x11c] sm:$0x1]
        %v414 = vld [vmem:[%s312 + $0x120] sm:$0xf]
        %v415 = vld [vmem:[%s312 + $0x124] sm:$0x1]
        %v416 = vld [vmem:[%s312 + $0x128] sm:$0xf]
        %v417 = vld [vmem:[%s312 + $0x12c] sm:$0x1]
        %v418 = vld [vmem:[%s312 + $0x130] sm:$0xf]
        %v419 = vld [vmem:[%s312 + $0x134] sm:$0x1]
        %v420 = vld [vmem:[%s312 + $0x138] sm:$0xf]
        %v421 = vld [vmem:[%s312 + $0x13c] sm:$0x1]
        %v422 = vld [vmem:[%s312 + $0x140] sm:$0xf]
        %v423 = vld [vmem:[%s312 + $0x144] sm:$0x1]
        %v424 = vld [vmem:[%s312 + $0x148] sm:$0xf]
        %v425 = vld [vmem:[%s312 + $0x14c] sm:$0x1]
        %v426 = vld [vmem:[%s312 + $0x150] sm:$0xf]
        %v427 = vld [vmem:[%s312 + $0x154] sm:$0x1]
        %v428 = vld [vmem:[%s312 + $0x158] sm:$0xf]
        %v429 = vld [vmem:[%s312 + $0x15c] sm:$0x1]
        %v430 = vld [vmem:[%s312 + $0x160] sm:$0xf]
        %v431 = vld [vmem:[%s312 + $0x164] sm:$0x1]
        %v432 = vld [vmem:[%s312 + $0x168] sm:$0xf]
        %v433 = vld [vmem:[%s312 + $0x16c] sm:$0x1]
        %v434 = vld [vmem:[%s312 + $0x170] sm:$0xf]
        %v435 = vld [vmem:[%s312 + $0x174] sm:$0x1]
        %v436 = vld [vmem:[%s312 + $0x178] sm:$0xf]
        %v437 = vld [vmem:[%s312 + $0x17c] sm:$0x1]
        %v438 = vld [vmem:[%s312 + $0x180] sm:$0xf]
        %v439 = vld [vmem:[%s312 + $0x184] sm:$0x1]
        %v440 = vld [vmem:[%s312 + $0x188] sm:$0xf]
        %v441 = vld [vmem:[%s312 + $0x18c] sm:$0x1]
        %v442 = vld [vmem:[%s312 + $0x190] sm:$0xf]
        %v443 = vld [vmem:[%s312 + $0x194] sm:$0x1]
        %v444 = vld [vmem:[%s312 + $0x198] sm:$0xf]
        %v445 = vld [vmem:[%s312 + $0x19c] sm:$0x1]
        %v446 = vld [vmem:[%s312 + $0x1a0] sm:$0xf]
        %v447 = vld [vmem:[%s312 + $0x1a4] sm:$0x1]
        %v448 = vld [vmem:[%s312 + $0x1a8] sm:$0xf]
        %v449 = vld [vmem:[%s312 + $0x1ac] sm:$0x1]
        %v450 = vld [vmem:[%s312 + $0x1b0] sm:$0xf]
        %v451 = vld [vmem:[%s312 + $0x1b4] sm:$0x1]
        %v452 = vld [vmem:[%s312 + $0x1b8] sm:$0xf]
        %v453 = vld [vmem:[%s312 + $0x1bc] sm:$0x1]
        %v454 = vld [vmem:[%s312 + $0x1c0] sm:$0xf]
        %v455 = vld [vmem:[%s312 + $0x1c4] sm:$0x1]
        %v456 = vld [vmem:[%s312 + $0x1c8] sm:$0xf]
        %v457 = vld [vmem:[%s312 + $0x1cc] sm:$0x1]
        %v458 = vld [vmem:[%s312 + $0x1d0] sm:$0xf]
        %v459 = vld [vmem:[%s312 + $0x1d4] sm:$0x1]
        %v460 = vld [vmem:[%s312 + $0x1d8] sm:$0xf]
        %v461 = vld [vmem:[%s312 + $0x1dc] sm:$0x1]
        %v462 = vld [vmem:[%s312 + $0x1e0] sm:$0xf]
        %v463 = vld [vmem:[%s312 + $0x1e4] sm:$0x1]
        %v464 = vld [vmem:[%s312 + $0x1e8] sm:$0xf]
        %v465 = vld [vmem:[%s312 + $0x1ec] sm:$0x1]
        %v466 = vld [vmem:[%s312 + $0x1f0] sm:$0xf]
        %v467 = vld [vmem:[%s312 + $0x1f4] sm:$0x1]
        %v468 = vld [vmem:[%s312 + $0x1f8] sm:$0xf]
        %v469 = vld [vmem:[%s312 + $0x1fc] sm:$0x1]
        %v470 = vld [vmem:[%s312 + $0x200] sm:$0xf]
        %v471 = vld [vmem:[%s312 + $0x204] sm:$0x1]
        %v472 = vld [vmem:[%s312 + $0x208] sm:$0xf]
        %v473 = vld [vmem:[%s312 + $0x20c] sm:$0x1]
        %v474 = vld [vmem:[%s312 + $0x210] sm:$0xf]
        %v475 = vld [vmem:[%s312 + $0x214] sm:$0x1]
        %v476 = vld [vmem:[%s312 + $0x218] sm:$0xf]
        %v477 = vld [vmem:[%s312 + $0x21c] sm:$0x1]
        %v478 = vld [vmem:[%s312 + $0x220] sm:$0xf]
        %v479 = vld [vmem:[%s312 + $0x224] sm:$0x1]
        %v480 = vld [vmem:[%s312 + $0x228] sm:$0xf]
        %v481 = vld [vmem:[%s312 + $0x22c] sm:$0x1]
        %v482 = vld [vmem:[%s312 + $0x230] sm:$0xf]
        %v483 = vld [vmem:[%s312 + $0x234] sm:$0x1]
        %v484 = vld [vmem:[%s312 + $0x238] sm:$0xf]
        %v485 = vld [vmem:[%s312 + $0x23c] sm:$0x1]
        %v486 = vld [vmem:[%s330] sm:$0xf]
        %v487 = vld [vmem:[%s330 + $0x4] sm:$0x1]
        %v488 = vld [vmem:[%s330 + $0x8] sm:$0xf]
        %v489 = vld [vmem:[%s330 + $0xc] sm:$0x1]
        %v490 = vld [vmem:[%s330 + $0x10] sm:$0xf]
        %v491 = vld [vmem:[%s330 + $0x14] sm:$0x1]
        %v492 = vld [vmem:[%s330 + $0x18] sm:$0xf]
        %v493 = vld [vmem:[%s330 + $0x1c] sm:$0x1]
        %v494 = vld [vmem:[%s330 + $0x20] sm:$0xf]
        %v495 = vld [vmem:[%s330 + $0x24] sm:$0x1]
        %v496 = vld [vmem:[%s330 + $0x28] sm:$0xf]
        %v497 = vld [vmem:[%s330 + $0x2c] sm:$0x1]
        %v498 = vld [vmem:[%s330 + $0x30] sm:$0xf]
        %v499 = vld [vmem:[%s330 + $0x34] sm:$0x1]
        %v500 = vld [vmem:[%s330 + $0x38] sm:$0xf]
        %v501 = vld [vmem:[%s330 + $0x3c] sm:$0x1]
        %v502 = vld [vmem:[%s330 + $0x40] sm:$0xf]
        %v503 = vld [vmem:[%s330 + $0x44] sm:$0x1]
        %v632 = vunpack.c.l.b16 %v342
        %v633 = vunpack.c.l.b16 %v343
        %v634 = vunpack.c.l.b16 %v344
        %v635 = vunpack.c.l.b16 %v345
        %v636 = vunpack.c.l.b16 %v346
        %v637 = vunpack.c.l.b16 %v347
        %v638 = vunpack.c.l.b16 %v348
        %v639 = vunpack.c.l.b16 %v349
        %v640 = vunpack.c.l.b16 %v350
        %v641 = vunpack.c.l.b16 %v351
        %v642 = vunpack.c.l.b16 %v352
        %v643 = vunpack.c.l.b16 %v353
        %v644 = vunpack.c.l.b16 %v354
        %v645 = vunpack.c.l.b16 %v355
        %v646 = vunpack.c.l.b16 %v356
        %v647 = vunpack.c.l.b16 %v357
        %v648 = vunpack.c.l.b16 %v360
        %v649 = vunpack.c.l.b16 %v361
        %v650 = vunpack.c.l.b16 %v362
        %v651 = vunpack.c.l.b16 %v363
        %v652 = vunpack.c.l.b16 %v364
        %v653 = vunpack.c.l.b16 %v365
        %v654 = vunpack.c.l.b16 %v366
        %v655 = vunpack.c.l.b16 %v367
        %v656 = vunpack.c.l.b16 %v368
        %v657 = vunpack.c.l.b16 %v369
        %v658 = vunpack.c.l.b16 %v370
        %v659 = vunpack.c.l.b16 %v371
        %v660 = vunpack.c.l.b16 %v372
        %v661 = vunpack.c.l.b16 %v373
        %v662 = vunpack.c.l.b16 %v374
        %v663 = vunpack.c.l.b16 %v375
        %v664 = vunpack.c.l.b16 %v378
        %v665 = vunpack.c.l.b16 %v379
        %v666 = vunpack.c.l.b16 %v380
        %v667 = vunpack.c.l.b16 %v381
        %v668 = vunpack.c.l.b16 %v382
        %v669 = vunpack.c.l.b16 %v383
        %v670 = vunpack.c.l.b16 %v384
        %v671 = vunpack.c.l.b16 %v385
        %v672 = vunpack.c.l.b16 %v386
        %v673 = vunpack.c.l.b16 %v387
        %v674 = vunpack.c.l.b16 %v388
        %v675 = vunpack.c.l.b16 %v389
        %v676 = vunpack.c.l.b16 %v390
        %v677 = vunpack.c.l.b16 %v391
        %v678 = vunpack.c.l.b16 %v392
        %v679 = vunpack.c.l.b16 %v393
        %v680 = vunpack.c.l.b16 %v396
        %v681 = vunpack.c.l.b16 %v397
        %v682 = vunpack.c.l.b16 %v398
        %v683 = vunpack.c.l.b16 %v399
        %v684 = vunpack.c.l.b16 %v400
        %v685 = vunpack.c.l.b16 %v401
        %v686 = vunpack.c.l.b16 %v402
        %v687 = vunpack.c.l.b16 %v403
        %v688 = vunpack.c.l.b16 %v404
        %v689 = vunpack.c.l.b16 %v405
        %v690 = vunpack.c.l.b16 %v406
        %v691 = vunpack.c.l.b16 %v407
        %v692 = vunpack.c.l.b16 %v408
        %v693 = vunpack.c.l.b16 %v409
        %v694 = vunpack.c.l.b16 %v410
        %v695 = vunpack.c.l.b16 %v411
        %v696 = vunpack.c.l.b16 %v414
        %v697 = vunpack.c.l.b16 %v415
        %v698 = vunpack.c.l.b16 %v416
        %v699 = vunpack.c.l.b16 %v417
        %v700 = vunpack.c.l.b16 %v418
        %v701 = vunpack.c.l.b16 %v419
        %v702 = vunpack.c.l.b16 %v420
        %v703 = vunpack.c.l.b16 %v421
        %v704 = vunpack.c.l.b16 %v422
        %v705 = vunpack.c.l.b16 %v423
        %v706 = vunpack.c.l.b16 %v424
        %v707 = vunpack.c.l.b16 %v425
        %v708 = vunpack.c.l.b16 %v426
        %v709 = vunpack.c.l.b16 %v427
        %v710 = vunpack.c.l.b16 %v428
        %v711 = vunpack.c.l.b16 %v429
        %v712 = vunpack.c.l.b16 %v432
        %v713 = vunpack.c.l.b16 %v433
        %v714 = vunpack.c.l.b16 %v434
        %v715 = vunpack.c.l.b16 %v435
        %v716 = vunpack.c.l.b16 %v436
        %v717 = vunpack.c.l.b16 %v437
        %v718 = vunpack.c.l.b16 %v438
        %v719 = vunpack.c.l.b16 %v439
        %v720 = vunpack.c.l.b16 %v440
        %v721 = vunpack.c.l.b16 %v441
        %v722 = vunpack.c.l.b16 %v442
        %v723 = vunpack.c.l.b16 %v443
        %v724 = vunpack.c.l.b16 %v444
        %v725 = vunpack.c.l.b16 %v445
        %v726 = vunpack.c.l.b16 %v446
        %v727 = vunpack.c.l.b16 %v447
        %v728 = vunpack.c.l.b16 %v450
        %v729 = vunpack.c.l.b16 %v451
        %v730 = vunpack.c.l.b16 %v452
        %v731 = vunpack.c.l.b16 %v453
        %v732 = vunpack.c.l.b16 %v454
        %v733 = vunpack.c.l.b16 %v455
        %v734 = vunpack.c.l.b16 %v456
        %v735 = vunpack.c.l.b16 %v457
        %v736 = vunpack.c.l.b16 %v458
        %v737 = vunpack.c.l.b16 %v459
        %v738 = vunpack.c.l.b16 %v460
        %v739 = vunpack.c.l.b16 %v461
        %v740 = vunpack.c.l.b16 %v462
        %v741 = vunpack.c.l.b16 %v463
        %v742 = vunpack.c.l.b16 %v464
        %v743 = vunpack.c.l.b16 %v465
        %v744 = vunpack.c.l.b16 %v468
        %v745 = vunpack.c.l.b16 %v469
        %v746 = vunpack.c.l.b16 %v470
        %v747 = vunpack.c.l.b16 %v471
        %v748 = vunpack.c.l.b16 %v472
        %v749 = vunpack.c.l.b16 %v473
        %v750 = vunpack.c.l.b16 %v474
        %v751 = vunpack.c.l.b16 %v475
        %v752 = vunpack.c.l.b16 %v476
        %v753 = vunpack.c.l.b16 %v477
        %v754 = vunpack.c.l.b16 %v478
        %v755 = vunpack.c.l.b16 %v479
        %v756 = vunpack.c.l.b16 %v480
        %v757 = vunpack.c.l.b16 %v481
        %v758 = vunpack.c.l.b16 %v482
        %v759 = vunpack.c.l.b16 %v483
        %v760 = vpack.c.b16 %v633, %v632
        %v761 = vpack.c.b16 %v635, %v634
        %v762 = vpack.c.b16 %v637, %v636
        %v763 = vpack.c.b16 %v639, %v638
        %v764 = vpack.c.b16 %v641, %v640
        %v765 = vpack.c.b16 %v643, %v642
        %v766 = vpack.c.b16 %v645, %v644
        %v767 = vpack.c.b16 %v647, %v646
        %v768 = vpack.c.b16 %v649, %v648
        %v769 = vpack.c.b16 %v651, %v650
        %v770 = vpack.c.b16 %v653, %v652
        %v771 = vpack.c.b16 %v655, %v654
        %v772 = vpack.c.b16 %v657, %v656
        %v773 = vpack.c.b16 %v659, %v658
        %v774 = vpack.c.b16 %v661, %v660
        %v775 = vpack.c.b16 %v663, %v662
        %v776 = vpack.c.b16 %v665, %v664
        %v777 = vpack.c.b16 %v667, %v666
        %v778 = vpack.c.b16 %v669, %v668
        %v779 = vpack.c.b16 %v671, %v670
        %v780 = vpack.c.b16 %v673, %v672
        %v781 = vpack.c.b16 %v675, %v674
        %v782 = vpack.c.b16 %v677, %v676
        %v783 = vpack.c.b16 %v679, %v678
        %v784 = vpack.c.b16 %v681, %v680
        %v785 = vpack.c.b16 %v683, %v682
        %v786 = vpack.c.b16 %v685, %v684
        %v787 = vpack.c.b16 %v687, %v686
        %v788 = vpack.c.b16 %v689, %v688
        %v789 = vpack.c.b16 %v691, %v690
        %v790 = vpack.c.b16 %v693, %v692
        %v791 = vpack.c.b16 %v695, %v694
        %v792 = vpack.c.b16 %v697, %v696
        %v793 = vpack.c.b16 %v699, %v698
        %v794 = vpack.c.b16 %v701, %v700
        %v795 = vpack.c.b16 %v703, %v702
        %v796 = vpack.c.b16 %v705, %v704
        %v797 = vpack.c.b16 %v707, %v706
        %v798 = vpack.c.b16 %v709, %v708
        %v799 = vpack.c.b16 %v711, %v710
        %v800 = vpack.c.b16 %v713, %v712
        %v801 = vpack.c.b16 %v715, %v714
        %v802 = vpack.c.b16 %v717, %v716
        %v803 = vpack.c.b16 %v719, %v718
        %v804 = vpack.c.b16 %v721, %v720
        %v805 = vpack.c.b16 %v723, %v722
        %v806 = vpack.c.b16 %v725, %v724
        %v807 = vpack.c.b16 %v727, %v726
        %v808 = vpack.c.b16 %v729, %v728
        %v809 = vpack.c.b16 %v731, %v730
        %v810 = vpack.c.b16 %v733, %v732
        %v811 = vpack.c.b16 %v735, %v734
        %v812 = vpack.c.b16 %v737, %v736
        %v813 = vpack.c.b16 %v739, %v738
        %v814 = vpack.c.b16 %v741, %v740
        %v815 = vpack.c.b16 %v743, %v742
        %v816 = vpack.c.b16 %v745, %v744
        %v817 = vpack.c.b16 %v747, %v746
        %v818 = vpack.c.b16 %v749, %v748
        %v819 = vpack.c.b16 %v751, %v750
        %v820 = vpack.c.b16 %v753, %v752
        %v821 = vpack.c.b16 %v755, %v754
        %v822 = vpack.c.b16 %v757, %v756
        %v823 = vpack.c.b16 %v759, %v758
        %v825 = vshrl.u32 %v760, 16
        %v827 = vshll.u32 %v760, 16
        %v829 = vrot.slane %v827, 1
        %v830 = vor.u32 %v825, %v829
        %v832 = vshrl.u32 %v761, 16
        %v834 = vshll.u32 %v761, 16
        %v836 = vrot.slane %v834, 1
        %v837 = vor.u32 %v832, %v836
        %v839 = vshrl.u32 %v762, 16
        %v841 = vshll.u32 %v762, 16
        %v843 = vrot.slane %v841, 1
        %v844 = vor.u32 %v839, %v843
        %v846 = vshrl.u32 %v763, 16
        %v848 = vshll.u32 %v763, 16
        %v850 = vrot.slane %v848, 1
        %v851 = vor.u32 %v846, %v850
        %v853 = vshrl.u32 %v764, 16
        %v855 = vshll.u32 %v764, 16
        %v857 = vrot.slane %v855, 1
        %v858 = vor.u32 %v853, %v857
        %v860 = vshrl.u32 %v765, 16
        %v862 = vshll.u32 %v765, 16
        %v864 = vrot.slane %v862, 1
        %v865 = vor.u32 %v860, %v864
        %v867 = vshrl.u32 %v766, 16
        %v869 = vshll.u32 %v766, 16
        %v871 = vrot.slane %v869, 1
        %v872 = vor.u32 %v867, %v871
        %v874 = vshrl.u32 %v767, 16
        %v876 = vshll.u32 %v767, 16
        %v878 = vrot.slane %v876, 1
        %v879 = vor.u32 %v874, %v878
        %v881 = vshrl.u32 %v768, 16
        %v883 = vshll.u32 %v768, 16
        %v885 = vrot.slane %v883, 1
        %v886 = vor.u32 %v881, %v885
        %v888 = vshrl.u32 %v769, 16
        %v890 = vshll.u32 %v769, 16
        %v892 = vrot.slane %v890, 1
        %v893 = vor.u32 %v888, %v892
        %v895 = vshrl.u32 %v770, 16
        %v897 = vshll.u32 %v770, 16
        %v899 = vrot.slane %v897, 1
        %v900 = vor.u32 %v895, %v899
        %v902 = vshrl.u32 %v771, 16
        %v904 = vshll.u32 %v771, 16
        %v906 = vrot.slane %v904, 1
        %v907 = vor.u32 %v902, %v906
        %v909 = vshrl.u32 %v772, 16
        %v911 = vshll.u32 %v772, 16
        %v913 = vrot.slane %v911, 1
        %v914 = vor.u32 %v909, %v913
        %v916 = vshrl.u32 %v773, 16
        %v918 = vshll.u32 %v773, 16
        %v920 = vrot.slane %v918, 1
        %v921 = vor.u32 %v916, %v920
        %v923 = vshrl.u32 %v774, 16
        %v925 = vshll.u32 %v774, 16
        %v927 = vrot.slane %v925, 1
        %v928 = vor.u32 %v923, %v927
        %v930 = vshrl.u32 %v775, 16
        %v932 = vshll.u32 %v775, 16
        %v934 = vrot.slane %v932, 1
        %v935 = vor.u32 %v930, %v934
        %v937 = vshrl.u32 %v776, 16
        %v939 = vshll.u32 %v776, 16
        %v941 = vrot.slane %v939, 1
        %v942 = vor.u32 %v937, %v941
        %v944 = vshrl.u32 %v777, 16
        %v946 = vshll.u32 %v777, 16
        %v948 = vrot.slane %v946, 1
        %v949 = vor.u32 %v944, %v948
        %v951 = vshrl.u32 %v778, 16
        %v953 = vshll.u32 %v778, 16
        %v955 = vrot.slane %v953, 1
        %v956 = vor.u32 %v951, %v955
        %v958 = vshrl.u32 %v779, 16
        %v960 = vshll.u32 %v779, 16
        %v962 = vrot.slane %v960, 1
        %v963 = vor.u32 %v958, %v962
        %v965 = vshrl.u32 %v780, 16
        %v967 = vshll.u32 %v780, 16
        %v969 = vrot.slane %v967, 1
        %v970 = vor.u32 %v965, %v969
        %v972 = vshrl.u32 %v781, 16
        %v974 = vshll.u32 %v781, 16
        %v976 = vrot.slane %v974, 1
        %v977 = vor.u32 %v972, %v976
        %v979 = vshrl.u32 %v782, 16
        %v981 = vshll.u32 %v782, 16
        %v983 = vrot.slane %v981, 1
        %v984 = vor.u32 %v979, %v983
        %v986 = vshrl.u32 %v783, 16
        %v988 = vshll.u32 %v783, 16
        %v990 = vrot.slane %v988, 1
        %v991 = vor.u32 %v986, %v990
        %v993 = vshrl.u32 %v784, 16
        %v995 = vshll.u32 %v784, 16
        %v997 = vrot.slane %v995, 1
        %v998 = vor.u32 %v993, %v997
        %v1000 = vshrl.u32 %v785, 16
        %v1002 = vshll.u32 %v785, 16
        %v1004 = vrot.slane %v1002, 1
        %v1005 = vor.u32 %v1000, %v1004
        %v1007 = vshrl.u32 %v786, 16
        %v1009 = vshll.u32 %v786, 16
        %v1011 = vrot.slane %v1009, 1
        %v1012 = vor.u32 %v1007, %v1011
        %v1014 = vshrl.u32 %v787, 16
        %v1016 = vshll.u32 %v787, 16
        %v1018 = vrot.slane %v1016, 1
        %v1019 = vor.u32 %v1014, %v1018
        %v1021 = vshrl.u32 %v788, 16
        %v1023 = vshll.u32 %v788, 16
        %v1025 = vrot.slane %v1023, 1
        %v1026 = vor.u32 %v1021, %v1025
        %v1028 = vshrl.u32 %v789, 16
        %v1030 = vshll.u32 %v789, 16
        %v1032 = vrot.slane %v1030, 1
        %v1033 = vor.u32 %v1028, %v1032
        %v1035 = vshrl.u32 %v790, 16
        %v1037 = vshll.u32 %v790, 16
        %v1039 = vrot.slane %v1037, 1
        %v1040 = vor.u32 %v1035, %v1039
        %v1042 = vshrl.u32 %v791, 16
        %v1044 = vshll.u32 %v791, 16
        %v1046 = vrot.slane %v1044, 1
        %v1047 = vor.u32 %v1042, %v1046
        %v1049 = vshrl.u32 %v792, 16
        %v1051 = vshll.u32 %v792, 16
        %v1053 = vrot.slane %v1051, 1
        %v1054 = vor.u32 %v1049, %v1053
        %v1056 = vshrl.u32 %v793, 16
        %v1058 = vshll.u32 %v793, 16
        %v1060 = vrot.slane %v1058, 1
        %v1061 = vor.u32 %v1056, %v1060
        %v1063 = vshrl.u32 %v794, 16
        %v1065 = vshll.u32 %v794, 16
        %v1067 = vrot.slane %v1065, 1
        %v1068 = vor.u32 %v1063, %v1067
        %v1070 = vshrl.u32 %v795, 16
        %v1072 = vshll.u32 %v795, 16
        %v1074 = vrot.slane %v1072, 1
        %v1075 = vor.u32 %v1070, %v1074
        %v1077 = vshrl.u32 %v796, 16
        %v1079 = vshll.u32 %v796, 16
        %v1081 = vrot.slane %v1079, 1
        %v1082 = vor.u32 %v1077, %v1081
        %v1084 = vshrl.u32 %v797, 16
        %v1086 = vshll.u32 %v797, 16
        %v1088 = vrot.slane %v1086, 1
        %v1089 = vor.u32 %v1084, %v1088
        %v1091 = vshrl.u32 %v798, 16
        %v1093 = vshll.u32 %v798, 16
        %v1095 = vrot.slane %v1093, 1
        %v1096 = vor.u32 %v1091, %v1095
        %v1098 = vshrl.u32 %v799, 16
        %v1100 = vshll.u32 %v799, 16
        %v1102 = vrot.slane %v1100, 1
        %v1103 = vor.u32 %v1098, %v1102
        %v1105 = vshrl.u32 %v800, 16
        %v1107 = vshll.u32 %v800, 16
        %v1109 = vrot.slane %v1107, 1
        %v1110 = vor.u32 %v1105, %v1109
        %v1112 = vshrl.u32 %v801, 16
        %v1114 = vshll.u32 %v801, 16
        %v1116 = vrot.slane %v1114, 1
        %v1117 = vor.u32 %v1112, %v1116
        %v1119 = vshrl.u32 %v802, 16
        %v1121 = vshll.u32 %v802, 16
        %v1123 = vrot.slane %v1121, 1
        %v1124 = vor.u32 %v1119, %v1123
        %v1126 = vshrl.u32 %v803, 16
        %v1128 = vshll.u32 %v803, 16
        %v1130 = vrot.slane %v1128, 1
        %v1131 = vor.u32 %v1126, %v1130
        %v1133 = vshrl.u32 %v804, 16
        %v1135 = vshll.u32 %v804, 16
        %v1137 = vrot.slane %v1135, 1
        %v1138 = vor.u32 %v1133, %v1137
        %v1140 = vshrl.u32 %v805, 16
        %v1142 = vshll.u32 %v805, 16
        %v1144 = vrot.slane %v1142, 1
        %v1145 = vor.u32 %v1140, %v1144
        %v1147 = vshrl.u32 %v806, 16
        %v1149 = vshll.u32 %v806, 16
        %v1151 = vrot.slane %v1149, 1
        %v1152 = vor.u32 %v1147, %v1151
        %v1154 = vshrl.u32 %v807, 16
        %v1156 = vshll.u32 %v807, 16
        %v1158 = vrot.slane %v1156, 1
        %v1159 = vor.u32 %v1154, %v1158
        %v1161 = vshrl.u32 %v808, 16
        %v1163 = vshll.u32 %v808, 16
        %v1165 = vrot.slane %v1163, 1
        %v1166 = vor.u32 %v1161, %v1165
        %v1168 = vshrl.u32 %v809, 16
        %v1170 = vshll.u32 %v809, 16
        %v1172 = vrot.slane %v1170, 1
        %v1173 = vor.u32 %v1168, %v1172
        %v1175 = vshrl.u32 %v810, 16
        %v1177 = vshll.u32 %v810, 16
        %v1179 = vrot.slane %v1177, 1
        %v1180 = vor.u32 %v1175, %v1179
        %v1182 = vshrl.u32 %v811, 16
        %v1184 = vshll.u32 %v811, 16
        %v1186 = vrot.slane %v1184, 1
        %v1187 = vor.u32 %v1182, %v1186
        %v1189 = vshrl.u32 %v812, 16
        %v1191 = vshll.u32 %v812, 16
        %v1193 = vrot.slane %v1191, 1
        %v1194 = vor.u32 %v1189, %v1193
        %v1196 = vshrl.u32 %v813, 16
        %v1198 = vshll.u32 %v813, 16
        %v1200 = vrot.slane %v1198, 1
        %v1201 = vor.u32 %v1196, %v1200
        %v1203 = vshrl.u32 %v814, 16
        %v1205 = vshll.u32 %v814, 16
        %v1207 = vrot.slane %v1205, 1
        %v1208 = vor.u32 %v1203, %v1207
        %v1210 = vshrl.u32 %v815, 16
        %v1212 = vshll.u32 %v815, 16
        %v1214 = vrot.slane %v1212, 1
        %v1215 = vor.u32 %v1210, %v1214
        %v1217 = vshrl.u32 %v816, 16
        %v1219 = vshll.u32 %v816, 16
        %v1221 = vrot.slane %v1219, 1
        %v1222 = vor.u32 %v1217, %v1221
        %v1224 = vshrl.u32 %v817, 16
        %v1226 = vshll.u32 %v817, 16
        %v1228 = vrot.slane %v1226, 1
        %v1229 = vor.u32 %v1224, %v1228
        %v1231 = vshrl.u32 %v818, 16
        %v1233 = vshll.u32 %v818, 16
        %v1235 = vrot.slane %v1233, 1
        %v1236 = vor.u32 %v1231, %v1235
        %v1238 = vshrl.u32 %v819, 16
        %v1240 = vshll.u32 %v819, 16
        %v1242 = vrot.slane %v1240, 1
        %v1243 = vor.u32 %v1238, %v1242
        %v1245 = vshrl.u32 %v820, 16
        %v1247 = vshll.u32 %v820, 16
        %v1249 = vrot.slane %v1247, 1
        %v1250 = vor.u32 %v1245, %v1249
        %v1252 = vshrl.u32 %v821, 16
        %v1254 = vshll.u32 %v821, 16
        %v1256 = vrot.slane %v1254, 1
        %v1257 = vor.u32 %v1252, %v1256
        %v1259 = vshrl.u32 %v822, 16
        %v1261 = vshll.u32 %v822, 16
        %v1263 = vrot.slane %v1261, 1
        %v1264 = vor.u32 %v1259, %v1263
        %v1266 = vshrl.u32 %v823, 16
        %v1268 = vshll.u32 %v823, 16
        %v1270 = vrot.slane %v1268, 1
        %v1271 = vor.u32 %v1266, %v1270
        %1272 = vrot.lane.b32.xlu0 %v830, 4
        %v1273 = vpop.permute.xlu0 %1272
        %1274 = vrot.lane.b32.xlu0 %v837, 4
        %v1275 = vpop.permute.xlu0 %1274
        %1276 = vrot.lane.b32.xlu0 %v844, 4
        %v1277 = vpop.permute.xlu0 %1276
        %1278 = vrot.lane.b32.xlu0 %v851, 4
        %v1279 = vpop.permute.xlu0 %1278
        %1280 = vrot.lane.b32.xlu0 %v858, 4
        %v1281 = vpop.permute.xlu0 %1280
        %1282 = vrot.lane.b32.xlu0 %v865, 4
        %v1283 = vpop.permute.xlu0 %1282
        %1284 = vrot.lane.b32.xlu0 %v872, 4
        %v1285 = vpop.permute.xlu0 %1284
        %1286 = vrot.lane.b32.xlu0 %v879, 4
        %v1287 = vpop.permute.xlu0 %1286
        %1288 = vrot.lane.b32.xlu0 %v886, 4
        %v1289 = vpop.permute.xlu0 %1288
        %1290 = vrot.lane.b32.xlu0 %v893, 4
        %v1291 = vpop.permute.xlu0 %1290
        %1292 = vrot.lane.b32.xlu0 %v900, 4
        %v1293 = vpop.permute.xlu0 %1292
        %1294 = vrot.lane.b32.xlu0 %v907, 4
        %v1295 = vpop.permute.xlu0 %1294
        %1296 = vrot.lane.b32.xlu0 %v914, 4
        %v1297 = vpop.permute.xlu0 %1296
        %1298 = vrot.lane.b32.xlu0 %v921, 4
        %v1299 = vpop.permute.xlu0 %1298
        %1300 = vrot.lane.b32.xlu0 %v928, 4
        %v1301 = vpop.permute.xlu0 %1300
        %1302 = vrot.lane.b32.xlu0 %v935, 4
        %v1303 = vpop.permute.xlu0 %1302
        %1304 = vrot.lane.b32.xlu0 %v942, 4
        %v1305 = vpop.permute.xlu0 %1304
        %1306 = vrot.lane.b32.xlu0 %v949, 4
        %v1307 = vpop.permute.xlu0 %1306
        %1308 = vrot.lane.b32.xlu0 %v956, 4
        %v1309 = vpop.permute.xlu0 %1308
        %1310 = vrot.lane.b32.xlu0 %v963, 4
        %v1311 = vpop.permute.xlu0 %1310
        %1312 = vrot.lane.b32.xlu0 %v970, 4
        %v1313 = vpop.permute.xlu0 %1312
        %1314 = vrot.lane.b32.xlu0 %v977, 4
        %v1315 = vpop.permute.xlu0 %1314
        %1316 = vrot.lane.b32.xlu0 %v984, 4
        %v1317 = vpop.permute.xlu0 %1316
        %1318 = vrot.lane.b32.xlu0 %v991, 4
        %v1319 = vpop.permute.xlu0 %1318
        %1320 = vrot.lane.b32.xlu0 %v998, 4
        %v1321 = vpop.permute.xlu0 %1320
        %1322 = vrot.lane.b32.xlu0 %v1005, 4
        %v1323 = vpop.permute.xlu0 %1322
        %1324 = vrot.lane.b32.xlu0 %v1012, 4
        %v1325 = vpop.permute.xlu0 %1324
        %1326 = vrot.lane.b32.xlu0 %v1019, 4
        %v1327 = vpop.permute.xlu0 %1326
        %1328 = vrot.lane.b32.xlu0 %v1026, 4
        %v1329 = vpop.permute.xlu0 %1328
        %1330 = vrot.lane.b32.xlu0 %v1033, 4
        %v1331 = vpop.permute.xlu0 %1330
        %1332 = vrot.lane.b32.xlu0 %v1040, 4
        %v1333 = vpop.permute.xlu0 %1332
        %1334 = vrot.lane.b32.xlu0 %v1047, 4
        %v1335 = vpop.permute.xlu0 %1334
        %1336 = vrot.lane.b32.xlu0 %v1054, 4
        %v1337 = vpop.permute.xlu0 %1336
        %1338 = vrot.lane.b32.xlu0 %v1061, 4
        %v1339 = vpop.permute.xlu0 %1338
        %1340 = vrot.lane.b32.xlu0 %v1068, 4
        %v1341 = vpop.permute.xlu0 %1340
        %1342 = vrot.lane.b32.xlu0 %v1075, 4
        %v1343 = vpop.permute.xlu0 %1342
        %1344 = vrot.lane.b32.xlu0 %v1082, 4
        %v1345 = vpop.permute.xlu0 %1344
        %1346 = vrot.lane.b32.xlu0 %v1089, 4
        %v1347 = vpop.permute.xlu0 %1346
        %1348 = vrot.lane.b32.xlu0 %v1096, 4
        %v1349 = vpop.permute.xlu0 %1348
        %1350 = vrot.lane.b32.xlu0 %v1103, 4
        %v1351 = vpop.permute.xlu0 %1350
        %1352 = vrot.lane.b32.xlu0 %v1110, 4
        %v1353 = vpop.permute.xlu0 %1352
        %1354 = vrot.lane.b32.xlu0 %v1117, 4
        %v1355 = vpop.permute.xlu0 %1354
        %1356 = vrot.lane.b32.xlu0 %v1124, 4
        %v1357 = vpop.permute.xlu0 %1356
        %1358 = vrot.lane.b32.xlu0 %v1131, 4
        %v1359 = vpop.permute.xlu0 %1358
        %1360 = vrot.lane.b32.xlu0 %v1138, 4
        %v1361 = vpop.permute.xlu0 %1360
        %1362 = vrot.lane.b32.xlu0 %v1145, 4
        %v1363 = vpop.permute.xlu0 %1362
        %1364 = vrot.lane.b32.xlu0 %v1152, 4
        %v1365 = vpop.permute.xlu0 %1364
        %1366 = vrot.lane.b32.xlu0 %v1159, 4
        %v1367 = vpop.permute.xlu0 %1366
        %1368 = vrot.lane.b32.xlu0 %v1166, 4
        %v1369 = vpop.permute.xlu0 %1368
        %1370 = vrot.lane.b32.xlu0 %v1173, 4
        %v1371 = vpop.permute.xlu0 %1370
        %1372 = vrot.lane.b32.xlu0 %v1180, 4
        %v1373 = vpop.permute.xlu0 %1372
        %1374 = vrot.lane.b32.xlu0 %v1187, 4
        %v1375 = vpop.permute.xlu0 %1374
        %1376 = vrot.lane.b32.xlu0 %v1194, 4
        %v1377 = vpop.permute.xlu0 %1376
        %1378 = vrot.lane.b32.xlu0 %v1201, 4
        %v1379 = vpop.permute.xlu0 %1378
        %1380 = vrot.lane.b32.xlu0 %v1208, 4
        %v1381 = vpop.permute.xlu0 %1380
        %1382 = vrot.lane.b32.xlu0 %v1215, 4
        %v1383 = vpop.permute.xlu0 %1382
        %1384 = vrot.lane.b32.xlu0 %v1222, 4
        %v1385 = vpop.permute.xlu0 %1384
        %1386 = vrot.lane.b32.xlu0 %v1229, 4
        %v1387 = vpop.permute.xlu0 %1386
        %1388 = vrot.lane.b32.xlu0 %v1236, 4
        %v1389 = vpop.permute.xlu0 %1388
        %1390 = vrot.lane.b32.xlu0 %v1243, 4
        %v1391 = vpop.permute.xlu0 %1390
        %1392 = vrot.lane.b32.xlu0 %v1250, 4
        %v1393 = vpop.permute.xlu0 %1392
        %1394 = vrot.lane.b32.xlu0 %v1257, 4
        %v1395 = vpop.permute.xlu0 %1394
        %1396 = vrot.lane.b32.xlu0 %v1264, 4
        %v1397 = vpop.permute.xlu0 %1396
        %1398 = vrot.lane.b32.xlu0 %v1271, 4
        %v1399 = vpop.permute.xlu0 %1398
        %v1408 = vunpack.c.l.b16 %v358
        %v1409 = vunpack.c.l.b16 %v376
        %v1410 = vunpack.c.l.b16 %v394
        %v1411 = vunpack.c.l.b16 %v412
        %v1412 = vunpack.c.l.b16 %v430
        %v1413 = vunpack.c.l.b16 %v448
        %v1414 = vunpack.c.l.b16 %v466
        %v1415 = vunpack.c.l.b16 %v484
        %v1416 = vpack.c.b16 %v634, %v634
        %v1417 = vpack.c.b16 %v636, %v636
        %v1418 = vpack.c.b16 %v638, %v638
        %v1419 = vpack.c.b16 %v640, %v640
        %v1420 = vpack.c.b16 %v642, %v642
        %v1421 = vpack.c.b16 %v644, %v644
        %v1422 = vpack.c.b16 %v646, %v646
        %v1423 = vpack.c.b16 %v1408, %v1408
        %v1424 = vpack.c.b16 %v650, %v650
        %v1425 = vpack.c.b16 %v652, %v652
        %v1426 = vpack.c.b16 %v654, %v654
        %v1427 = vpack.c.b16 %v656, %v656
        %v1428 = vpack.c.b16 %v658, %v658
        %v1429 = vpack.c.b16 %v660, %v660
        %v1430 = vpack.c.b16 %v662, %v662
        %v1431 = vpack.c.b16 %v1409, %v1409
        %v1432 = vpack.c.b16 %v666, %v666
        %v1433 = vpack.c.b16 %v668, %v668
        %v1434 = vpack.c.b16 %v670, %v670
        %v1435 = vpack.c.b16 %v672, %v672
        %v1436 = vpack.c.b16 %v674, %v674
        %v1437 = vpack.c.b16 %v676, %v676
        %v1438 = vpack.c.b16 %v678, %v678
        %v1439 = vpack.c.b16 %v1410, %v1410
        %v1440 = vpack.c.b16 %v682, %v682
        %v1441 = vpack.c.b16 %v684, %v684
        %v1442 = vpack.c.b16 %v686, %v686
        %v1443 = vpack.c.b16 %v688, %v688
        %v1444 = vpack.c.b16 %v690, %v690
        %v1445 = vpack.c.b16 %v692, %v692
        %v1446 = vpack.c.b16 %v694, %v694
        %v1447 = vpack.c.b16 %v1411, %v1411
        %v1448 = vpack.c.b16 %v698, %v698
        %v1449 = vpack.c.b16 %v700, %v700
        %v1450 = vpack.c.b16 %v702, %v702
        %v1451 = vpack.c.b16 %v704, %v704
        %v1452 = vpack.c.b16 %v706, %v706
        %v1453 = vpack.c.b16 %v708, %v708
        %v1454 = vpack.c.b16 %v710, %v710
        %v1455 = vpack.c.b16 %v1412, %v1412
        %v1456 = vpack.c.b16 %v714, %v714
        %v1457 = vpack.c.b16 %v716, %v716
        %v1458 = vpack.c.b16 %v718, %v718
        %v1459 = vpack.c.b16 %v720, %v720
        %v1460 = vpack.c.b16 %v722, %v722
        %v1461 = vpack.c.b16 %v724, %v724
        %v1462 = vpack.c.b16 %v726, %v726
        %v1463 = vpack.c.b16 %v1413, %v1413
        %v1464 = vpack.c.b16 %v730, %v730
        %v1465 = vpack.c.b16 %v732, %v732
        %v1466 = vpack.c.b16 %v734, %v734
        %v1467 = vpack.c.b16 %v736, %v736
        %v1468 = vpack.c.b16 %v738, %v738
        %v1469 = vpack.c.b16 %v740, %v740
        %v1470 = vpack.c.b16 %v742, %v742
        %v1471 = vpack.c.b16 %v1414, %v1414
        %v1472 = vpack.c.b16 %v746, %v746
        %v1473 = vpack.c.b16 %v748, %v748
        %v1474 = vpack.c.b16 %v750, %v750
        %v1475 = vpack.c.b16 %v752, %v752
        %v1476 = vpack.c.b16 %v754, %v754
        %v1477 = vpack.c.b16 %v756, %v756
        %v1478 = vpack.c.b16 %v758, %v758
        %v1479 = vpack.c.b16 %v1415, %v1415
        %1480 = vrot.lane.b32.xlu0 %v1416, 8
        %v1481 = vpop.permute.xlu0 %1480
        %1482 = vrot.lane.b32.xlu0 %v1417, 8
        %v1483 = vpop.permute.xlu0 %1482
        %1484 = vrot.lane.b32.xlu0 %v1418, 8
        %v1485 = vpop.permute.xlu0 %1484
        %1486 = vrot.lane.b32.xlu0 %v1419, 8
        %v1487 = vpop.permute.xlu0 %1486
        %1488 = vrot.lane.b32.xlu0 %v1420, 8
        %v1489 = vpop.permute.xlu0 %1488
        %1490 = vrot.lane.b32.xlu0 %v1421, 8
        %v1491 = vpop.permute.xlu0 %1490
        %1492 = vrot.lane.b32.xlu0 %v1422, 8
        %v1493 = vpop.permute.xlu0 %1492
        %1494 = vrot.lane.b32.xlu0 %v1423, 8
        %v1495 = vpop.permute.xlu0 %1494
        %1496 = vrot.lane.b32.xlu0 %v1424, 8
        %v1497 = vpop.permute.xlu0 %1496
        %1498 = vrot.lane.b32.xlu0 %v1425, 8
        %v1499 = vpop.permute.xlu0 %1498
        %1500 = vrot.lane.b32.xlu0 %v1426, 8
        %v1501 = vpop.permute.xlu0 %1500
        %1502 = vrot.lane.b32.xlu0 %v1427, 8
        %v1503 = vpop.permute.xlu0 %1502
        %1504 = vrot.lane.b32.xlu0 %v1428, 8
        %v1505 = vpop.permute.xlu0 %1504
        %1506 = vrot.lane.b32.xlu0 %v1429, 8
        %v1507 = vpop.permute.xlu0 %1506
        %1508 = vrot.lane.b32.xlu0 %v1430, 8
        %v1509 = vpop.permute.xlu0 %1508
        %1510 = vrot.lane.b32.xlu0 %v1431, 8
        %v1511 = vpop.permute.xlu0 %1510
        %1512 = vrot.lane.b32.xlu0 %v1432, 8
        %v1513 = vpop.permute.xlu0 %1512
        %1514 = vrot.lane.b32.xlu0 %v1433, 8
        %v1515 = vpop.permute.xlu0 %1514
        %1516 = vrot.lane.b32.xlu0 %v1434, 8
        %v1517 = vpop.permute.xlu0 %1516
        %1518 = vrot.lane.b32.xlu0 %v1435, 8
        %v1519 = vpop.permute.xlu0 %1518
        %1520 = vrot.lane.b32.xlu0 %v1436, 8
        %v1521 = vpop.permute.xlu0 %1520
        %1522 = vrot.lane.b32.xlu0 %v1437, 8
        %v1523 = vpop.permute.xlu0 %1522
        %1524 = vrot.lane.b32.xlu0 %v1438, 8
        %v1525 = vpop.permute.xlu0 %1524
        %1526 = vrot.lane.b32.xlu0 %v1439, 8
        %v1527 = vpop.permute.xlu0 %1526
        %1528 = vrot.lane.b32.xlu0 %v1440, 8
        %v1529 = vpop.permute.xlu0 %1528
        %1530 = vrot.lane.b32.xlu0 %v1441, 8
        %v1531 = vpop.permute.xlu0 %1530
        %1532 = vrot.lane.b32.xlu0 %v1442, 8
        %v1533 = vpop.permute.xlu0 %1532
        %1534 = vrot.lane.b32.xlu0 %v1443, 8
        %v1535 = vpop.permute.xlu0 %1534
        %1536 = vrot.lane.b32.xlu0 %v1444, 8
        %v1537 = vpop.permute.xlu0 %1536
        %1538 = vrot.lane.b32.xlu0 %v1445, 8
        %v1539 = vpop.permute.xlu0 %1538
        %1540 = vrot.lane.b32.xlu0 %v1446, 8
        %v1541 = vpop.permute.xlu0 %1540
        %1542 = vrot.lane.b32.xlu0 %v1447, 8
        %v1543 = vpop.permute.xlu0 %1542
        %1544 = vrot.lane.b32.xlu0 %v1448, 8
        %v1545 = vpop.permute.xlu0 %1544
        %1546 = vrot.lane.b32.xlu0 %v1449, 8
        %v1547 = vpop.permute.xlu0 %1546
        %1548 = vrot.lane.b32.xlu0 %v1450, 8
        %v1549 = vpop.permute.xlu0 %1548
        %1550 = vrot.lane.b32.xlu0 %v1451, 8
        %v1551 = vpop.permute.xlu0 %1550
        %1552 = vrot.lane.b32.xlu0 %v1452, 8
        %v1553 = vpop.permute.xlu0 %1552
        %1554 = vrot.lane.b32.xlu0 %v1453, 8
        %v1555 = vpop.permute.xlu0 %1554
        %1556 = vrot.lane.b32.xlu0 %v1454, 8
        %v1557 = vpop.permute.xlu0 %1556
        %1558 = vrot.lane.b32.xlu0 %v1455, 8
        %v1559 = vpop.permute.xlu0 %1558
        %1560 = vrot.lane.b32.xlu0 %v1456, 8
        %v1561 = vpop.permute.xlu0 %1560
        %1562 = vrot.lane.b32.xlu0 %v1457, 8
        %v1563 = vpop.permute.xlu0 %1562
        %1564 = vrot.lane.b32.xlu0 %v1458, 8
        %v1565 = vpop.permute.xlu0 %1564
        %1566 = vrot.lane.b32.xlu0 %v1459, 8
        %v1567 = vpop.permute.xlu0 %1566
        %1568 = vrot.lane.b32.xlu0 %v1460, 8
        %v1569 = vpop.permute.xlu0 %1568
        %1570 = vrot.lane.b32.xlu0 %v1461, 8
        %v1571 = vpop.permute.xlu0 %1570
        %1572 = vrot.lane.b32.xlu0 %v1462, 8
        %v1573 = vpop.permute.xlu0 %1572
        %1574 = vrot.lane.b32.xlu0 %v1463, 8
        %v1575 = vpop.permute.xlu0 %1574
        %1576 = vrot.lane.b32.xlu0 %v1464, 8
        %v1577 = vpop.permute.xlu0 %1576
        %1578 = vrot.lane.b32.xlu0 %v1465, 8
        %v1579 = vpop.permute.xlu0 %1578
        %1580 = vrot.lane.b32.xlu0 %v1466, 8
        %v1581 = vpop.permute.xlu0 %1580
        %1582 = vrot.lane.b32.xlu0 %v1467, 8
        %v1583 = vpop.permute.xlu0 %1582
        %1584 = vrot.lane.b32.xlu0 %v1468, 8
        %v1585 = vpop.permute.xlu0 %1584
        %1586 = vrot.lane.b32.xlu0 %v1469, 8
        %v1587 = vpop.permute.xlu0 %1586
        %1588 = vrot.lane.b32.xlu0 %v1470, 8
        %v1589 = vpop.permute.xlu0 %1588
        %1590 = vrot.lane.b32.xlu0 %v1471, 8
        %v1591 = vpop.permute.xlu0 %1590
        %1592 = vrot.lane.b32.xlu0 %v1472, 8
        %v1593 = vpop.permute.xlu0 %1592
        %1594 = vrot.lane.b32.xlu0 %v1473, 8
        %v1595 = vpop.permute.xlu0 %1594
        %1596 = vrot.lane.b32.xlu0 %v1474, 8
        %v1597 = vpop.permute.xlu0 %1596
        %1598 = vrot.lane.b32.xlu0 %v1475, 8
        %v1599 = vpop.permute.xlu0 %1598
        %1600 = vrot.lane.b32.xlu0 %v1476, 8
        %v1601 = vpop.permute.xlu0 %1600
        %1602 = vrot.lane.b32.xlu0 %v1477, 8
        %v1603 = vpop.permute.xlu0 %1602
        %1604 = vrot.lane.b32.xlu0 %v1478, 8
        %v1605 = vpop.permute.xlu0 %1604
        %1606 = vrot.lane.b32.xlu0 %v1479, 8
        %v1607 = vpop.permute.xlu0 %1606
        %v1616 = vunpack.c.l.b16 %v359
        %v1617 = vunpack.c.l.b16 %v377
        %v1618 = vunpack.c.l.b16 %v395
        %v1619 = vunpack.c.l.b16 %v413
        %v1620 = vunpack.c.l.b16 %v431
        %v1621 = vunpack.c.l.b16 %v449
        %v1622 = vunpack.c.l.b16 %v467
        %v1623 = vunpack.c.l.b16 %v485
        %v1624 = vpack.c.b16 %v1616, %v1408
        %v1625 = vpack.c.b16 %v1617, %v1409
        %v1626 = vpack.c.b16 %v1618, %v1410
        %v1627 = vpack.c.b16 %v1619, %v1411
        %v1628 = vpack.c.b16 %v1620, %v1412
        %v1629 = vpack.c.b16 %v1621, %v1413
        %v1630 = vpack.c.b16 %v1622, %v1414
        %v1631 = vpack.c.b16 %v1623, %v1415
        %v1633 = vshrl.u32 %v1624, 16
        %v1635 = vshll.u32 %v1624, 16
        %v1637 = vrot.slane %v1635, 1
        %v1638 = vor.u32 %v1633, %v1637
        %v1640 = vshrl.u32 %v1625, 16
        %v1642 = vshll.u32 %v1625, 16
        %v1644 = vrot.slane %v1642, 1
        %v1645 = vor.u32 %v1640, %v1644
        %v1647 = vshrl.u32 %v1626, 16
        %v1649 = vshll.u32 %v1626, 16
        %v1651 = vrot.slane %v1649, 1
        %v1652 = vor.u32 %v1647, %v1651
        %v1654 = vshrl.u32 %v1627, 16
        %v1656 = vshll.u32 %v1627, 16
        %v1658 = vrot.slane %v1656, 1
        %v1659 = vor.u32 %v1654, %v1658
        %v1661 = vshrl.u32 %v1628, 16
        %v1663 = vshll.u32 %v1628, 16
        %v1665 = vrot.slane %v1663, 1
        %v1666 = vor.u32 %v1661, %v1665
        %v1668 = vshrl.u32 %v1629, 16
        %v1670 = vshll.u32 %v1629, 16
        %v1672 = vrot.slane %v1670, 1
        %v1673 = vor.u32 %v1668, %v1672
        %v1675 = vshrl.u32 %v1630, 16
        %v1677 = vshll.u32 %v1630, 16
        %v1679 = vrot.slane %v1677, 1
        %v1680 = vor.u32 %v1675, %v1679
        %v1682 = vshrl.u32 %v1631, 16
        %v1684 = vshll.u32 %v1631, 16
        %v1686 = vrot.slane %v1684, 1
        %v1687 = vor.u32 %v1682, %v1686
        %1688 = vrot.lane.b32.xlu0 %v837, 12
        %v1689 = vpop.permute.xlu0 %1688
        %1690 = vrot.lane.b32.xlu0 %v844, 12
        %v1691 = vpop.permute.xlu0 %1690
        %1692 = vrot.lane.b32.xlu0 %v851, 12
        %v1693 = vpop.permute.xlu0 %1692
        %1694 = vrot.lane.b32.xlu0 %v858, 12
        %v1695 = vpop.permute.xlu0 %1694
        %1696 = vrot.lane.b32.xlu0 %v865, 12
        %v1697 = vpop.permute.xlu0 %1696
        %1698 = vrot.lane.b32.xlu0 %v872, 12
        %v1699 = vpop.permute.xlu0 %1698
        %1700 = vrot.lane.b32.xlu0 %v879, 12
        %v1701 = vpop.permute.xlu0 %1700
        %1702 = vrot.lane.b32.xlu0 %v1638, 12
        %v1703 = vpop.permute.xlu0 %1702
        %1704 = vrot.lane.b32.xlu0 %v893, 12
        %v1705 = vpop.permute.xlu0 %1704
        %1706 = vrot.lane.b32.xlu0 %v900, 12
        %v1707 = vpop.permute.xlu0 %1706
        %1708 = vrot.lane.b32.xlu0 %v907, 12
        %v1709 = vpop.permute.xlu0 %1708
        %1710 = vrot.lane.b32.xlu0 %v914, 12
        %v1711 = vpop.permute.xlu0 %1710
        %1712 = vrot.lane.b32.xlu0 %v921, 12
        %v1713 = vpop.permute.xlu0 %1712
        %1714 = vrot.lane.b32.xlu0 %v928, 12
        %v1715 = vpop.permute.xlu0 %1714
        %1716 = vrot.lane.b32.xlu0 %v935, 12
        %v1717 = vpop.permute.xlu0 %1716
        %1718 = vrot.lane.b32.xlu0 %v1645, 12
        %v1719 = vpop.permute.xlu0 %1718
        %1720 = vrot.lane.b32.xlu0 %v949, 12
        %v1721 = vpop.permute.xlu0 %1720
        %1722 = vrot.lane.b32.xlu0 %v956, 12
        %v1723 = vpop.permute.xlu0 %1722
        %1724 = vrot.lane.b32.xlu0 %v963, 12
        %v1725 = vpop.permute.xlu0 %1724
        %1726 = vrot.lane.b32.xlu0 %v970, 12
        %v1727 = vpop.permute.xlu0 %1726
        %1728 = vrot.lane.b32.xlu0 %v977, 12
        %v1729 = vpop.permute.xlu0 %1728
        %1730 = vrot.lane.b32.xlu0 %v984, 12
        %v1731 = vpop.permute.xlu0 %1730
        %1732 = vrot.lane.b32.xlu0 %v991, 12
        %v1733 = vpop.permute.xlu0 %1732
        %1734 = vrot.lane.b32.xlu0 %v1652, 12
        %v1735 = vpop.permute.xlu0 %1734
        %1736 = vrot.lane.b32.xlu0 %v1005, 12
        %v1737 = vpop.permute.xlu0 %1736
        %1738 = vrot.lane.b32.xlu0 %v1012, 12
        %v1739 = vpop.permute.xlu0 %1738
        %1740 = vrot.lane.b32.xlu0 %v1019, 12
        %v1741 = vpop.permute.xlu0 %1740
        %1742 = vrot.lane.b32.xlu0 %v1026, 12
        %v1743 = vpop.permute.xlu0 %1742
        %1744 = vrot.lane.b32.xlu0 %v1033, 12
        %v1745 = vpop.permute.xlu0 %1744
        %1746 = vrot.lane.b32.xlu0 %v1040, 12
        %v1747 = vpop.permute.xlu0 %1746
        %1748 = vrot.lane.b32.xlu0 %v1047, 12
        %v1749 = vpop.permute.xlu0 %1748
        %1750 = vrot.lane.b32.xlu0 %v1659, 12
        %v1751 = vpop.permute.xlu0 %1750
        %1752 = vrot.lane.b32.xlu0 %v1061, 12
        %v1753 = vpop.permute.xlu0 %1752
        %1754 = vrot.lane.b32.xlu0 %v1068, 12
        %v1755 = vpop.permute.xlu0 %1754
        %1756 = vrot.lane.b32.xlu0 %v1075, 12
        %v1757 = vpop.permute.xlu0 %1756
        %1758 = vrot.lane.b32.xlu0 %v1082, 12
        %v1759 = vpop.permute.xlu0 %1758
        %1760 = vrot.lane.b32.xlu0 %v1089, 12
        %v1761 = vpop.permute.xlu0 %1760
        %1762 = vrot.lane.b32.xlu0 %v1096, 12
        %v1763 = vpop.permute.xlu0 %1762
        %1764 = vrot.lane.b32.xlu0 %v1103, 12
        %v1765 = vpop.permute.xlu0 %1764
        %1766 = vrot.lane.b32.xlu0 %v1666, 12
        %v1767 = vpop.permute.xlu0 %1766
        %1768 = vrot.lane.b32.xlu0 %v1117, 12
        %v1769 = vpop.permute.xlu0 %1768
        %1770 = vrot.lane.b32.xlu0 %v1124, 12
        %v1771 = vpop.permute.xlu0 %1770
        %1772 = vrot.lane.b32.xlu0 %v1131, 12
        %v1773 = vpop.permute.xlu0 %1772
        %1774 = vrot.lane.b32.xlu0 %v1138, 12
        %v1775 = vpop.permute.xlu0 %1774
        %1776 = vrot.lane.b32.xlu0 %v1145, 12
        %v1777 = vpop.permute.xlu0 %1776
        %1778 = vrot.lane.b32.xlu0 %v1152, 12
        %v1779 = vpop.permute.xlu0 %1778
        %1780 = vrot.lane.b32.xlu0 %v1159, 12
        %v1781 = vpop.permute.xlu0 %1780
        %1782 = vrot.lane.b32.xlu0 %v1673, 12
        %v1783 = vpop.permute.xlu0 %1782
        %1784 = vrot.lane.b32.xlu0 %v1173, 12
        %v1785 = vpop.permute.xlu0 %1784
        %1786 = vrot.lane.b32.xlu0 %v1180, 12
        %v1787 = vpop.permute.xlu0 %1786
        %1788 = vrot.lane.b32.xlu0 %v1187, 12
        %v1789 = vpop.permute.xlu0 %1788
        %1790 = vrot.lane.b32.xlu0 %v1194, 12
        %v1791 = vpop.permute.xlu0 %1790
        %1792 = vrot.lane.b32.xlu0 %v1201, 12
        %v1793 = vpop.permute.xlu0 %1792
        %1794 = vrot.lane.b32.xlu0 %v1208, 12
        %v1795 = vpop.permute.xlu0 %1794
        %1796 = vrot.lane.b32.xlu0 %v1215, 12
        %v1797 = vpop.permute.xlu0 %1796
        %1798 = vrot.lane.b32.xlu0 %v1680, 12
        %v1799 = vpop.permute.xlu0 %1798
        %1800 = vrot.lane.b32.xlu0 %v1229, 12
        %v1801 = vpop.permute.xlu0 %1800
        %1802 = vrot.lane.b32.xlu0 %v1236, 12
        %v1803 = vpop.permute.xlu0 %1802
        %1804 = vrot.lane.b32.xlu0 %v1243, 12
        %v1805 = vpop.permute.xlu0 %1804
        %1806 = vrot.lane.b32.xlu0 %v1250, 12
        %v1807 = vpop.permute.xlu0 %1806
        %1808 = vrot.lane.b32.xlu0 %v1257, 12
        %v1809 = vpop.permute.xlu0 %1808
        %1810 = vrot.lane.b32.xlu0 %v1264, 12
        %v1811 = vpop.permute.xlu0 %1810
        %1812 = vrot.lane.b32.xlu0 %v1271, 12
        %v1813 = vpop.permute.xlu0 %1812
        %1814 = vrot.lane.b32.xlu0 %v1687, 12
        %v1815 = vpop.permute.xlu0 %1814
        %v1824 = vunpack.c.l.b16 %v486
        %v1825 = vunpack.c.l.b16 %v488
        %v1826 = vunpack.c.l.b16 %v490
        %v1827 = vunpack.c.l.b16 %v492
        %v1828 = vunpack.c.l.b16 %v494
        %v1829 = vunpack.c.l.b16 %v496
        %v1830 = vunpack.c.l.b16 %v498
        %v1831 = vunpack.c.l.b16 %v500
        %v1832 = vpack.c.b16 %v648, %v648
        %v1833 = vpack.c.b16 %v664, %v664
        %v1834 = vpack.c.b16 %v680, %v680
        %v1835 = vpack.c.b16 %v696, %v696
        %v1836 = vpack.c.b16 %v712, %v712
        %v1837 = vpack.c.b16 %v728, %v728
        %v1838 = vpack.c.b16 %v744, %v744
        %v1839 = vpack.c.b16 %v1824, %v1824
        %v1840 = vpack.c.b16 %v1825, %v1825
        %v1841 = vpack.c.b16 %v1826, %v1826
        %v1842 = vpack.c.b16 %v1827, %v1827
        %v1843 = vpack.c.b16 %v1828, %v1828
        %v1844 = vpack.c.b16 %v1829, %v1829
        %v1845 = vpack.c.b16 %v1830, %v1830
        %v1846 = vpack.c.b16 %v1831, %v1831
        %1847 = vrot.lane.b32.xlu0 %v1832, 16
        %v1848 = vpop.permute.xlu0 %1847
        %1849 = vrot.lane.b32.xlu0 %v1424, 16
        %v1850 = vpop.permute.xlu0 %1849
        %1851 = vrot.lane.b32.xlu0 %v1425, 16
        %v1852 = vpop.permute.xlu0 %1851
        %1853 = vrot.lane.b32.xlu0 %v1426, 16
        %v1854 = vpop.permute.xlu0 %1853
        %1855 = vrot.lane.b32.xlu0 %v1427, 16
        %v1856 = vpop.permute.xlu0 %1855
        %1857 = vrot.lane.b32.xlu0 %v1428, 16
        %v1858 = vpop.permute.xlu0 %1857
        %1859 = vrot.lane.b32.xlu0 %v1429, 16
        %v1860 = vpop.permute.xlu0 %1859
        %1861 = vrot.lane.b32.xlu0 %v1430, 16
        %v1862 = vpop.permute.xlu0 %1861
        %1863 = vrot.lane.b32.xlu0 %v1833, 16
        %v1864 = vpop.permute.xlu0 %1863
        %1865 = vrot.lane.b32.xlu0 %v1432, 16
        %v1866 = vpop.permute.xlu0 %1865
        %1867 = vrot.lane.b32.xlu0 %v1433, 16
        %v1868 = vpop.permute.xlu0 %1867
        %1869 = vrot.lane.b32.xlu0 %v1434, 16
        %v1870 = vpop.permute.xlu0 %1869
        %1871 = vrot.lane.b32.xlu0 %v1435, 16
        %v1872 = vpop.permute.xlu0 %1871
        %1873 = vrot.lane.b32.xlu0 %v1436, 16
        %v1874 = vpop.permute.xlu0 %1873
        %1875 = vrot.lane.b32.xlu0 %v1437, 16
        %v1876 = vpop.permute.xlu0 %1875
        %1877 = vrot.lane.b32.xlu0 %v1438, 16
        %v1878 = vpop.permute.xlu0 %1877
        %1879 = vrot.lane.b32.xlu0 %v1834, 16
        %v1880 = vpop.permute.xlu0 %1879
        %1881 = vrot.lane.b32.xlu0 %v1440, 16
        %v1882 = vpop.permute.xlu0 %1881
        %1883 = vrot.lane.b32.xlu0 %v1441, 16
        %v1884 = vpop.permute.xlu0 %1883
        %1885 = vrot.lane.b32.xlu0 %v1442, 16
        %v1886 = vpop.permute.xlu0 %1885
        %1887 = vrot.lane.b32.xlu0 %v1443, 16
        %v1888 = vpop.permute.xlu0 %1887
        %1889 = vrot.lane.b32.xlu0 %v1444, 16
        %v1890 = vpop.permute.xlu0 %1889
        %1891 = vrot.lane.b32.xlu0 %v1445, 16
        %v1892 = vpop.permute.xlu0 %1891
        %1893 = vrot.lane.b32.xlu0 %v1446, 16
        %v1894 = vpop.permute.xlu0 %1893
        %1895 = vrot.lane.b32.xlu0 %v1835, 16
        %v1896 = vpop.permute.xlu0 %1895
        %1897 = vrot.lane.b32.xlu0 %v1448, 16
        %v1898 = vpop.permute.xlu0 %1897
        %1899 = vrot.lane.b32.xlu0 %v1449, 16
        %v1900 = vpop.permute.xlu0 %1899
        %1901 = vrot.lane.b32.xlu0 %v1450, 16
        %v1902 = vpop.permute.xlu0 %1901
        %1903 = vrot.lane.b32.xlu0 %v1451, 16
        %v1904 = vpop.permute.xlu0 %1903
        %1905 = vrot.lane.b32.xlu0 %v1452, 16
        %v1906 = vpop.permute.xlu0 %1905
        %1907 = vrot.lane.b32.xlu0 %v1453, 16
        %v1908 = vpop.permute.xlu0 %1907
        %1909 = vrot.lane.b32.xlu0 %v1454, 16
        %v1910 = vpop.permute.xlu0 %1909
        %1911 = vrot.lane.b32.xlu0 %v1836, 16
        %v1912 = vpop.permute.xlu0 %1911
        %1913 = vrot.lane.b32.xlu0 %v1456, 16
        %v1914 = vpop.permute.xlu0 %1913
        %1915 = vrot.lane.b32.xlu0 %v1457, 16
        %v1916 = vpop.permute.xlu0 %1915
        %1917 = vrot.lane.b32.xlu0 %v1458, 16
        %v1918 = vpop.permute.xlu0 %1917
        %1919 = vrot.lane.b32.xlu0 %v1459, 16
        %v1920 = vpop.permute.xlu0 %1919
        %1921 = vrot.lane.b32.xlu0 %v1460, 16
        %v1922 = vpop.permute.xlu0 %1921
        %1923 = vrot.lane.b32.xlu0 %v1461, 16
        %v1924 = vpop.permute.xlu0 %1923
        %1925 = vrot.lane.b32.xlu0 %v1462, 16
        %v1926 = vpop.permute.xlu0 %1925
        %1927 = vrot.lane.b32.xlu0 %v1837, 16
        %v1928 = vpop.permute.xlu0 %1927
        %1929 = vrot.lane.b32.xlu0 %v1464, 16
        %v1930 = vpop.permute.xlu0 %1929
        %1931 = vrot.lane.b32.xlu0 %v1465, 16
        %v1932 = vpop.permute.xlu0 %1931
        %1933 = vrot.lane.b32.xlu0 %v1466, 16
        %v1934 = vpop.permute.xlu0 %1933
        %1935 = vrot.lane.b32.xlu0 %v1467, 16
        %v1936 = vpop.permute.xlu0 %1935
        %1937 = vrot.lane.b32.xlu0 %v1468, 16
        %v1938 = vpop.permute.xlu0 %1937
        %1939 = vrot.lane.b32.xlu0 %v1469, 16
        %v1940 = vpop.permute.xlu0 %1939
        %1941 = vrot.lane.b32.xlu0 %v1470, 16
        %v1942 = vpop.permute.xlu0 %1941
        %1943 = vrot.lane.b32.xlu0 %v1838, 16
        %v1944 = vpop.permute.xlu0 %1943
        %1945 = vrot.lane.b32.xlu0 %v1472, 16
        %v1946 = vpop.permute.xlu0 %1945
        %1947 = vrot.lane.b32.xlu0 %v1473, 16
        %v1948 = vpop.permute.xlu0 %1947
        %1949 = vrot.lane.b32.xlu0 %v1474, 16
        %v1950 = vpop.permute.xlu0 %1949
        %1951 = vrot.lane.b32.xlu0 %v1475, 16
        %v1952 = vpop.permute.xlu0 %1951
        %1953 = vrot.lane.b32.xlu0 %v1476, 16
        %v1954 = vpop.permute.xlu0 %1953
        %1955 = vrot.lane.b32.xlu0 %v1477, 16
        %v1956 = vpop.permute.xlu0 %1955
        %1957 = vrot.lane.b32.xlu0 %v1478, 16
        %v1958 = vpop.permute.xlu0 %1957
        %1959 = vrot.lane.b32.xlu0 %v1839, 16
        %v1960 = vpop.permute.xlu0 %1959
        %1961 = vrot.lane.b32.xlu0 %v1840, 16
        %v1962 = vpop.permute.xlu0 %1961
        %1963 = vrot.lane.b32.xlu0 %v1841, 16
        %v1964 = vpop.permute.xlu0 %1963
        %1965 = vrot.lane.b32.xlu0 %v1842, 16
        %v1966 = vpop.permute.xlu0 %1965
        %1967 = vrot.lane.b32.xlu0 %v1843, 16
        %v1968 = vpop.permute.xlu0 %1967
        %1969 = vrot.lane.b32.xlu0 %v1844, 16
        %v1970 = vpop.permute.xlu0 %1969
        %1971 = vrot.lane.b32.xlu0 %v1845, 16
        %v1972 = vpop.permute.xlu0 %1971
        %1973 = vrot.lane.b32.xlu0 %v1846, 16
        %v1974 = vpop.permute.xlu0 %1973
        %v1983 = vunpack.c.l.b16 %v487
        %v1984 = vunpack.c.l.b16 %v489
        %v1985 = vunpack.c.l.b16 %v491
        %v1986 = vunpack.c.l.b16 %v493
        %v1987 = vunpack.c.l.b16 %v495
        %v1988 = vunpack.c.l.b16 %v497
        %v1989 = vunpack.c.l.b16 %v499
        %v1990 = vunpack.c.l.b16 %v501
        %v1991 = vpack.c.b16 %v1983, %v1824
        %v1992 = vpack.c.b16 %v1984, %v1825
        %v1993 = vpack.c.b16 %v1985, %v1826
        %v1994 = vpack.c.b16 %v1986, %v1827
        %v1995 = vpack.c.b16 %v1987, %v1828
        %v1996 = vpack.c.b16 %v1988, %v1829
        %v1997 = vpack.c.b16 %v1989, %v1830
        %v1998 = vpack.c.b16 %v1990, %v1831
        %v2000 = vshrl.u32 %v1991, 16
        %v2002 = vshll.u32 %v1991, 16
        %v2004 = vrot.slane %v2002, 1
        %v2005 = vor.u32 %v2000, %v2004
        %v2007 = vshrl.u32 %v1992, 16
        %v2009 = vshll.u32 %v1992, 16
        %v2011 = vrot.slane %v2009, 1
        %v2012 = vor.u32 %v2007, %v2011
        %v2014 = vshrl.u32 %v1993, 16
        %v2016 = vshll.u32 %v1993, 16
        %v2018 = vrot.slane %v2016, 1
        %v2019 = vor.u32 %v2014, %v2018
        %v2021 = vshrl.u32 %v1994, 16
        %v2023 = vshll.u32 %v1994, 16
        %v2025 = vrot.slane %v2023, 1
        %v2026 = vor.u32 %v2021, %v2025
        %v2028 = vshrl.u32 %v1995, 16
        %v2030 = vshll.u32 %v1995, 16
        %v2032 = vrot.slane %v2030, 1
        %v2033 = vor.u32 %v2028, %v2032
        %v2035 = vshrl.u32 %v1996, 16
        %v2037 = vshll.u32 %v1996, 16
        %v2039 = vrot.slane %v2037, 1
        %v2040 = vor.u32 %v2035, %v2039
        %v2042 = vshrl.u32 %v1997, 16
        %v2044 = vshll.u32 %v1997, 16
        %v2046 = vrot.slane %v2044, 1
        %v2047 = vor.u32 %v2042, %v2046
        %v2049 = vshrl.u32 %v1998, 16
        %v2051 = vshll.u32 %v1998, 16
        %v2053 = vrot.slane %v2051, 1
        %v2054 = vor.u32 %v2049, %v2053
        %2055 = vrot.lane.b32.xlu0 %v886, 20
        %v2056 = vpop.permute.xlu0 %2055
        %2057 = vrot.lane.b32.xlu0 %v893, 20
        %v2058 = vpop.permute.xlu0 %2057
        %2059 = vrot.lane.b32.xlu0 %v900, 20
        %v2060 = vpop.permute.xlu0 %2059
        %2061 = vrot.lane.b32.xlu0 %v907, 20
        %v2062 = vpop.permute.xlu0 %2061
        %2063 = vrot.lane.b32.xlu0 %v914, 20
        %v2064 = vpop.permute.xlu0 %2063
        %2065 = vrot.lane.b32.xlu0 %v921, 20
        %v2066 = vpop.permute.xlu0 %2065
        %2067 = vrot.lane.b32.xlu0 %v928, 20
        %v2068 = vpop.permute.xlu0 %2067
        %2069 = vrot.lane.b32.xlu0 %v935, 20
        %v2070 = vpop.permute.xlu0 %2069
        %2071 = vrot.lane.b32.xlu0 %v942, 20
        %v2072 = vpop.permute.xlu0 %2071
        %2073 = vrot.lane.b32.xlu0 %v949, 20
        %v2074 = vpop.permute.xlu0 %2073
        %2075 = vrot.lane.b32.xlu0 %v956, 20
        %v2076 = vpop.permute.xlu0 %2075
        %2077 = vrot.lane.b32.xlu0 %v963, 20
        %v2078 = vpop.permute.xlu0 %2077
        %2079 = vrot.lane.b32.xlu0 %v970, 20
        %v2080 = vpop.permute.xlu0 %2079
        %2081 = vrot.lane.b32.xlu0 %v977, 20
        %v2082 = vpop.permute.xlu0 %2081
        %2083 = vrot.lane.b32.xlu0 %v984, 20
        %v2084 = vpop.permute.xlu0 %2083
        %2085 = vrot.lane.b32.xlu0 %v991, 20
        %v2086 = vpop.permute.xlu0 %2085
        %2087 = vrot.lane.b32.xlu0 %v998, 20
        %v2088 = vpop.permute.xlu0 %2087
        %2089 = vrot.lane.b32.xlu0 %v1005, 20
        %v2090 = vpop.permute.xlu0 %2089
        %2091 = vrot.lane.b32.xlu0 %v1012, 20
        %v2092 = vpop.permute.xlu0 %2091
        %2093 = vrot.lane.b32.xlu0 %v1019, 20
        %v2094 = vpop.permute.xlu0 %2093
        %2095 = vrot.lane.b32.xlu0 %v1026, 20
        %v2096 = vpop.permute.xlu0 %2095
        %2097 = vrot.lane.b32.xlu0 %v1033, 20
        %v2098 = vpop.permute.xlu0 %2097
        %2099 = vrot.lane.b32.xlu0 %v1040, 20
        %v2100 = vpop.permute.xlu0 %2099
        %2101 = vrot.lane.b32.xlu0 %v1047, 20
        %v2102 = vpop.permute.xlu0 %2101
        %2103 = vrot.lane.b32.xlu0 %v1054, 20
        %v2104 = vpop.permute.xlu0 %2103
        %2105 = vrot.lane.b32.xlu0 %v1061, 20
        %v2106 = vpop.permute.xlu0 %2105
        %2107 = vrot.lane.b32.xlu0 %v1068, 20
        %v2108 = vpop.permute.xlu0 %2107
        %2109 = vrot.lane.b32.xlu0 %v1075, 20
        %v2110 = vpop.permute.xlu0 %2109
        %2111 = vrot.lane.b32.xlu0 %v1082, 20
        %v2112 = vpop.permute.xlu0 %2111
        %2113 = vrot.lane.b32.xlu0 %v1089, 20
        %v2114 = vpop.permute.xlu0 %2113
        %2115 = vrot.lane.b32.xlu0 %v1096, 20
        %v2116 = vpop.permute.xlu0 %2115
        %2117 = vrot.lane.b32.xlu0 %v1103, 20
        %v2118 = vpop.permute.xlu0 %2117
        %2119 = vrot.lane.b32.xlu0 %v1110, 20
        %v2120 = vpop.permute.xlu0 %2119
        %2121 = vrot.lane.b32.xlu0 %v1117, 20
        %v2122 = vpop.permute.xlu0 %2121
        %2123 = vrot.lane.b32.xlu0 %v1124, 20
        %v2124 = vpop.permute.xlu0 %2123
        %2125 = vrot.lane.b32.xlu0 %v1131, 20
        %v2126 = vpop.permute.xlu0 %2125
        %2127 = vrot.lane.b32.xlu0 %v1138, 20
        %v2128 = vpop.permute.xlu0 %2127
        %2129 = vrot.lane.b32.xlu0 %v1145, 20
        %v2130 = vpop.permute.xlu0 %2129
        %2131 = vrot.lane.b32.xlu0 %v1152, 20
        %v2132 = vpop.permute.xlu0 %2131
        %2133 = vrot.lane.b32.xlu0 %v1159, 20
        %v2134 = vpop.permute.xlu0 %2133
        %2135 = vrot.lane.b32.xlu0 %v1166, 20
        %v2136 = vpop.permute.xlu0 %2135
        %2137 = vrot.lane.b32.xlu0 %v1173, 20
        %v2138 = vpop.permute.xlu0 %2137
        %2139 = vrot.lane.b32.xlu0 %v1180, 20
        %v2140 = vpop.permute.xlu0 %2139
        %2141 = vrot.lane.b32.xlu0 %v1187, 20
        %v2142 = vpop.permute.xlu0 %2141
        %2143 = vrot.lane.b32.xlu0 %v1194, 20
        %v2144 = vpop.permute.xlu0 %2143
        %2145 = vrot.lane.b32.xlu0 %v1201, 20
        %v2146 = vpop.permute.xlu0 %2145
        %2147 = vrot.lane.b32.xlu0 %v1208, 20
        %v2148 = vpop.permute.xlu0 %2147
        %2149 = vrot.lane.b32.xlu0 %v1215, 20
        %v2150 = vpop.permute.xlu0 %2149
        %2151 = vrot.lane.b32.xlu0 %v1222, 20
        %v2152 = vpop.permute.xlu0 %2151
        %2153 = vrot.lane.b32.xlu0 %v1229, 20
        %v2154 = vpop.permute.xlu0 %2153
        %2155 = vrot.lane.b32.xlu0 %v1236, 20
        %v2156 = vpop.permute.xlu0 %2155
        %2157 = vrot.lane.b32.xlu0 %v1243, 20
        %v2158 = vpop.permute.xlu0 %2157
        %2159 = vrot.lane.b32.xlu0 %v1250, 20
        %v2160 = vpop.permute.xlu0 %2159
        %2161 = vrot.lane.b32.xlu0 %v1257, 20
        %v2162 = vpop.permute.xlu0 %2161
        %2163 = vrot.lane.b32.xlu0 %v1264, 20
        %v2164 = vpop.permute.xlu0 %2163
        %2165 = vrot.lane.b32.xlu0 %v1271, 20
        %v2166 = vpop.permute.xlu0 %2165
        %2167 = vrot.lane.b32.xlu0 %v2005, 20
        %v2168 = vpop.permute.xlu0 %2167
        %2169 = vrot.lane.b32.xlu0 %v2012, 20
        %v2170 = vpop.permute.xlu0 %2169
        %2171 = vrot.lane.b32.xlu0 %v2019, 20
        %v2172 = vpop.permute.xlu0 %2171
        %2173 = vrot.lane.b32.xlu0 %v2026, 20
        %v2174 = vpop.permute.xlu0 %2173
        %2175 = vrot.lane.b32.xlu0 %v2033, 20
        %v2176 = vpop.permute.xlu0 %2175
        %2177 = vrot.lane.b32.xlu0 %v2040, 20
        %v2178 = vpop.permute.xlu0 %2177
        %2179 = vrot.lane.b32.xlu0 %v2047, 20
        %v2180 = vpop.permute.xlu0 %2179
        %2181 = vrot.lane.b32.xlu0 %v2054, 20
        %v2182 = vpop.permute.xlu0 %2181
        %v2184 = vunpack.c.l.b16 %v502
        %v2185 = vpack.c.b16 %v2184, %v2184
        %2186 = vrot.lane.b32.xlu0 %v1424, 24
        %v2187 = vpop.permute.xlu0 %2186
        %2188 = vrot.lane.b32.xlu0 %v1425, 24
        %v2189 = vpop.permute.xlu0 %2188
        %2190 = vrot.lane.b32.xlu0 %v1426, 24
        %v2191 = vpop.permute.xlu0 %2190
        %2192 = vrot.lane.b32.xlu0 %v1427, 24
        %v2193 = vpop.permute.xlu0 %2192
        %2194 = vrot.lane.b32.xlu0 %v1428, 24
        %v2195 = vpop.permute.xlu0 %2194
        %2196 = vrot.lane.b32.xlu0 %v1429, 24
        %v2197 = vpop.permute.xlu0 %2196
        %2198 = vrot.lane.b32.xlu0 %v1430, 24
        %v2199 = vpop.permute.xlu0 %2198
        %2200 = vrot.lane.b32.xlu0 %v1431, 24
        %v2201 = vpop.permute.xlu0 %2200
        %2202 = vrot.lane.b32.xlu0 %v1432, 24
        %v2203 = vpop.permute.xlu0 %2202
        %2204 = vrot.lane.b32.xlu0 %v1433, 24
        %v2205 = vpop.permute.xlu0 %2204
        %2206 = vrot.lane.b32.xlu0 %v1434, 24
        %v2207 = vpop.permute.xlu0 %2206
        %2208 = vrot.lane.b32.xlu0 %v1435, 24
        %v2209 = vpop.permute.xlu0 %2208
        %2210 = vrot.lane.b32.xlu0 %v1436, 24
        %v2211 = vpop.permute.xlu0 %2210
        %2212 = vrot.lane.b32.xlu0 %v1437, 24
        %v2213 = vpop.permute.xlu0 %2212
        %2214 = vrot.lane.b32.xlu0 %v1438, 24
        %v2215 = vpop.permute.xlu0 %2214
        %2216 = vrot.lane.b32.xlu0 %v1439, 24
        %v2217 = vpop.permute.xlu0 %2216
        %2218 = vrot.lane.b32.xlu0 %v1440, 24
        %v2219 = vpop.permute.xlu0 %2218
        %2220 = vrot.lane.b32.xlu0 %v1441, 24
        %v2221 = vpop.permute.xlu0 %2220
        %2222 = vrot.lane.b32.xlu0 %v1442, 24
        %v2223 = vpop.permute.xlu0 %2222
        %2224 = vrot.lane.b32.xlu0 %v1443, 24
        %v2225 = vpop.permute.xlu0 %2224
        %2226 = vrot.lane.b32.xlu0 %v1444, 24
        %v2227 = vpop.permute.xlu0 %2226
        %2228 = vrot.lane.b32.xlu0 %v1445, 24
        %v2229 = vpop.permute.xlu0 %2228
        %2230 = vrot.lane.b32.xlu0 %v1446, 24
        %v2231 = vpop.permute.xlu0 %2230
        %2232 = vrot.lane.b32.xlu0 %v1447, 24
        %v2233 = vpop.permute.xlu0 %2232
        %2234 = vrot.lane.b32.xlu0 %v1448, 24
        %v2235 = vpop.permute.xlu0 %2234
        %2236 = vrot.lane.b32.xlu0 %v1449, 24
        %v2237 = vpop.permute.xlu0 %2236
        %2238 = vrot.lane.b32.xlu0 %v1450, 24
        %v2239 = vpop.permute.xlu0 %2238
        %2240 = vrot.lane.b32.xlu0 %v1451, 24
        %v2241 = vpop.permute.xlu0 %2240
        %2242 = vrot.lane.b32.xlu0 %v1452, 24
        %v2243 = vpop.permute.xlu0 %2242
        %2244 = vrot.lane.b32.xlu0 %v1453, 24
        %v2245 = vpop.permute.xlu0 %2244
        %2246 = vrot.lane.b32.xlu0 %v1454, 24
        %v2247 = vpop.permute.xlu0 %2246
        %2248 = vrot.lane.b32.xlu0 %v1455, 24
        %v2249 = vpop.permute.xlu0 %2248
        %2250 = vrot.lane.b32.xlu0 %v1456, 24
        %v2251 = vpop.permute.xlu0 %2250
        %2252 = vrot.lane.b32.xlu0 %v1457, 24
        %v2253 = vpop.permute.xlu0 %2252
        %2254 = vrot.lane.b32.xlu0 %v1458, 24
        %v2255 = vpop.permute.xlu0 %2254
        %2256 = vrot.lane.b32.xlu0 %v1459, 24
        %v2257 = vpop.permute.xlu0 %2256
        %2258 = vrot.lane.b32.xlu0 %v1460, 24
        %v2259 = vpop.permute.xlu0 %2258
        %2260 = vrot.lane.b32.xlu0 %v1461, 24
        %v2261 = vpop.permute.xlu0 %2260
        %2262 = vrot.lane.b32.xlu0 %v1462, 24
        %v2263 = vpop.permute.xlu0 %2262
        %2264 = vrot.lane.b32.xlu0 %v1463, 24
        %v2265 = vpop.permute.xlu0 %2264
        %2266 = vrot.lane.b32.xlu0 %v1464, 24
        %v2267 = vpop.permute.xlu0 %2266
        %2268 = vrot.lane.b32.xlu0 %v1465, 24
        %v2269 = vpop.permute.xlu0 %2268
        %2270 = vrot.lane.b32.xlu0 %v1466, 24
        %v2271 = vpop.permute.xlu0 %2270
        %2272 = vrot.lane.b32.xlu0 %v1467, 24
        %v2273 = vpop.permute.xlu0 %2272
        %2274 = vrot.lane.b32.xlu0 %v1468, 24
        %v2275 = vpop.permute.xlu0 %2274
        %2276 = vrot.lane.b32.xlu0 %v1469, 24
        %v2277 = vpop.permute.xlu0 %2276
        %2278 = vrot.lane.b32.xlu0 %v1470, 24
        %v2279 = vpop.permute.xlu0 %2278
        %2280 = vrot.lane.b32.xlu0 %v1471, 24
        %v2281 = vpop.permute.xlu0 %2280
        %2282 = vrot.lane.b32.xlu0 %v1472, 24
        %v2283 = vpop.permute.xlu0 %2282
        %2284 = vrot.lane.b32.xlu0 %v1473, 24
        %v2285 = vpop.permute.xlu0 %2284
        %2286 = vrot.lane.b32.xlu0 %v1474, 24
        %v2287 = vpop.permute.xlu0 %2286
        %2288 = vrot.lane.b32.xlu0 %v1475, 24
        %v2289 = vpop.permute.xlu0 %2288
        %2290 = vrot.lane.b32.xlu0 %v1476, 24
        %v2291 = vpop.permute.xlu0 %2290
        %2292 = vrot.lane.b32.xlu0 %v1477, 24
        %v2293 = vpop.permute.xlu0 %2292
        %2294 = vrot.lane.b32.xlu0 %v1478, 24
        %v2295 = vpop.permute.xlu0 %2294
        %2296 = vrot.lane.b32.xlu0 %v1479, 24
        %v2297 = vpop.permute.xlu0 %2296
        %2298 = vrot.lane.b32.xlu0 %v1840, 24
        %v2299 = vpop.permute.xlu0 %2298
        %2300 = vrot.lane.b32.xlu0 %v1841, 24
        %v2301 = vpop.permute.xlu0 %2300
        %2302 = vrot.lane.b32.xlu0 %v1842, 24
        %v2303 = vpop.permute.xlu0 %2302
        %2304 = vrot.lane.b32.xlu0 %v1843, 24
        %v2305 = vpop.permute.xlu0 %2304
        %2306 = vrot.lane.b32.xlu0 %v1844, 24
        %v2307 = vpop.permute.xlu0 %2306
        %2308 = vrot.lane.b32.xlu0 %v1845, 24
        %v2309 = vpop.permute.xlu0 %2308
        %2310 = vrot.lane.b32.xlu0 %v1846, 24
        %v2311 = vpop.permute.xlu0 %2310
        %2312 = vrot.lane.b32.xlu0 %v2185, 24
        %v2313 = vpop.permute.xlu0 %2312
        %v2315 = vunpack.c.l.b16 %v503
        %v2316 = vpack.c.b16 %v2315, %v2184
        %v2318 = vshrl.u32 %v2316, 16
        %v2320 = vshll.u32 %v2316, 16
        %v2322 = vrot.slane %v2320, 1
        %v2323 = vor.u32 %v2318, %v2322
        %2324 = vrot.lane.b32.xlu0 %v893, 28
        %v2325 = vpop.permute.xlu0 %2324
        %2326 = vrot.lane.b32.xlu0 %v900, 28
        %v2327 = vpop.permute.xlu0 %2326
        %2328 = vrot.lane.b32.xlu0 %v907, 28
        %v2329 = vpop.permute.xlu0 %2328
        %2330 = vrot.lane.b32.xlu0 %v914, 28
        %v2331 = vpop.permute.xlu0 %2330
        %2332 = vrot.lane.b32.xlu0 %v921, 28
        %v2333 = vpop.permute.xlu0 %2332
        %2334 = vrot.lane.b32.xlu0 %v928, 28
        %v2335 = vpop.permute.xlu0 %2334
        %2336 = vrot.lane.b32.xlu0 %v935, 28
        %v2337 = vpop.permute.xlu0 %2336
        %2338 = vrot.lane.b32.xlu0 %v1645, 28
        %v2339 = vpop.permute.xlu0 %2338
        %2340 = vrot.lane.b32.xlu0 %v949, 28
        %v2341 = vpop.permute.xlu0 %2340
        %2342 = vrot.lane.b32.xlu0 %v956, 28
        %v2343 = vpop.permute.xlu0 %2342
        %2344 = vrot.lane.b32.xlu0 %v963, 28
        %v2345 = vpop.permute.xlu0 %2344
        %2346 = vrot.lane.b32.xlu0 %v970, 28
        %v2347 = vpop.permute.xlu0 %2346
        %2348 = vrot.lane.b32.xlu0 %v977, 28
        %v2349 = vpop.permute.xlu0 %2348
        %2350 = vrot.lane.b32.xlu0 %v984, 28
        %v2351 = vpop.permute.xlu0 %2350
        %2352 = vrot.lane.b32.xlu0 %v991, 28
        %v2353 = vpop.permute.xlu0 %2352
        %2354 = vrot.lane.b32.xlu0 %v1652, 28
        %v2355 = vpop.permute.xlu0 %2354
        %2356 = vrot.lane.b32.xlu0 %v1005, 28
        %v2357 = vpop.permute.xlu0 %2356
        %2358 = vrot.lane.b32.xlu0 %v1012, 28
        %v2359 = vpop.permute.xlu0 %2358
        %2360 = vrot.lane.b32.xlu0 %v1019, 28
        %v2361 = vpop.permute.xlu0 %2360
        %2362 = vrot.lane.b32.xlu0 %v1026, 28
        %v2363 = vpop.permute.xlu0 %2362
        %2364 = vrot.lane.b32.xlu0 %v1033, 28
        %v2365 = vpop.permute.xlu0 %2364
        %2366 = vrot.lane.b32.xlu0 %v1040, 28
        %v2367 = vpop.permute.xlu0 %2366
        %2368 = vrot.lane.b32.xlu0 %v1047, 28
        %v2369 = vpop.permute.xlu0 %2368
        %2370 = vrot.lane.b32.xlu0 %v1659, 28
        %v2371 = vpop.permute.xlu0 %2370
        %2372 = vrot.lane.b32.xlu0 %v1061, 28
        %v2373 = vpop.permute.xlu0 %2372
        %2374 = vrot.lane.b32.xlu0 %v1068, 28
        %v2375 = vpop.permute.xlu0 %2374
        %2376 = vrot.lane.b32.xlu0 %v1075, 28
        %v2377 = vpop.permute.xlu0 %2376
        %2378 = vrot.lane.b32.xlu0 %v1082, 28
        %v2379 = vpop.permute.xlu0 %2378
        %2380 = vrot.lane.b32.xlu0 %v1089, 28
        %v2381 = vpop.permute.xlu0 %2380
        %2382 = vrot.lane.b32.xlu0 %v1096, 28
        %v2383 = vpop.permute.xlu0 %2382
        %2384 = vrot.lane.b32.xlu0 %v1103, 28
        %v2385 = vpop.permute.xlu0 %2384
        %2386 = vrot.lane.b32.xlu0 %v1666, 28
        %v2387 = vpop.permute.xlu0 %2386
        %2388 = vrot.lane.b32.xlu0 %v1117, 28
        %v2389 = vpop.permute.xlu0 %2388
        %2390 = vrot.lane.b32.xlu0 %v1124, 28
        %v2391 = vpop.permute.xlu0 %2390
        %2392 = vrot.lane.b32.xlu0 %v1131, 28
        %v2393 = vpop.permute.xlu0 %2392
        %2394 = vrot.lane.b32.xlu0 %v1138, 28
        %v2395 = vpop.permute.xlu0 %2394
        %2396 = vrot.lane.b32.xlu0 %v1145, 28
        %v2397 = vpop.permute.xlu0 %2396
        %2398 = vrot.lane.b32.xlu0 %v1152, 28
        %v2399 = vpop.permute.xlu0 %2398
        %2400 = vrot.lane.b32.xlu0 %v1159, 28
        %v2401 = vpop.permute.xlu0 %2400
        %2402 = vrot.lane.b32.xlu0 %v1673, 28
        %v2403 = vpop.permute.xlu0 %2402
        %2404 = vrot.lane.b32.xlu0 %v1173, 28
        %v2405 = vpop.permute.xlu0 %2404
        %2406 = vrot.lane.b32.xlu0 %v1180, 28
        %v2407 = vpop.permute.xlu0 %2406
        %2408 = vrot.lane.b32.xlu0 %v1187, 28
        %v2409 = vpop.permute.xlu0 %2408
        %2410 = vrot.lane.b32.xlu0 %v1194, 28
        %v2411 = vpop.permute.xlu0 %2410
        %2412 = vrot.lane.b32.xlu0 %v1201, 28
        %v2413 = vpop.permute.xlu0 %2412
        %2414 = vrot.lane.b32.xlu0 %v1208, 28
        %v2415 = vpop.permute.xlu0 %2414
        %2416 = vrot.lane.b32.xlu0 %v1215, 28
        %v2417 = vpop.permute.xlu0 %2416
        %2418 = vrot.lane.b32.xlu0 %v1680, 28
        %v2419 = vpop.permute.xlu0 %2418
        %2420 = vrot.lane.b32.xlu0 %v1229, 28
        %v2421 = vpop.permute.xlu0 %2420
        %2422 = vrot.lane.b32.xlu0 %v1236, 28
        %v2423 = vpop.permute.xlu0 %2422
        %2424 = vrot.lane.b32.xlu0 %v1243, 28
        %v2425 = vpop.permute.xlu0 %2424
        %2426 = vrot.lane.b32.xlu0 %v1250, 28
        %v2427 = vpop.permute.xlu0 %2426
        %2428 = vrot.lane.b32.xlu0 %v1257, 28
        %v2429 = vpop.permute.xlu0 %2428
        %2430 = vrot.lane.b32.xlu0 %v1264, 28
        %v2431 = vpop.permute.xlu0 %2430
        %2432 = vrot.lane.b32.xlu0 %v1271, 28
        %v2433 = vpop.permute.xlu0 %2432
        %2434 = vrot.lane.b32.xlu0 %v1687, 28
        %v2435 = vpop.permute.xlu0 %2434
        %2436 = vrot.lane.b32.xlu0 %v2012, 28
        %v2437 = vpop.permute.xlu0 %2436
        %2438 = vrot.lane.b32.xlu0 %v2019, 28
        %v2439 = vpop.permute.xlu0 %2438
        %2440 = vrot.lane.b32.xlu0 %v2026, 28
        %v2441 = vpop.permute.xlu0 %2440
        %2442 = vrot.lane.b32.xlu0 %v2033, 28
        %v2443 = vpop.permute.xlu0 %2442
        %2444 = vrot.lane.b32.xlu0 %v2040, 28
        %v2445 = vpop.permute.xlu0 %2444
        %2446 = vrot.lane.b32.xlu0 %v2047, 28
        %v2447 = vpop.permute.xlu0 %2446
        %2448 = vrot.lane.b32.xlu0 %v2054, 28
        %v2449 = vpop.permute.xlu0 %2448
        %2450 = vrot.lane.b32.xlu0 %v2323, 28
        %v2451 = vpop.permute.xlu0 %2450
        %vm2452 = vcmask 31744
        %v2455 = vsel %vm2452, %v342, %v1273
        %v2458 = vsel %vm2452, %v344, %v1275
        %v2461 = vsel %vm2452, %v346, %v1277
        %v2464 = vsel %vm2452, %v348, %v1279
        %v2467 = vsel %vm2452, %v350, %v1281
        %v2470 = vsel %vm2452, %v352, %v1283
        %v2473 = vsel %vm2452, %v354, %v1285
        %v2476 = vsel %vm2452, %v356, %v1287
        %v2479 = vsel %vm2452, %v360, %v1289
        %v2482 = vsel %vm2452, %v362, %v1291
        %v2485 = vsel %vm2452, %v364, %v1293
        %v2488 = vsel %vm2452, %v366, %v1295
        %v2491 = vsel %vm2452, %v368, %v1297
        %v2494 = vsel %vm2452, %v370, %v1299
        %v2497 = vsel %vm2452, %v372, %v1301
        %v2500 = vsel %vm2452, %v374, %v1303
        %v2503 = vsel %vm2452, %v378, %v1305
        %v2506 = vsel %vm2452, %v380, %v1307
        %v2509 = vsel %vm2452, %v382, %v1309
        %v2512 = vsel %vm2452, %v384, %v1311
        %v2515 = vsel %vm2452, %v386, %v1313
        %v2518 = vsel %vm2452, %v388, %v1315
        %v2521 = vsel %vm2452, %v390, %v1317
        %v2524 = vsel %vm2452, %v392, %v1319
        %v2527 = vsel %vm2452, %v396, %v1321
        %v2530 = vsel %vm2452, %v398, %v1323
        %v2533 = vsel %vm2452, %v400, %v1325
        %v2536 = vsel %vm2452, %v402, %v1327
        %v2539 = vsel %vm2452, %v404, %v1329
        %v2542 = vsel %vm2452, %v406, %v1331
        %v2545 = vsel %vm2452, %v408, %v1333
        %v2548 = vsel %vm2452, %v410, %v1335
        %v2551 = vsel %vm2452, %v414, %v1337
        %v2554 = vsel %vm2452, %v416, %v1339
        %v2557 = vsel %vm2452, %v418, %v1341
        %v2560 = vsel %vm2452, %v420, %v1343
        %v2563 = vsel %vm2452, %v422, %v1345
        %v2566 = vsel %vm2452, %v424, %v1347
        %v2569 = vsel %vm2452, %v426, %v1349
        %v2572 = vsel %vm2452, %v428, %v1351
        %v2575 = vsel %vm2452, %v432, %v1353
        %v2578 = vsel %vm2452, %v434, %v1355
        %v2581 = vsel %vm2452, %v436, %v1357
        %v2584 = vsel %vm2452, %v438, %v1359
        %v2587 = vsel %vm2452, %v440, %v1361
        %v2590 = vsel %vm2452, %v442, %v1363
        %v2593 = vsel %vm2452, %v444, %v1365
        %v2596 = vsel %vm2452, %v446, %v1367
        %v2599 = vsel %vm2452, %v450, %v1369
        %v2602 = vsel %vm2452, %v452, %v1371
        %v2605 = vsel %vm2452, %v454, %v1373
        %v2608 = vsel %vm2452, %v456, %v1375
        %v2611 = vsel %vm2452, %v458, %v1377
        %v2614 = vsel %vm2452, %v460, %v1379
        %v2617 = vsel %vm2452, %v462, %v1381
        %v2620 = vsel %vm2452, %v464, %v1383
        %v2623 = vsel %vm2452, %v468, %v1385
        %v2626 = vsel %vm2452, %v470, %v1387
        %v2629 = vsel %vm2452, %v472, %v1389
        %v2632 = vsel %vm2452, %v474, %v1391
        %v2635 = vsel %vm2452, %v476, %v1393
        %v2638 = vsel %vm2452, %v478, %v1395
        %v2641 = vsel %vm2452, %v480, %v1397
        %v2644 = vsel %vm2452, %v482, %v1399
        %vm2645 = vcmask 64512
        %v2647 = vsel %vm2645, %v2455, %v1481
        %v2649 = vsel %vm2645, %v2458, %v1483
        %v2651 = vsel %vm2645, %v2461, %v1485
        %v2653 = vsel %vm2645, %v2464, %v1487
        %v2655 = vsel %vm2645, %v2467, %v1489
        %v2657 = vsel %vm2645, %v2470, %v1491
        %v2659 = vsel %vm2645, %v2473, %v1493
        %v2661 = vsel %vm2645, %v2476, %v1495
        %v2663 = vsel %vm2645, %v2479, %v1497
        %v2665 = vsel %vm2645, %v2482, %v1499
        %v2667 = vsel %vm2645, %v2485, %v1501
        %v2669 = vsel %vm2645, %v2488, %v1503
        %v2671 = vsel %vm2645, %v2491, %v1505
        %v2673 = vsel %vm2645, %v2494, %v1507
        %v2675 = vsel %vm2645, %v2497, %v1509
        %v2677 = vsel %vm2645, %v2500, %v1511
        %v2679 = vsel %vm2645, %v2503, %v1513
        %v2681 = vsel %vm2645, %v2506, %v1515
        %v2683 = vsel %vm2645, %v2509, %v1517
        %v2685 = vsel %vm2645, %v2512, %v1519
        %v2687 = vsel %vm2645, %v2515, %v1521
        %v2689 = vsel %vm2645, %v2518, %v1523
        %v2691 = vsel %vm2645, %v2521, %v1525
        %v2693 = vsel %vm2645, %v2524, %v1527
        %v2695 = vsel %vm2645, %v2527, %v1529
        %v2697 = vsel %vm2645, %v2530, %v1531
        %v2699 = vsel %vm2645, %v2533, %v1533
        %v2701 = vsel %vm2645, %v2536, %v1535
        %v2703 = vsel %vm2645, %v2539, %v1537
        %v2705 = vsel %vm2645, %v2542, %v1539
        %v2707 = vsel %vm2645, %v2545, %v1541
        %v2709 = vsel %vm2645, %v2548, %v1543
        %v2711 = vsel %vm2645, %v2551, %v1545
        %v2713 = vsel %vm2645, %v2554, %v1547
        %v2715 = vsel %vm2645, %v2557, %v1549
        %v2717 = vsel %vm2645, %v2560, %v1551
        %v2719 = vsel %vm2645, %v2563, %v1553
        %v2721 = vsel %vm2645, %v2566, %v1555
        %v2723 = vsel %vm2645, %v2569, %v1557
        %v2725 = vsel %vm2645, %v2572, %v1559
        %v2727 = vsel %vm2645, %v2575, %v1561
        %v2729 = vsel %vm2645, %v2578, %v1563
        %v2731 = vsel %vm2645, %v2581, %v1565
        %v2733 = vsel %vm2645, %v2584, %v1567
        %v2735 = vsel %vm2645, %v2587, %v1569
        %v2737 = vsel %vm2645, %v2590, %v1571
        %v2739 = vsel %vm2645, %v2593, %v1573
        %v2741 = vsel %vm2645, %v2596, %v1575
        %v2743 = vsel %vm2645, %v2599, %v1577
        %v2745 = vsel %vm2645, %v2602, %v1579
        %v2747 = vsel %vm2645, %v2605, %v1581
        %v2749 = vsel %vm2645, %v2608, %v1583
        %v2751 = vsel %vm2645, %v2611, %v1585
        %v2753 = vsel %vm2645, %v2614, %v1587
        %v2755 = vsel %vm2645, %v2617, %v1589
        %v2757 = vsel %vm2645, %v2620, %v1591
        %v2759 = vsel %vm2645, %v2623, %v1593
        %v2761 = vsel %vm2645, %v2626, %v1595
        %v2763 = vsel %vm2645, %v2629, %v1597
        %v2765 = vsel %vm2645, %v2632, %v1599
        %v2767 = vsel %vm2645, %v2635, %v1601
        %v2769 = vsel %vm2645, %v2638, %v1603
        %v2771 = vsel %vm2645, %v2641, %v1605
        %v2773 = vsel %vm2645, %v2644, %v1607
        %vm2774 = vcmask 97280
        %v2776 = vsel %vm2774, %v2647, %v1689
        %v2778 = vsel %vm2774, %v2649, %v1691
        %v2780 = vsel %vm2774, %v2651, %v1693
        %v2782 = vsel %vm2774, %v2653, %v1695
        %v2784 = vsel %vm2774, %v2655, %v1697
        %v2786 = vsel %vm2774, %v2657, %v1699
        %v2788 = vsel %vm2774, %v2659, %v1701
        %v2790 = vsel %vm2774, %v2661, %v1703
        %v2792 = vsel %vm2774, %v2663, %v1705
        %v2794 = vsel %vm2774, %v2665, %v1707
        %v2796 = vsel %vm2774, %v2667, %v1709
        %v2798 = vsel %vm2774, %v2669, %v1711
        %v2800 = vsel %vm2774, %v2671, %v1713
        %v2802 = vsel %vm2774, %v2673, %v1715
        %v2804 = vsel %vm2774, %v2675, %v1717
        %v2806 = vsel %vm2774, %v2677, %v1719
        %v2808 = vsel %vm2774, %v2679, %v1721
        %v2810 = vsel %vm2774, %v2681, %v1723
        %v2812 = vsel %vm2774, %v2683, %v1725
        %v2814 = vsel %vm2774, %v2685, %v1727
        %v2816 = vsel %vm2774, %v2687, %v1729
        %v2818 = vsel %vm2774, %v2689, %v1731
        %v2820 = vsel %vm2774, %v2691, %v1733
        %v2822 = vsel %vm2774, %v2693, %v1735
        %v2824 = vsel %vm2774, %v2695, %v1737
        %v2826 = vsel %vm2774, %v2697, %v1739
        %v2828 = vsel %vm2774, %v2699, %v1741
        %v2830 = vsel %vm2774, %v2701, %v1743
        %v2832 = vsel %vm2774, %v2703, %v1745
        %v2834 = vsel %vm2774, %v2705, %v1747
        %v2836 = vsel %vm2774, %v2707, %v1749
        %v2838 = vsel %vm2774, %v2709, %v1751
        %v2840 = vsel %vm2774, %v2711, %v1753
        %v2842 = vsel %vm2774, %v2713, %v1755
        %v2844 = vsel %vm2774, %v2715, %v1757
        %v2846 = vsel %vm2774, %v2717, %v1759
        %v2848 = vsel %vm2774, %v2719, %v1761
        %v2850 = vsel %vm2774, %v2721, %v1763
        %v2852 = vsel %vm2774, %v2723, %v1765
        %v2854 = vsel %vm2774, %v2725, %v1767
        %v2856 = vsel %vm2774, %v2727, %v1769
        %v2858 = vsel %vm2774, %v2729, %v1771
        %v2860 = vsel %vm2774, %v2731, %v1773
        %v2862 = vsel %vm2774, %v2733, %v1775
        %v2864 = vsel %vm2774, %v2735, %v1777
        %v2866 = vsel %vm2774, %v2737, %v1779
        %v2868 = vsel %vm2774, %v2739, %v1781
        %v2870 = vsel %vm2774, %v2741, %v1783
        %v2872 = vsel %vm2774, %v2743, %v1785
        %v2874 = vsel %vm2774, %v2745, %v1787
        %v2876 = vsel %vm2774, %v2747, %v1789
        %v2878 = vsel %vm2774, %v2749, %v1791
        %v2880 = vsel %vm2774, %v2751, %v1793
        %v2882 = vsel %vm2774, %v2753, %v1795
        %v2884 = vsel %vm2774, %v2755, %v1797
        %v2886 = vsel %vm2774, %v2757, %v1799
        %v2888 = vsel %vm2774, %v2759, %v1801
        %v2890 = vsel %vm2774, %v2761, %v1803
        %v2892 = vsel %vm2774, %v2763, %v1805
        %v2894 = vsel %vm2774, %v2765, %v1807
        %v2896 = vsel %vm2774, %v2767, %v1809
        %v2898 = vsel %vm2774, %v2769, %v1811
        %v2900 = vsel %vm2774, %v2771, %v1813
        %v2902 = vsel %vm2774, %v2773, %v1815
        %vm2903 = vcmask 130048
        %v2905 = vsel %vm2903, %v2776, %v1848
        %v2907 = vsel %vm2903, %v2778, %v1850
        %v2909 = vsel %vm2903, %v2780, %v1852
        %v2911 = vsel %vm2903, %v2782, %v1854
        %v2913 = vsel %vm2903, %v2784, %v1856
        %v2915 = vsel %vm2903, %v2786, %v1858
        %v2917 = vsel %vm2903, %v2788, %v1860
        %v2919 = vsel %vm2903, %v2790, %v1862
        %v2921 = vsel %vm2903, %v2792, %v1864
        %v2923 = vsel %vm2903, %v2794, %v1866
        %v2925 = vsel %vm2903, %v2796, %v1868
        %v2927 = vsel %vm2903, %v2798, %v1870
        %v2929 = vsel %vm2903, %v2800, %v1872
        %v2931 = vsel %vm2903, %v2802, %v1874
        %v2933 = vsel %vm2903, %v2804, %v1876
        %v2935 = vsel %vm2903, %v2806, %v1878
        %v2937 = vsel %vm2903, %v2808, %v1880
        %v2939 = vsel %vm2903, %v2810, %v1882
        %v2941 = vsel %vm2903, %v2812, %v1884
        %v2943 = vsel %vm2903, %v2814, %v1886
        %v2945 = vsel %vm2903, %v2816, %v1888
        %v2947 = vsel %vm2903, %v2818, %v1890
        %v2949 = vsel %vm2903, %v2820, %v1892
        %v2951 = vsel %vm2903, %v2822, %v1894
        %v2953 = vsel %vm2903, %v2824, %v1896
        %v2955 = vsel %vm2903, %v2826, %v1898
        %v2957 = vsel %vm2903, %v2828, %v1900
        %v2959 = vsel %vm2903, %v2830, %v1902
        %v2961 = vsel %vm2903, %v2832, %v1904
        %v2963 = vsel %vm2903, %v2834, %v1906
        %v2965 = vsel %vm2903, %v2836, %v1908
        %v2967 = vsel %vm2903, %v2838, %v1910
        %v2969 = vsel %vm2903, %v2840, %v1912
        %v2971 = vsel %vm2903, %v2842, %v1914
        %v2973 = vsel %vm2903, %v2844, %v1916
        %v2975 = vsel %vm2903, %v2846, %v1918
        %v2977 = vsel %vm2903, %v2848, %v1920
        %v2979 = vsel %vm2903, %v2850, %v1922
        %v2981 = vsel %vm2903, %v2852, %v1924
        %v2983 = vsel %vm2903, %v2854, %v1926
        %v2985 = vsel %vm2903, %v2856, %v1928
        %v2987 = vsel %vm2903, %v2858, %v1930
        %v2989 = vsel %vm2903, %v2860, %v1932
        %v2991 = vsel %vm2903, %v2862, %v1934
        %v2993 = vsel %vm2903, %v2864, %v1936
        %v2995 = vsel %vm2903, %v2866, %v1938
        %v2997 = vsel %vm2903, %v2868, %v1940
        %v2999 = vsel %vm2903, %v2870, %v1942
        %v3001 = vsel %vm2903, %v2872, %v1944
        %v3003 = vsel %vm2903, %v2874, %v1946
        %v3005 = vsel %vm2903, %v2876, %v1948
        %v3007 = vsel %vm2903, %v2878, %v1950
        %v3009 = vsel %vm2903, %v2880, %v1952
        %v3011 = vsel %vm2903, %v2882, %v1954
        %v3013 = vsel %vm2903, %v2884, %v1956
        %v3015 = vsel %vm2903, %v2886, %v1958
        %v3017 = vsel %vm2903, %v2888, %v1960
        %v3019 = vsel %vm2903, %v2890, %v1962
        %v3021 = vsel %vm2903, %v2892, %v1964
        %v3023 = vsel %vm2903, %v2894, %v1966
        %v3025 = vsel %vm2903, %v2896, %v1968
        %v3027 = vsel %vm2903, %v2898, %v1970
        %v3029 = vsel %vm2903, %v2900, %v1972
        %v3031 = vsel %vm2903, %v2902, %v1974
        %vm3032 = vcmask 162816
        %v3034 = vsel %vm3032, %v2905, %v2056
        %v3036 = vsel %vm3032, %v2907, %v2058
        %v3038 = vsel %vm3032, %v2909, %v2060
        %v3040 = vsel %vm3032, %v2911, %v2062
        %v3042 = vsel %vm3032, %v2913, %v2064
        %v3044 = vsel %vm3032, %v2915, %v2066
        %v3046 = vsel %vm3032, %v2917, %v2068
        %v3048 = vsel %vm3032, %v2919, %v2070
        %v3050 = vsel %vm3032, %v2921, %v2072
        %v3052 = vsel %vm3032, %v2923, %v2074
        %v3054 = vsel %vm3032, %v2925, %v2076
        %v3056 = vsel %vm3032, %v2927, %v2078
        %v3058 = vsel %vm3032, %v2929, %v2080
        %v3060 = vsel %vm3032, %v2931, %v2082
        %v3062 = vsel %vm3032, %v2933, %v2084
        %v3064 = vsel %vm3032, %v2935, %v2086
        %v3066 = vsel %vm3032, %v2937, %v2088
        %v3068 = vsel %vm3032, %v2939, %v2090
        %v3070 = vsel %vm3032, %v2941, %v2092
        %v3072 = vsel %vm3032, %v2943, %v2094
        %v3074 = vsel %vm3032, %v2945, %v2096
        %v3076 = vsel %vm3032, %v2947, %v2098
        %v3078 = vsel %vm3032, %v2949, %v2100
        %v3080 = vsel %vm3032, %v2951, %v2102
        %v3082 = vsel %vm3032, %v2953, %v2104
        %v3084 = vsel %vm3032, %v2955, %v2106
        %v3086 = vsel %vm3032, %v2957, %v2108
        %v3088 = vsel %vm3032, %v2959, %v2110
        %v3090 = vsel %vm3032, %v2961, %v2112
        %v3092 = vsel %vm3032, %v2963, %v2114
        %v3094 = vsel %vm3032, %v2965, %v2116
        %v3096 = vsel %vm3032, %v2967, %v2118
        %v3098 = vsel %vm3032, %v2969, %v2120
        %v3100 = vsel %vm3032, %v2971, %v2122
        %v3102 = vsel %vm3032, %v2973, %v2124
        %v3104 = vsel %vm3032, %v2975, %v2126
        %v3106 = vsel %vm3032, %v2977, %v2128
        %v3108 = vsel %vm3032, %v2979, %v2130
        %v3110 = vsel %vm3032, %v2981, %v2132
        %v3112 = vsel %vm3032, %v2983, %v2134
        %v3114 = vsel %vm3032, %v2985, %v2136
        %v3116 = vsel %vm3032, %v2987, %v2138
        %v3118 = vsel %vm3032, %v2989, %v2140
        %v3120 = vsel %vm3032, %v2991, %v2142
        %v3122 = vsel %vm3032, %v2993, %v2144
        %v3124 = vsel %vm3032, %v2995, %v2146
        %v3126 = vsel %vm3032, %v2997, %v2148
        %v3128 = vsel %vm3032, %v2999, %v2150
        %v3130 = vsel %vm3032, %v3001, %v2152
        %v3132 = vsel %vm3032, %v3003, %v2154
        %v3134 = vsel %vm3032, %v3005, %v2156
        %v3136 = vsel %vm3032, %v3007, %v2158
        %v3138 = vsel %vm3032, %v3009, %v2160
        %v3140 = vsel %vm3032, %v3011, %v2162
        %v3142 = vsel %vm3032, %v3013, %v2164
        %v3144 = vsel %vm3032, %v3015, %v2166
        %v3146 = vsel %vm3032, %v3017, %v2168
        %v3148 = vsel %vm3032, %v3019, %v2170
        %v3150 = vsel %vm3032, %v3021, %v2172
        %v3152 = vsel %vm3032, %v3023, %v2174
        %v3154 = vsel %vm3032, %v3025, %v2176
        %v3156 = vsel %vm3032, %v3027, %v2178
        %v3158 = vsel %vm3032, %v3029, %v2180
        %v3160 = vsel %vm3032, %v3031, %v2182
        %vm3161 = vcmask 195584
        %v3163 = vsel %vm3161, %v3034, %v2187
        %v3165 = vsel %vm3161, %v3036, %v2189
        %v3167 = vsel %vm3161, %v3038, %v2191
        %v3169 = vsel %vm3161, %v3040, %v2193
        %v3171 = vsel %vm3161, %v3042, %v2195
        %v3173 = vsel %vm3161, %v3044, %v2197
        %v3175 = vsel %vm3161, %v3046, %v2199
        %v3177 = vsel %vm3161, %v3048, %v2201
        %v3179 = vsel %vm3161, %v3050, %v2203
        %v3181 = vsel %vm3161, %v3052, %v2205
        %v3183 = vsel %vm3161, %v3054, %v2207
        %v3185 = vsel %vm3161, %v3056, %v2209
        %v3187 = vsel %vm3161, %v3058, %v2211
        %v3189 = vsel %vm3161, %v3060, %v2213
        %v3191 = vsel %vm3161, %v3062, %v2215
        %v3193 = vsel %vm3161, %v3064, %v2217
        %v3195 = vsel %vm3161, %v3066, %v2219
        %v3197 = vsel %vm3161, %v3068, %v2221
        %v3199 = vsel %vm3161, %v3070, %v2223
        %v3201 = vsel %vm3161, %v3072, %v2225
        %v3203 = vsel %vm3161, %v3074, %v2227
        %v3205 = vsel %vm3161, %v3076, %v2229
        %v3207 = vsel %vm3161, %v3078, %v2231
        %v3209 = vsel %vm3161, %v3080, %v2233
        %v3211 = vsel %vm3161, %v3082, %v2235
        %v3213 = vsel %vm3161, %v3084, %v2237
        %v3215 = vsel %vm3161, %v3086, %v2239
        %v3217 = vsel %vm3161, %v3088, %v2241
        %v3219 = vsel %vm3161, %v3090, %v2243
        %v3221 = vsel %vm3161, %v3092, %v2245
        %v3223 = vsel %vm3161, %v3094, %v2247
        %v3225 = vsel %vm3161, %v3096, %v2249
        %v3227 = vsel %vm3161, %v3098, %v2251
        %v3229 = vsel %vm3161, %v3100, %v2253
        %v3231 = vsel %vm3161, %v3102, %v2255
        %v3233 = vsel %vm3161, %v3104, %v2257
        %v3235 = vsel %vm3161, %v3106, %v2259
        %v3237 = vsel %vm3161, %v3108, %v2261
        %v3239 = vsel %vm3161, %v3110, %v2263
        %v3241 = vsel %vm3161, %v3112, %v2265
        %v3243 = vsel %vm3161, %v3114, %v2267
        %v3245 = vsel %vm3161, %v3116, %v2269
        %v3247 = vsel %vm3161, %v3118, %v2271
        %v3249 = vsel %vm3161, %v3120, %v2273
        %v3251 = vsel %vm3161, %v3122, %v2275
        %v3253 = vsel %vm3161, %v3124, %v2277
        %v3255 = vsel %vm3161, %v3126, %v2279
        %v3257 = vsel %vm3161, %v3128, %v2281
        %v3259 = vsel %vm3161, %v3130, %v2283
        %v3261 = vsel %vm3161, %v3132, %v2285
        %v3263 = vsel %vm3161, %v3134, %v2287
        %v3265 = vsel %vm3161, %v3136, %v2289
        %v3267 = vsel %vm3161, %v3138, %v2291
        %v3269 = vsel %vm3161, %v3140, %v2293
        %v3271 = vsel %vm3161, %v3142, %v2295
        %v3273 = vsel %vm3161, %v3144, %v2297
        %v3275 = vsel %vm3161, %v3146, %v2299
        %v3277 = vsel %vm3161, %v3148, %v2301
        %v3279 = vsel %vm3161, %v3150, %v2303
        %v3281 = vsel %vm3161, %v3152, %v2305
        %v3283 = vsel %vm3161, %v3154, %v2307
        %v3285 = vsel %vm3161, %v3156, %v2309
        %v3287 = vsel %vm3161, %v3158, %v2311
        %v3289 = vsel %vm3161, %v3160, %v2313
        %vm3290 = vcmask 228352
        %v3292 = vsel %vm3290, %v3163, %v2325
        %v3294 = vsel %vm3290, %v3165, %v2327
        %v3296 = vsel %vm3290, %v3167, %v2329
        %v3298 = vsel %vm3290, %v3169, %v2331
        %v3300 = vsel %vm3290, %v3171, %v2333
        %v3302 = vsel %vm3290, %v3173, %v2335
        %v3304 = vsel %vm3290, %v3175, %v2337
        %v3306 = vsel %vm3290, %v3177, %v2339
        %v3308 = vsel %vm3290, %v3179, %v2341
        %v3310 = vsel %vm3290, %v3181, %v2343
        %v3312 = vsel %vm3290, %v3183, %v2345
        %v3314 = vsel %vm3290, %v3185, %v2347
        %v3316 = vsel %vm3290, %v3187, %v2349
        %v3318 = vsel %vm3290, %v3189, %v2351
        %v3320 = vsel %vm3290, %v3191, %v2353
        %v3322 = vsel %vm3290, %v3193, %v2355
        %v3324 = vsel %vm3290, %v3195, %v2357
        %v3326 = vsel %vm3290, %v3197, %v2359
        %v3328 = vsel %vm3290, %v3199, %v2361
        %v3330 = vsel %vm3290, %v3201, %v2363
        %v3332 = vsel %vm3290, %v3203, %v2365
        %v3334 = vsel %vm3290, %v3205, %v2367
        %v3336 = vsel %vm3290, %v3207, %v2369
        %v3338 = vsel %vm3290, %v3209, %v2371
        %v3340 = vsel %vm3290, %v3211, %v2373
        %v3342 = vsel %vm3290, %v3213, %v2375
        %v3344 = vsel %vm3290, %v3215, %v2377
        %v3346 = vsel %vm3290, %v3217, %v2379
        %v3348 = vsel %vm3290, %v3219, %v2381
        %v3350 = vsel %vm3290, %v3221, %v2383
        %v3352 = vsel %vm3290, %v3223, %v2385
        %v3354 = vsel %vm3290, %v3225, %v2387
        %v3356 = vsel %vm3290, %v3227, %v2389
        %v3358 = vsel %vm3290, %v3229, %v2391
        %v3360 = vsel %vm3290, %v3231, %v2393
        %v3362 = vsel %vm3290, %v3233, %v2395
        %v3364 = vsel %vm3290, %v3235, %v2397
        %v3366 = vsel %vm3290, %v3237, %v2399
        %v3368 = vsel %vm3290, %v3239, %v2401
        %v3370 = vsel %vm3290, %v3241, %v2403
        %v3372 = vsel %vm3290, %v3243, %v2405
        %v3374 = vsel %vm3290, %v3245, %v2407
        %v3376 = vsel %vm3290, %v3247, %v2409
        %v3378 = vsel %vm3290, %v3249, %v2411
        %v3380 = vsel %vm3290, %v3251, %v2413
        %v3382 = vsel %vm3290, %v3253, %v2415
        %v3384 = vsel %vm3290, %v3255, %v2417
        %v3386 = vsel %vm3290, %v3257, %v2419
        %v3388 = vsel %vm3290, %v3259, %v2421
        %v3390 = vsel %vm3290, %v3261, %v2423
        %v3392 = vsel %vm3290, %v3263, %v2425
        %v3394 = vsel %vm3290, %v3265, %v2427
        %v3396 = vsel %vm3290, %v3267, %v2429
        %v3398 = vsel %vm3290, %v3269, %v2431
        %v3400 = vsel %vm3290, %v3271, %v2433
        %v3402 = vsel %vm3290, %v3273, %v2435
        %v3404 = vsel %vm3290, %v3275, %v2437
        %v3406 = vsel %vm3290, %v3277, %v2439
        %v3408 = vsel %vm3290, %v3279, %v2441
        %v3410 = vsel %vm3290, %v3281, %v2443
        %v3412 = vsel %vm3290, %v3283, %v2445
        %v3414 = vsel %vm3290, %v3285, %v2447
        %v3416 = vsel %vm3290, %v3287, %v2449
        %v3418 = vsel %vm3290, %v3289, %v2451
        %v3419 = vld [vmem:[#allocation2] sm:$0xf]
        %v3420 = vld [vmem:[#allocation2 + $0x4] sm:$0xf]
        %v3421 = vld [vmem:[#allocation2 + $0x8] sm:$0xf]
        %v3422 = vld [vmem:[#allocation2 + $0xc] sm:$0xf]
        %v3423 = vld [vmem:[#allocation4] sm:$0x1]
        %v3425 = vlaneseq
        %v3426 = vshrl.u32 %v3425, 7
        %v3427 = vsub.s32 0, %v3426
        %v3428 = vrot.slane %v3423, %v3427
        %v3494 = vunpack.c.l.b16 %v3292
        %v3495 = vunpack.c.l.b16 %v3294
        %v3496 = vunpack.c.l.b16 %v3296
        %v3497 = vunpack.c.l.b16 %v3298
        %v3498 = vunpack.c.l.b16 %v3300
        %v3499 = vunpack.c.l.b16 %v3302
        %v3500 = vunpack.c.l.b16 %v3304
        %v3501 = vunpack.c.l.b16 %v3306
        %v3502 = vunpack.c.l.b16 %v3308
        %v3503 = vunpack.c.l.b16 %v3310
        %v3504 = vunpack.c.l.b16 %v3312
        %v3505 = vunpack.c.l.b16 %v3314
        %v3506 = vunpack.c.l.b16 %v3316
        %v3507 = vunpack.c.l.b16 %v3318
        %v3508 = vunpack.c.l.b16 %v3320
        %v3509 = vunpack.c.l.b16 %v3322
        %v3510 = vunpack.c.l.b16 %v3324
        %v3511 = vunpack.c.l.b16 %v3326
        %v3512 = vunpack.c.l.b16 %v3328
        %v3513 = vunpack.c.l.b16 %v3330
        %v3514 = vunpack.c.l.b16 %v3332
        %v3515 = vunpack.c.l.b16 %v3334
        %v3516 = vunpack.c.l.b16 %v3336
        %v3517 = vunpack.c.l.b16 %v3338
        %v3518 = vunpack.c.l.b16 %v3340
        %v3519 = vunpack.c.l.b16 %v3342
        %v3520 = vunpack.c.l.b16 %v3344
        %v3521 = vunpack.c.l.b16 %v3346
        %v3522 = vunpack.c.l.b16 %v3348
        %v3523 = vunpack.c.l.b16 %v3350
        %v3524 = vunpack.c.l.b16 %v3352
        %v3525 = vunpack.c.l.b16 %v3354
        %v3526 = vunpack.c.l.b16 %v3356
        %v3527 = vunpack.c.l.b16 %v3358
        %v3528 = vunpack.c.l.b16 %v3360
        %v3529 = vunpack.c.l.b16 %v3362
        %v3530 = vunpack.c.l.b16 %v3364
        %v3531 = vunpack.c.l.b16 %v3366
        %v3532 = vunpack.c.l.b16 %v3368
        %v3533 = vunpack.c.l.b16 %v3370
        %v3534 = vunpack.c.l.b16 %v3372
        %v3535 = vunpack.c.l.b16 %v3374
        %v3536 = vunpack.c.l.b16 %v3376
        %v3537 = vunpack.c.l.b16 %v3378
        %v3538 = vunpack.c.l.b16 %v3380
        %v3539 = vunpack.c.l.b16 %v3382
        %v3540 = vunpack.c.l.b16 %v3384
        %v3541 = vunpack.c.l.b16 %v3386
        %v3542 = vunpack.c.l.b16 %v3388
        %v3543 = vunpack.c.l.b16 %v3390
        %v3544 = vunpack.c.l.b16 %v3392
        %v3545 = vunpack.c.l.b16 %v3394
        %v3546 = vunpack.c.l.b16 %v3396
        %v3547 = vunpack.c.l.b16 %v3398
        %v3548 = vunpack.c.l.b16 %v3400
        %v3549 = vunpack.c.l.b16 %v3402
        %v3550 = vunpack.c.l.b16 %v3404
        %v3551 = vunpack.c.l.b16 %v3406
        %v3552 = vunpack.c.l.b16 %v3408
        %v3553 = vunpack.c.l.b16 %v3410
        %v3554 = vunpack.c.l.b16 %v3412
        %v3555 = vunpack.c.l.b16 %v3414
        %v3556 = vunpack.c.l.b16 %v3416
        %v3557 = vunpack.c.l.b16 %v3418
        %v3558 = vpack.c.b16 %v3495, %v3494
        %v3559 = vpack.c.b16 %v3497, %v3496
        %v3560 = vpack.c.b16 %v3499, %v3498
        %v3561 = vpack.c.b16 %v3501, %v3500
        %v3562 = vpack.c.b16 %v3503, %v3502
        %v3563 = vpack.c.b16 %v3505, %v3504
        %v3564 = vpack.c.b16 %v3507, %v3506
        %v3565 = vpack.c.b16 %v3509, %v3508
        %v3566 = vpack.c.b16 %v3511, %v3510
        %v3567 = vpack.c.b16 %v3513, %v3512
        %v3568 = vpack.c.b16 %v3515, %v3514
        %v3569 = vpack.c.b16 %v3517, %v3516
        %v3570 = vpack.c.b16 %v3519, %v3518
        %v3571 = vpack.c.b16 %v3521, %v3520
        %v3572 = vpack.c.b16 %v3523, %v3522
        %v3573 = vpack.c.b16 %v3525, %v3524
        %v3574 = vpack.c.b16 %v3527, %v3526
        %v3575 = vpack.c.b16 %v3529, %v3528
        %v3576 = vpack.c.b16 %v3531, %v3530
        %v3577 = vpack.c.b16 %v3533, %v3532
        %v3578 = vpack.c.b16 %v3535, %v3534
        %v3579 = vpack.c.b16 %v3537, %v3536
        %v3580 = vpack.c.b16 %v3539, %v3538
        %v3581 = vpack.c.b16 %v3541, %v3540
        %v3582 = vpack.c.b16 %v3543, %v3542
        %v3583 = vpack.c.b16 %v3545, %v3544
        %v3584 = vpack.c.b16 %v3547, %v3546
        %v3585 = vpack.c.b16 %v3549, %v3548
        %v3586 = vpack.c.b16 %v3551, %v3550
        %v3587 = vpack.c.b16 %v3553, %v3552
        %v3588 = vpack.c.b16 %v3555, %v3554
        %v3589 = vpack.c.b16 %v3557, %v3556
        %v3594 = vunpack.c.l.b16 %v3419
        %v3595 = vunpack.c.l.b16 %v3420
        %v3596 = vunpack.c.l.b16 %v3421
        %v3597 = vunpack.c.l.b16 %v3422
        %v3598 = vpack.c.b16 %v3595, %v3594
        %v3599 = vpack.c.b16 %v3597, %v3596
        %vm3602 = vcmask 261120
        %v3604 = vsel %vm3602, %v3558, 0
        %v3607 = vsel %vm3602, %v3559, 0
        %v3610 = vsel %vm3602, %v3560, 0
        %v3613 = vsel %vm3602, %v3561, 0
        %v3616 = vsel %vm3602, %v3562, 0
        %v3619 = vsel %vm3602, %v3563, 0
        %v3622 = vsel %vm3602, %v3564, 0
        %v3625 = vsel %vm3602, %v3565, 0
        %v3628 = vsel %vm3602, %v3566, 0
        %v3631 = vsel %vm3602, %v3567, 0
        %v3634 = vsel %vm3602, %v3568, 0
        %v3637 = vsel %vm3602, %v3569, 0
        %v3640 = vsel %vm3602, %v3570, 0
        %v3643 = vsel %vm3602, %v3571, 0
        %v3646 = vsel %vm3602, %v3572, 0
        %v3649 = vsel %vm3602, %v3573, 0
        %v3652 = vsel %vm3602, %v3574, 0
        %v3655 = vsel %vm3602, %v3575, 0
        %v3658 = vsel %vm3602, %v3576, 0
        %v3661 = vsel %vm3602, %v3577, 0
        %v3664 = vsel %vm3602, %v3578, 0
        %v3667 = vsel %vm3602, %v3579, 0
        %v3670 = vsel %vm3602, %v3580, 0
        %v3673 = vsel %vm3602, %v3581, 0
        %v3676 = vsel %vm3602, %v3582, 0
        %v3679 = vsel %vm3602, %v3583, 0
        %v3682 = vsel %vm3602, %v3584, 0
        %v3685 = vsel %vm3602, %v3585, 0
        %v3688 = vsel %vm3602, %v3586, 0
        %v3691 = vsel %vm3602, %v3587, 0
        %v3694 = vsel %vm3602, %v3588, 0
        %v3697 = vsel %vm3602, %v3589, 0
        %3699 = vmatprep.subr.bf16.mxu0 0
        %3700 = vmatpush1.bf16.msra.mxu0 %v3598
        %3701 = vmatprep.subr.bf16.mxu0 0
        %3702 = vmatpush1.bf16.msra.mxu0 %v3599
        %3703 = vmatprep.subr.bf16.mxu0 0
        %3704 = vmatpush1.bf16.msra.mxu0 0
        %3705 = vmatprep.subr.bf16.mxu0 0
        %3706 = vmatpush1.bf16.msra.mxu0 0
        %3707 = vmatprep.subr.bf16.mxu0 0
        %3708 = vmatpush1.bf16.msra.mxu0 0
        %3709 = vmatprep.subr.bf16.mxu0 0
        %3710 = vmatpush1.bf16.msra.mxu0 0
        %3711 = vmatprep.subr.bf16.mxu0 0
        %3712 = vmatpush1.bf16.msra.mxu0 0
        %3713 = vmatprep.subr.bf16.mxu0 0
        %3714 = vmatpush1.bf16.msra.mxu0 0
        %3715 = vmatprep.subr.bf16.mxu0 0
        %3716 = vmatpush1.bf16.msra.mxu0 0
        %3717 = vmatprep.subr.bf16.mxu0 0
        %3718 = vmatpush1.bf16.msra.mxu0 0
        %3719 = vmatprep.subr.bf16.mxu0 0
        %3720 = vmatpush1.bf16.msra.mxu0 0
        %3721 = vmatprep.subr.bf16.mxu0 0
        %3722 = vmatpush1.bf16.msra.mxu0 0
        %3723 = vmatprep.subr.bf16.mxu0 0
        %3724 = vmatpush1.bf16.msra.mxu0 0
        %3725 = vmatprep.subr.bf16.mxu0 0
        %3726 = vmatpush1.bf16.msra.mxu0 0
        %3727 = vmatprep.subr.bf16.mxu0 0
        %3728 = vmatpush1.bf16.msra.mxu0 0
        %3729 = vmatprep.subr.bf16.mxu0 0
        %3730 = vmatpush1.bf16.msra.mxu0 0
        %3731 = vmatprep.mubr.bf16.mxu0 0
        %3732 = vmatmul.mubr.bf16.gmra.mrb[0].mxu0 %v3604
        %v3733 = vpop.f32.mrb[0].mxu0
        %v3734 = vadd.f32 %v3428, %v3733
        %v3735 = vpop.f32.mrb[0].mxu0
        %v3736 = vpop.f32.mrb[0].mxu0
        %v3737 = vadd.f32 %v3428, %v3736
        %v3738 = vpop.f32.mrb[0].mxu0
        %3739 = vmatprep.mubr.bf16.mxu0 0
        %3740 = vmatmul.mubr.bf16.gmra.mrb[0].mxu0 %v3607
        %v3741 = vpop.f32.mrb[0].mxu0
        %v3742 = vadd.f32 %v3428, %v3741
        %v3743 = vpop.f32.mrb[0].mxu0
        %v3744 = vpop.f32.mrb[0].mxu0
        %v3745 = vadd.f32 %v3428, %v3744
        %v3746 = vpop.f32.mrb[0].mxu0
        %3747 = vmatprep.mubr.bf16.mxu0 0
        %3748 = vmatmul.mubr.bf16.gmra.mrb[0].mxu0 %v3610
        %v3749 = vpop.f32.mrb[0].mxu0
        %v3750 = vadd.f32 %v3428, %v3749
        %v3751 = vpop.f32.mrb[0].mxu0
        %v3752 = vpop.f32.mrb[0].mxu0
        %v3753 = vadd.f32 %v3428, %v3752
        %v3754 = vpop.f32.mrb[0].mxu0
        %3755 = vmatprep.mubr.bf16.mxu0 0
        %3756 = vmatmul.mubr.bf16.gmra.mrb[0].mxu0 %v3613
        %v3757 = vpop.f32.mrb[0].mxu0
        %v3758 = vadd.f32 %v3428, %v3757
        %v3759 = vpop.f32.mrb[0].mxu0
        %v3760 = vpop.f32.mrb[0].mxu0
        %v3761 = vadd.f32 %v3428, %v3760
        %v3762 = vpop.f32.mrb[0].mxu0
        %3763 = vmatprep.mubr.bf16.mxu0 0
        %3764 = vmatmul.mubr.bf16.gmra.mrb[0].mxu0 %v3616
        %v3765 = vpop.f32.mrb[0].mxu0
        %v3766 = vadd.f32 %v3428, %v3765
        %v3767 = vpop.f32.mrb[0].mxu0
        %v3768 = vpop.f32.mrb[0].mxu0
        %v3769 = vadd.f32 %v3428, %v3768
        %v3770 = vpop.f32.mrb[0].mxu0
        %3771 = vmatprep.mubr.bf16.mxu0 0
        %3772 = vmatmul.mubr.bf16.gmra.mrb[0].mxu0 %v3619
        %v3773 = vpop.f32.mrb[0].mxu0
        %v3774 = vadd.f32 %v3428, %v3773
        %v3775 = vpop.f32.mrb[0].mxu0
        %v3776 = vpop.f32.mrb[0].mxu0
        %v3777 = vadd.f32 %v3428, %v3776
        %v3778 = vpop.f32.mrb[0].mxu0
        %3779 = vmatprep.mubr.bf16.mxu0 0
        %3780 = vmatmul.mubr.bf16.gmra.mrb[0].mxu0 %v3622
        %v3781 = vpop.f32.mrb[0].mxu0
        %v3782 = vadd.f32 %v3428, %v3781
        %v3783 = vpop.f32.mrb[0].mxu0
        %v3784 = vpop.f32.mrb[0].mxu0
        %v3785 = vadd.f32 %v3428, %v3784
        %v3786 = vpop.f32.mrb[0].mxu0
        %3787 = vmatprep.mubr.bf16.mxu0 0
        %3788 = vmatmul.mubr.bf16.gmra.mrb[0].mxu0 %v3625
        %v3789 = vpop.f32.mrb[0].mxu0
        %v3790 = vadd.f32 %v3428, %v3789
        %v3791 = vpop.f32.mrb[0].mxu0
        %v3792 = vpop.f32.mrb[0].mxu0
        %v3793 = vadd.f32 %v3428, %v3792
        %v3794 = vpop.f32.mrb[0].mxu0
        %3795 = vmatprep.mubr.bf16.mxu0 0
        %3796 = vmatmul.mubr.bf16.gmra.mrb[0].mxu0 %v3628
        %v3797 = vpop.f32.mrb[0].mxu0
        %v3798 = vadd.f32 %v3428, %v3797
        %v3799 = vpop.f32.mrb[0].mxu0
        %v3800 = vpop.f32.mrb[0].mxu0
        %v3801 = vadd.f32 %v3428, %v3800
        %v3802 = vpop.f32.mrb[0].mxu0
        %3803 = vmatprep.mubr.bf16.mxu0 0
        %3804 = vmatmul.mubr.bf16.gmra.mrb[0].mxu0 %v3631
        %v3805 = vpop.f32.mrb[0].mxu0
        %v3806 = vadd.f32 %v3428, %v3805
        %v3807 = vpop.f32.mrb[0].mxu0
        %v3808 = vpop.f32.mrb[0].mxu0
        %v3809 = vadd.f32 %v3428, %v3808
        %v3810 = vpop.f32.mrb[0].mxu0
        %3811 = vmatprep.mubr.bf16.mxu0 0
        %3812 = vmatmul.mubr.bf16.gmra.mrb[0].mxu0 %v3634
        %v3813 = vpop.f32.mrb[0].mxu0
        %v3814 = vadd.f32 %v3428, %v3813
        %v3815 = vpop.f32.mrb[0].mxu0
        %v3816 = vpop.f32.mrb[0].mxu0
        %v3817 = vadd.f32 %v3428, %v3816
        %v3818 = vpop.f32.mrb[0].mxu0
        %3819 = vmatprep.mubr.bf16.mxu0 0
        %3820 = vmatmul.mubr.bf16.gmra.mrb[0].mxu0 %v3637
        %v3821 = vpop.f32.mrb[0].mxu0
        %v3822 = vadd.f32 %v3428, %v3821
        %v3823 = vpop.f32.mrb[0].mxu0
        %v3824 = vpop.f32.mrb[0].mxu0
        %v3825 = vadd.f32 %v3428, %v3824
        %v3826 = vpop.f32.mrb[0].mxu0
        %3827 = vmatprep.mubr.bf16.mxu0 0
        %3828 = vmatmul.mubr.bf16.gmra.mrb[0].mxu0 %v3640
        %v3829 = vpop.f32.mrb[0].mxu0
        %v3830 = vadd.f32 %v3428, %v3829
        %v3831 = vpop.f32.mrb[0].mxu0
        %v3832 = vpop.f32.mrb[0].mxu0
        %v3833 = vadd.f32 %v3428, %v3832
        %v3834 = vpop.f32.mrb[0].mxu0
        %3835 = vmatprep.mubr.bf16.mxu0 0
        %3836 = vmatmul.mubr.bf16.gmra.mrb[0].mxu0 %v3643
        %v3837 = vpop.f32.mrb[0].mxu0
        %v3838 = vadd.f32 %v3428, %v3837
        %v3839 = vpop.f32.mrb[0].mxu0
        %v3840 = vpop.f32.mrb[0].mxu0
        %v3841 = vadd.f32 %v3428, %v3840
        %v3842 = vpop.f32.mrb[0].mxu0
        %3843 = vmatprep.mubr.bf16.mxu0 0
        %3844 = vmatmul.mubr.bf16.gmra.mrb[0].mxu0 %v3646
        %v3845 = vpop.f32.mrb[0].mxu0
        %v3846 = vadd.f32 %v3428, %v3845
        %v3847 = vpop.f32.mrb[0].mxu0
        %v3848 = vpop.f32.mrb[0].mxu0
        %v3849 = vadd.f32 %v3428, %v3848
        %v3850 = vpop.f32.mrb[0].mxu0
        %3851 = vmatprep.mubr.bf16.mxu0 0
        %3852 = vmatmul.mubr.bf16.gmra.mrb[0].mxu0 %v3649
        %v3853 = vpop.f32.mrb[0].mxu0
        %v3854 = vadd.f32 %v3428, %v3853
        %v3855 = vpop.f32.mrb[0].mxu0
        %v3856 = vpop.f32.mrb[0].mxu0
        %v3857 = vadd.f32 %v3428, %v3856
        %v3858 = vpop.f32.mrb[0].mxu0
        %3859 = vmatprep.mubr.bf16.mxu0 0
        %3860 = vmatmul.mubr.bf16.gmra.mrb[0].mxu0 %v3652
        %v3861 = vpop.f32.mrb[0].mxu0
        %v3862 = vadd.f32 %v3428, %v3861
        %v3863 = vpop.f32.mrb[0].mxu0
        %v3864 = vpop.f32.mrb[0].mxu0
        %v3865 = vadd.f32 %v3428, %v3864
        %v3866 = vpop.f32.mrb[0].mxu0
        %3867 = vmatprep.mubr.bf16.mxu0 0
        %3868 = vmatmul.mubr.bf16.gmra.mrb[0].mxu0 %v3655
        %v3869 = vpop.f32.mrb[0].mxu0
        %v3870 = vadd.f32 %v3428, %v3869
        %v3871 = vpop.f32.mrb[0].mxu0
        %v3872 = vpop.f32.mrb[0].mxu0
        %v3873 = vadd.f32 %v3428, %v3872
        %v3874 = vpop.f32.mrb[0].mxu0
        %3875 = vmatprep.mubr.bf16.mxu0 0
        %3876 = vmatmul.mubr.bf16.gmra.mrb[0].mxu0 %v3658
        %v3877 = vpop.f32.mrb[0].mxu0
        %v3878 = vadd.f32 %v3428, %v3877
        %v3879 = vpop.f32.mrb[0].mxu0
        %v3880 = vpop.f32.mrb[0].mxu0
        %v3881 = vadd.f32 %v3428, %v3880
        %v3882 = vpop.f32.mrb[0].mxu0
        %3883 = vmatprep.mubr.bf16.mxu0 0
        %3884 = vmatmul.mubr.bf16.gmra.mrb[0].mxu0 %v3661
        %v3885 = vpop.f32.mrb[0].mxu0
        %v3886 = vadd.f32 %v3428, %v3885
        %v3887 = vpop.f32.mrb[0].mxu0
        %v3888 = vpop.f32.mrb[0].mxu0
        %v3889 = vadd.f32 %v3428, %v3888
        %v3890 = vpop.f32.mrb[0].mxu0
        %3891 = vmatprep.mubr.bf16.mxu0 0
        %3892 = vmatmul.mubr.bf16.gmra.mrb[0].mxu0 %v3664
        %v3893 = vpop.f32.mrb[0].mxu0
        %v3894 = vadd.f32 %v3428, %v3893
        %v3895 = vpop.f32.mrb[0].mxu0
        %v3896 = vpop.f32.mrb[0].mxu0
        %v3897 = vadd.f32 %v3428, %v3896
        %v3898 = vpop.f32.mrb[0].mxu0
        %3899 = vmatprep.mubr.bf16.mxu0 0
        %3900 = vmatmul.mubr.bf16.gmra.mrb[0].mxu0 %v3667
        %v3901 = vpop.f32.mrb[0].mxu0
        %v3902 = vadd.f32 %v3428, %v3901
        %v3903 = vpop.f32.mrb[0].mxu0
        %v3904 = vpop.f32.mrb[0].mxu0
        %v3905 = vadd.f32 %v3428, %v3904
        %v3906 = vpop.f32.mrb[0].mxu0
        %3907 = vmatprep.mubr.bf16.mxu0 0
        %3908 = vmatmul.mubr.bf16.gmra.mrb[0].mxu0 %v3670
        %v3909 = vpop.f32.mrb[0].mxu0
        %v3910 = vadd.f32 %v3428, %v3909
        %v3911 = vpop.f32.mrb[0].mxu0
        %v3912 = vpop.f32.mrb[0].mxu0
        %v3913 = vadd.f32 %v3428, %v3912
        %v3914 = vpop.f32.mrb[0].mxu0
        %3915 = vmatprep.mubr.bf16.mxu0 0
        %3916 = vmatmul.mubr.bf16.gmra.mrb[0].mxu0 %v3673
        %v3917 = vpop.f32.mrb[0].mxu0
        %v3918 = vadd.f32 %v3428, %v3917
        %v3919 = vpop.f32.mrb[0].mxu0
        %v3920 = vpop.f32.mrb[0].mxu0
        %v3921 = vadd.f32 %v3428, %v3920
        %v3922 = vpop.f32.mrb[0].mxu0
        %3923 = vmatprep.mubr.bf16.mxu0 0
        %3924 = vmatmul.mubr.bf16.gmra.mrb[0].mxu0 %v3676
        %v3925 = vpop.f32.mrb[0].mxu0
        %v3926 = vadd.f32 %v3428, %v3925
        %v3927 = vpop.f32.mrb[0].mxu0
        %v3928 = vpop.f32.mrb[0].mxu0
        %v3929 = vadd.f32 %v3428, %v3928
        %v3930 = vpop.f32.mrb[0].mxu0
        %3931 = vmatprep.mubr.bf16.mxu0 0
        %3932 = vmatmul.mubr.bf16.gmra.mrb[0].mxu0 %v3679
        %v3933 = vpop.f32.mrb[0].mxu0
        %v3934 = vadd.f32 %v3428, %v3933
        %v3935 = vpop.f32.mrb[0].mxu0
        %v3936 = vpop.f32.mrb[0].mxu0
        %v3937 = vadd.f32 %v3428, %v3936
        %v3938 = vpop.f32.mrb[0].mxu0
        %3939 = vmatprep.mubr.bf16.mxu0 0
        %3940 = vmatmul.mubr.bf16.gmra.mrb[0].mxu0 %v3682
        %v3941 = vpop.f32.mrb[0].mxu0
        %v3942 = vadd.f32 %v3428, %v3941
        %v3943 = vpop.f32.mrb[0].mxu0
        %v3944 = vpop.f32.mrb[0].mxu0
        %v3945 = vadd.f32 %v3428, %v3944
        %v3946 = vpop.f32.mrb[0].mxu0
        %3947 = vmatprep.mubr.bf16.mxu0 0
        %3948 = vmatmul.mubr.bf16.gmra.mrb[0].mxu0 %v3685
        %v3949 = vpop.f32.mrb[0].mxu0
        %v3950 = vadd.f32 %v3428, %v3949
        %v3951 = vpop.f32.mrb[0].mxu0
        %v3952 = vpop.f32.mrb[0].mxu0
        %v3953 = vadd.f32 %v3428, %v3952
        %v3954 = vpop.f32.mrb[0].mxu0
        %3955 = vmatprep.mubr.bf16.mxu0 0
        %3956 = vmatmul.mubr.bf16.gmra.mrb[0].mxu0 %v3688
        %v3957 = vpop.f32.mrb[0].mxu0
        %v3958 = vadd.f32 %v3428, %v3957
        %v3959 = vpop.f32.mrb[0].mxu0
        %v3960 = vpop.f32.mrb[0].mxu0
        %v3961 = vadd.f32 %v3428, %v3960
        %v3962 = vpop.f32.mrb[0].mxu0
        %3963 = vmatprep.mubr.bf16.mxu0 0
        %3964 = vmatmul.mubr.bf16.gmra.mrb[0].mxu0 %v3691
        %v3965 = vpop.f32.mrb[0].mxu0
        %v3966 = vadd.f32 %v3428, %v3965
        %v3967 = vpop.f32.mrb[0].mxu0
        %v3968 = vpop.f32.mrb[0].mxu0
        %v3969 = vadd.f32 %v3428, %v3968
        %v3970 = vpop.f32.mrb[0].mxu0
        %3971 = vmatprep.mubr.bf16.mxu0 0
        %3972 = vmatmul.mubr.bf16.gmra.mrb[0].mxu0 %v3694
        %v3973 = vpop.f32.mrb[0].mxu0
        %v3974 = vadd.f32 %v3428, %v3973
        %v3975 = vpop.f32.mrb[0].mxu0
        %v3976 = vpop.f32.mrb[0].mxu0
        %v3977 = vadd.f32 %v3428, %v3976
        %v3978 = vpop.f32.mrb[0].mxu0
        %3979 = vmatprep.mubr.bf16.mxu0 0
        %3980 = vmatmul.mubr.bf16.gmra.mrb[0].mxu0 %v3697
        %v3981 = vpop.f32.mrb[0].mxu0
        %v3982 = vadd.f32 %v3428, %v3981
        %v3983 = vpop.f32.mrb[0].mxu0
        %v3984 = vpop.f32.mrb[0].mxu0
        %v3985 = vadd.f32 %v3428, %v3984
        %v3986 = vpop.f32.mrb[0].mxu0
        %3987 = vdwg.mxu0
        %v3988 = vpack.c.bf16 %v3737, %v3734
        %v3989 = vpack.c.bf16 %v3745, %v3742
        %v3990 = vpack.c.bf16 %v3753, %v3750
        %v3991 = vpack.c.bf16 %v3761, %v3758
        %v3992 = vpack.c.bf16 %v3769, %v3766
        %v3993 = vpack.c.bf16 %v3777, %v3774
        %v3994 = vpack.c.bf16 %v3785, %v3782
        %v3995 = vpack.c.bf16 %v3793, %v3790
        %v3996 = vpack.c.bf16 %v3801, %v3798
        %v3997 = vpack.c.bf16 %v3809, %v3806
        %v3998 = vpack.c.bf16 %v3817, %v3814
        %v3999 = vpack.c.bf16 %v3825, %v3822
        %v4000 = vpack.c.bf16 %v3833, %v3830
        %v4001 = vpack.c.bf16 %v3841, %v3838
        %v4002 = vpack.c.bf16 %v3849, %v3846
        %v4003 = vpack.c.bf16 %v3857, %v3854
        %v4004 = vpack.c.bf16 %v3865, %v3862
        %v4005 = vpack.c.bf16 %v3873, %v3870
        %v4006 = vpack.c.bf16 %v3881, %v3878
        %v4007 = vpack.c.bf16 %v3889, %v3886
        %v4008 = vpack.c.bf16 %v3897, %v3894
        %v4009 = vpack.c.bf16 %v3905, %v3902
        %v4010 = vpack.c.bf16 %v3913, %v3910
        %v4011 = vpack.c.bf16 %v3921, %v3918
        %v4012 = vpack.c.bf16 %v3929, %v3926
        %v4013 = vpack.c.bf16 %v3937, %v3934
        %v4014 = vpack.c.bf16 %v3945, %v3942
        %v4015 = vpack.c.bf16 %v3953, %v3950
        %v4016 = vpack.c.bf16 %v3961, %v3958
        %v4017 = vpack.c.bf16 %v3969, %v3966
        %v4018 = vpack.c.bf16 %v3977, %v3974
        %v4019 = vpack.c.bf16 %v3985, %v3982
        %v4052 = vunpack.c.l.b16 %v3988
        %v4053 = vunpack.c.h.b16 %v3988
        %v4054 = vunpack.c.l.b16 %v3989
        %v4055 = vunpack.c.h.b16 %v3989
        %v4056 = vunpack.c.l.b16 %v3990
        %v4057 = vunpack.c.h.b16 %v3990
        %v4058 = vunpack.c.l.b16 %v3991
        %v4059 = vunpack.c.h.b16 %v3991
        %v4060 = vunpack.c.l.b16 %v3992
        %v4061 = vunpack.c.h.b16 %v3992
        %v4062 = vunpack.c.l.b16 %v3993
        %v4063 = vunpack.c.h.b16 %v3993
        %v4064 = vunpack.c.l.b16 %v3994
        %v4065 = vunpack.c.h.b16 %v3994
        %v4066 = vunpack.c.l.b16 %v3995
        %v4067 = vunpack.c.h.b16 %v3995
        %v4068 = vunpack.c.l.b16 %v3996
        %v4069 = vunpack.c.h.b16 %v3996
        %v4070 = vunpack.c.l.b16 %v3997
        %v4071 = vunpack.c.h.b16 %v3997
        %v4072 = vunpack.c.l.b16 %v3998
        %v4073 = vunpack.c.h.b16 %v3998
        %v4074 = vunpack.c.l.b16 %v3999
        %v4075 = vunpack.c.h.b16 %v3999
        %v4076 = vunpack.c.l.b16 %v4000
        %v4077 = vunpack.c.h.b16 %v4000
        %v4078 = vunpack.c.l.b16 %v4001
        %v4079 = vunpack.c.h.b16 %v4001
        %v4080 = vunpack.c.l.b16 %v4002
        %v4081 = vunpack.c.h.b16 %v4002
        %v4082 = vunpack.c.l.b16 %v4003
        %v4083 = vunpack.c.h.b16 %v4003
        %v4084 = vunpack.c.l.b16 %v4004
        %v4085 = vunpack.c.h.b16 %v4004
        %v4086 = vunpack.c.l.b16 %v4005
        %v4087 = vunpack.c.h.b16 %v4005
        %v4088 = vunpack.c.l.b16 %v4006
        %v4089 = vunpack.c.h.b16 %v4006
        %v4090 = vunpack.c.l.b16 %v4007
        %v4091 = vunpack.c.h.b16 %v4007
        %v4092 = vunpack.c.l.b16 %v4008
        %v4093 = vunpack.c.h.b16 %v4008
        %v4094 = vunpack.c.l.b16 %v4009
        %v4095 = vunpack.c.h.b16 %v4009
        %v4096 = vunpack.c.l.b16 %v4010
        %v4097 = vunpack.c.h.b16 %v4010
        %v4098 = vunpack.c.l.b16 %v4011
        %v4099 = vunpack.c.h.b16 %v4011
        %v4100 = vunpack.c.l.b16 %v4012
        %v4101 = vunpack.c.h.b16 %v4012
        %v4102 = vunpack.c.l.b16 %v4013
        %v4103 = vunpack.c.h.b16 %v4013
        %v4104 = vunpack.c.l.b16 %v4014
        %v4105 = vunpack.c.h.b16 %v4014
        %v4106 = vunpack.c.l.b16 %v4015
        %v4107 = vunpack.c.h.b16 %v4015
        %v4108 = vunpack.c.l.b16 %v4016
        %v4109 = vunpack.c.h.b16 %v4016
        %v4110 = vunpack.c.l.b16 %v4017
        %v4111 = vunpack.c.h.b16 %v4017
        %v4112 = vunpack.c.l.b16 %v4018
        %v4113 = vunpack.c.h.b16 %v4018
        %v4114 = vunpack.c.l.b16 %v4019
        %v4115 = vunpack.c.h.b16 %v4019
        %v4116 = vpack.c.b16 %v4052, %v4052
        %v4117 = vpack.c.b16 %v4053, %v4053
        %v4118 = vpack.c.b16 %v4054, %v4054
        %v4119 = vpack.c.b16 %v4055, %v4055
        %v4120 = vpack.c.b16 %v4056, %v4056
        %v4121 = vpack.c.b16 %v4057, %v4057
        %v4122 = vpack.c.b16 %v4058, %v4058
        %v4123 = vpack.c.b16 %v4059, %v4059
        %v4124 = vpack.c.b16 %v4060, %v4060
        %v4125 = vpack.c.b16 %v4061, %v4061
        %v4126 = vpack.c.b16 %v4062, %v4062
        %v4127 = vpack.c.b16 %v4063, %v4063
        %v4128 = vpack.c.b16 %v4064, %v4064
        %v4129 = vpack.c.b16 %v4065, %v4065
        %v4130 = vpack.c.b16 %v4066, %v4066
        %v4131 = vpack.c.b16 %v4067, %v4067
        %v4132 = vpack.c.b16 %v4068, %v4068
        %v4133 = vpack.c.b16 %v4069, %v4069
        %v4134 = vpack.c.b16 %v4070, %v4070
        %v4135 = vpack.c.b16 %v4071, %v4071
        %v4136 = vpack.c.b16 %v4072, %v4072
        %v4137 = vpack.c.b16 %v4073, %v4073
        %v4138 = vpack.c.b16 %v4074, %v4074
        %v4139 = vpack.c.b16 %v4075, %v4075
        %v4140 = vpack.c.b16 %v4076, %v4076
        %v4141 = vpack.c.b16 %v4077, %v4077
        %v4142 = vpack.c.b16 %v4078, %v4078
        %v4143 = vpack.c.b16 %v4079, %v4079
        %v4144 = vpack.c.b16 %v4080, %v4080
        %v4145 = vpack.c.b16 %v4081, %v4081
        %v4146 = vpack.c.b16 %v4082, %v4082
        %v4147 = vpack.c.b16 %v4083, %v4083
        %v4148 = vpack.c.b16 %v4084, %v4084
        %v4149 = vpack.c.b16 %v4085, %v4085
        %v4150 = vpack.c.b16 %v4086, %v4086
        %v4151 = vpack.c.b16 %v4087, %v4087
        %v4152 = vpack.c.b16 %v4088, %v4088
        %v4153 = vpack.c.b16 %v4089, %v4089
        %v4154 = vpack.c.b16 %v4090, %v4090
        %v4155 = vpack.c.b16 %v4091, %v4091
        %v4156 = vpack.c.b16 %v4092, %v4092
        %v4157 = vpack.c.b16 %v4093, %v4093
        %v4158 = vpack.c.b16 %v4094, %v4094
        %v4159 = vpack.c.b16 %v4095, %v4095
        %v4160 = vpack.c.b16 %v4096, %v4096
        %v4161 = vpack.c.b16 %v4097, %v4097
        %v4162 = vpack.c.b16 %v4098, %v4098
        %v4163 = vpack.c.b16 %v4099, %v4099
        %v4164 = vpack.c.b16 %v4100, %v4100
        %v4165 = vpack.c.b16 %v4101, %v4101
        %v4166 = vpack.c.b16 %v4102, %v4102
        %v4167 = vpack.c.b16 %v4103, %v4103
        %v4168 = vpack.c.b16 %v4104, %v4104
        %v4169 = vpack.c.b16 %v4105, %v4105
        %v4170 = vpack.c.b16 %v4106, %v4106
        %v4171 = vpack.c.b16 %v4107, %v4107
        %v4172 = vpack.c.b16 %v4108, %v4108
        %v4173 = vpack.c.b16 %v4109, %v4109
        %v4174 = vpack.c.b16 %v4110, %v4110
        %v4175 = vpack.c.b16 %v4111, %v4111
        %v4176 = vpack.c.b16 %v4112, %v4112
        %v4177 = vpack.c.b16 %v4113, %v4113
        %v4178 = vpack.c.b16 %v4114, %v4114
        %v4179 = vpack.c.b16 %v4115, %v4115
        %4244 = vst [vmem:[%s338] sm:$0xf] %v4116
        %4245 = vst [vmem:[%s338 + $0x4] sm:$0xf] %v4117
        %4246 = vst [vmem:[%s338 + $0x8] sm:$0xf] %v4118
        %4247 = vst [vmem:[%s338 + $0xc] sm:$0xf] %v4119
        %4248 = vst [vmem:[%s338 + $0x10] sm:$0xf] %v4120
        %4249 = vst [vmem:[%s338 + $0x14] sm:$0xf] %v4121
        %4250 = vst [vmem:[%s338 + $0x18] sm:$0xf] %v4122
        %4251 = vst [vmem:[%s338 + $0x1c] sm:$0xf] %v4123
        %4252 = vst [vmem:[%s338 + $0x20] sm:$0xf] %v4124
        %4253 = vst [vmem:[%s338 + $0x24] sm:$0xf] %v4125
        %4254 = vst [vmem:[%s338 + $0x28] sm:$0xf] %v4126
        %4255 = vst [vmem:[%s338 + $0x2c] sm:$0xf] %v4127
        %4256 = vst [vmem:[%s338 + $0x30] sm:$0xf] %v4128
        %4257 = vst [vmem:[%s338 + $0x34] sm:$0xf] %v4129
        %4258 = vst [vmem:[%s338 + $0x38] sm:$0xf] %v4130
        %4259 = vst [vmem:[%s338 + $0x3c] sm:$0xf] %v4131
        %4260 = vst [vmem:[%s338 + $0x40] sm:$0xf] %v4132
        %4261 = vst [vmem:[%s338 + $0x44] sm:$0xf] %v4133
        %4262 = vst [vmem:[%s338 + $0x48] sm:$0xf] %v4134
        %4263 = vst [vmem:[%s338 + $0x4c] sm:$0xf] %v4135
        %4264 = vst [vmem:[%s338 + $0x50] sm:$0xf] %v4136
        %4265 = vst [vmem:[%s338 + $0x54] sm:$0xf] %v4137
        %4266 = vst [vmem:[%s338 + $0x58] sm:$0xf] %v4138
        %4267 = vst [vmem:[%s338 + $0x5c] sm:$0xf] %v4139
        %4268 = vst [vmem:[%s338 + $0x60] sm:$0xf] %v4140
        %4269 = vst [vmem:[%s338 + $0x64] sm:$0xf] %v4141
        %4270 = vst [vmem:[%s338 + $0x68] sm:$0xf] %v4142
        %4271 = vst [vmem:[%s338 + $0x6c] sm:$0xf] %v4143
        %4272 = vst [vmem:[%s338 + $0x70] sm:$0xf] %v4144
        %4273 = vst [vmem:[%s338 + $0x74] sm:$0xf] %v4145
        %4274 = vst [vmem:[%s338 + $0x78] sm:$0xf] %v4146
        %4275 = vst [vmem:[%s338 + $0x7c] sm:$0xf] %v4147
        %4276 = vst [vmem:[%s338 + $0x80] sm:$0xf] %v4148
        %4277 = vst [vmem:[%s338 + $0x84] sm:$0xf] %v4149
        %4278 = vst [vmem:[%s338 + $0x88] sm:$0xf] %v4150
        %4279 = vst [vmem:[%s338 + $0x8c] sm:$0xf] %v4151
        %4280 = vst [vmem:[%s338 + $0x90] sm:$0xf] %v4152
        %4281 = vst [vmem:[%s338 + $0x94] sm:$0xf] %v4153
        %4282 = vst [vmem:[%s338 + $0x98] sm:$0xf] %v4154
        %4283 = vst [vmem:[%s338 + $0x9c] sm:$0xf] %v4155
        %4284 = vst [vmem:[%s338 + $0xa0] sm:$0xf] %v4156
        %4285 = vst [vmem:[%s338 + $0xa4] sm:$0xf] %v4157
        %4286 = vst [vmem:[%s338 + $0xa8] sm:$0xf] %v4158
        %4287 = vst [vmem:[%s338 + $0xac] sm:$0xf] %v4159
        %4288 = vst [vmem:[%s338 + $0xb0] sm:$0xf] %v4160
        %4289 = vst [vmem:[%s338 + $0xb4] sm:$0xf] %v4161
        %4290 = vst [vmem:[%s338 + $0xb8] sm:$0xf] %v4162
        %4291 = vst [vmem:[%s338 + $0xbc] sm:$0xf] %v4163
        %4292 = vst [vmem:[%s338 + $0xc0] sm:$0xf] %v4164
        %4293 = vst [vmem:[%s338 + $0xc4] sm:$0xf] %v4165
        %4294 = vst [vmem:[%s338 + $0xc8] sm:$0xf] %v4166
        %4295 = vst [vmem:[%s338 + $0xcc] sm:$0xf] %v4167
        %4296 = vst [vmem:[%s338 + $0xd0] sm:$0xf] %v4168
        %4297 = vst [vmem:[%s338 + $0xd4] sm:$0xf] %v4169
        %4298 = vst [vmem:[%s338 + $0xd8] sm:$0xf] %v4170
        %4299 = vst [vmem:[%s338 + $0xdc] sm:$0xf] %v4171
        %4300 = vst [vmem:[%s338 + $0xe0] sm:$0xf] %v4172
        %4301 = vst [vmem:[%s338 + $0xe4] sm:$0xf] %v4173
        %4302 = vst [vmem:[%s338 + $0xe8] sm:$0xf] %v4174
        %4303 = vst [vmem:[%s338 + $0xec] sm:$0xf] %v4175
        %4304 = vst [vmem:[%s338 + $0xf0] sm:$0xf] %v4176
        %4305 = vst [vmem:[%s338 + $0xf4] sm:$0xf] %v4177
        %4306 = vst [vmem:[%s338 + $0xf8] sm:$0xf] %v4178
        %4307 = vst [vmem:[%s338 + $0xfc] sm:$0xf] %v4179
        %s4308 = sadd.s32 %s21, %s22
        %s4309 = smul.u32 64, %s4308
        %p4310 = scmp.lt.s32.totalorder %s4309, 127
        %s4311 = scalar_select %p4310, %s4309, 127
        %s4312 = smul.addr %s4311, 4
        %s4313 = scalar_lea.vmem %s4, %s4312
        // Predicated region
        $region45: #{_lambda_.1} parent=35 // pred_check
          %p4314 = pneg %p151
        $region46: #{_lambda_.1} parent=35 // pred_check_branch
          %4316 = sbr.rel (%p4314) target = $region48
        $region47: #{_lambda_.1} parent=35 // pred_region
          %s4317 = sadd.s32 %s21, %s22
          %s4318 = smul.u32 64, %s4317
        $region48: #{_lambda_.1} parent=35 // pred_fallthru
          _
      $region36: #{_lambda_.1} parent=5 // pred_fallthru
        _
      %p4319 = scmp.le.s32.totalorder 2, %s12
      // Predicated region
      $region49: #{_lambda_.1} parent=5 // pred_check
        %p4320 = pneg %p4319
      $region50: #{_lambda_.1} parent=5 // pred_check_branch
        %4322 = sbr.rel (%p4320) target = $region52
      $region51: #{_lambda_.1} parent=5 // pred_region
        %s4323 = ssub.s32 %s12, 2
        // Predicated region
        $region53: #{_lambda_.1} parent=51 // pred_check
          %p4324 = pneg %p157
        $region54: #{_lambda_.1} parent=51 // pred_check_branch
          %4326 = sbr.rel (%p4324) target = $region56
        $region55: #{_lambda_.1} parent=51 // pred_region
          %s4327 = sadd.s32 %s23, %s24
          %s4328 = smul.u32 64, %s4327
          %p4329 = scmp.lt.s32.totalorder %s4328, 127
          %s4330 = scalar_select %p4329, %s4328, 127
          %s4331 = smul.addr %s4330, 4
          %s4332 = scalar_lea.vmem %s4, %s4331
        $region56: #{_lambda_.1} parent=51 // pred_fallthru
          _
      $region52: #{_lambda_.1} parent=5 // pred_fallthru
        _
    $region6: #{_lambda_.1} parent=1 // loop_footer
      %s16 = sadd.s32 1, %s12
    $region7: #{_lambda_.1} parent=1 // loop_footer_branch
      %11 = sbr.rel target = $region3
    $region8: #{_lambda_.1} parent=1 // loop_exit
      _
    %4333 = vsyncpa [#allocation3], 1
    %s4334 = scalar_lea.sflag [#allocation3], 1
    %4335 = vsyncpa %s4334, 1
    %4336 = vsyncpa [#allocation5], 1

</llo_original>
